<compile_context>
chip_gen: v5e
topology: v5e:2x2
jax: 0.10.0
libtpu: 0.0.40
codegen_flags: <defaults>
</compile_context>

<pallas_src>
import functools

import jax
import jax.numpy as jnp
from jax.experimental import pallas as pl
from jax.experimental.pallas import tpu as pltpu

_LANE = 128
_WOFF = 8          # sublane-aligned left zero-pad column inside the depthwise scratch


def _gelu(v):
    # tanh-approximate GELU -> routed to the EUP (tolerance easily absorbs it)
    return jax.nn.gelu(v, approximate=True)


def _round_up(n, m):
    return ((n + m - 1) // m) * m


def _patchconv_kernel(x_ref, bns_ref, bnb_ref, w1_ref, b1_ref, wdw_ref, bdw_ref,
                      ws1_ref, bs1_ref, ws2_ref, bs2_ref, w2_ref, b2_ref, ls_ref,
                      o_ref, yp_ref, *, H, W):
    HW = H * W
    C = x_ref.shape[-1]                      # padded (lane-dense) channel count

    x = x_ref[0].astype(jnp.float32)         # (HW, C)

    # --- BatchNorm2d (eval mode, folded to per-channel scale/bias) ---
    x = x * bns_ref[...] + bnb_ref[...]

    # --- 1x1 conv (pointwise matmul; bf16 MXU operands, f32 accumulate) + GELU ---
    y = jnp.dot(x.astype(jnp.bfloat16), w1_ref[...],
                preferred_element_type=jnp.float32) + b1_ref[...]
    y = _gelu(y)

    # --- depthwise 3x3 conv, padding=1 ---
    # Zero-padded VMEM scratch + 9 shifted-slice multiply-adds on the VPU.
    # The interior store is tile-aligned: row offset is on the untiled major axis,
    # column offset _WOFF is a multiple of 8 sublanes, lane dim is full.
    yp_ref[...] = jnp.zeros_like(yp_ref)
    yp_ref[1:H + 1, _WOFF:_WOFF + W, :] = y.reshape(H, W, C)

    wdw = wdw_ref[...]                       # (9, C), loaded once
    acc = jnp.zeros((HW, C), jnp.float32)
    for kh in range(3):
        for kw in range(3):
            k = 3 * kh + kw
            c0 = _WOFF - 1 + kw              # columns 7/8/9 -> left/center/right tap
            tap = yp_ref[kh:kh + H, c0:c0 + W, :]          # (H, W, C)
            acc = acc + tap.reshape(HW, C) * wdw[k:k + 1, :]
    z = _gelu(acc + bdw_ref[...])

    # --- SqueezeExcitation: avgpool -> fc1 -> ReLU -> fc2 -> sigmoid -> scale ---
    pooled = jnp.mean(z, axis=0, keepdims=True)            # (1, C)
    s = jnp.dot(pooled, ws1_ref[...], preferred_element_type=jnp.float32) + bs1_ref[...]
    s = jnp.maximum(s, 0.0)
    s = jnp.dot(s, ws2_ref[...], preferred_element_type=jnp.float32) + bs2_ref[...]
    s = jax.nn.sigmoid(s)
    z = z * s

    # --- final 1x1 conv (bf16 MXU) + LayerScaler ---
    out = jnp.dot(z.astype(jnp.bfloat16), w2_ref[...],
                  preferred_element_type=jnp.float32) + b2_ref[...]
    out = out * ls_ref[...]

    # StochasticDepth: identity in eval mode.
    # TODO(synk): training-mode StochasticDepth (random per-row drop) not implemented.
    o_ref[0] = out.astype(o_ref.dtype)


def patch_conv_block(x_nchw, p):
    B, C, H, W = x_nchw.shape
    HW = H * W
    Cp = _round_up(max(C, _LANE), _LANE)
    Cr = p['ws1'].shape[1]
    Crp = _round_up(max(Cr, _LANE), _LANE)

    def pad2(a, rows, cols):
        return jnp.pad(a, ((0, rows - a.shape[0]), (0, cols - a.shape[1])))

    # Zero-padded channels keep the math exact for the real channels (padded
    # channels stay identically zero through every stage).
    bns = pad2(p['bn_scale'], 1, Cp)
    bnb = pad2(p['bn_bias'], 1, Cp)
    w1 = pad2(p['w1'], Cp, Cp).astype(jnp.bfloat16)
    b1 = pad2(p['b1'], 1, Cp)
    wdw = pad2(p['wdw'], 9, Cp)
    bdw = pad2(p['bdw'], 1, Cp)
    ws1 = pad2(p['ws1'], Cp, Crp)
    bs1 = pad2(p['bs1'], 1, Crp)
    ws2 = pad2(p['ws2'], Crp, Cp)
    bs2 = pad2(p['bs2'], 1, Cp)
    w2 = pad2(p['w2'], Cp, Cp).astype(jnp.bfloat16)
    b2 = pad2(p['b2'], 1, Cp)
    ls = pad2(p['ls'], 1, Cp)

    x = jnp.transpose(x_nchw, (0, 2, 3, 1)).reshape(B, HW, C)
    x = jnp.pad(x, ((0, 0), (0, 0), (0, Cp - C)))

    def full(arr):
        return pl.BlockSpec(arr.shape, lambda b, n=arr.ndim: (0,) * n)

    kernel = functools.partial(_patchconv_kernel, H=H, W=W)
    out = pl.pallas_call(
        kernel,
        out_shape=jax.ShapeDtypeStruct((B, HW, Cp), x.dtype),
        grid_spec=pltpu.PrefetchScalarGridSpec(
            num_scalar_prefetch=0,
            grid=(B,),
            in_specs=[
                pl.BlockSpec((1, HW, Cp), lambda b: (b, 0, 0)),
                full(bns), full(bnb), full(w1), full(b1), full(wdw), full(bdw),
                full(ws1), full(bs1), full(ws2), full(bs2), full(w2), full(b2),
                full(ls),
            ],
            out_specs=pl.BlockSpec((1, HW, Cp), lambda b: (b, 0, 0)),
            scratch_shapes=[pltpu.VMEM((H + 2, W + 2 * _WOFF, Cp), jnp.float32)],
        ),
        compiler_params=pltpu.CompilerParams(dimension_semantics=("parallel",)),
    )(x, bns, bnb, w1, b1, wdw, bdw, ws1, bs1, ws2, bs2, w2, b2, ls)

    out = out[:, :, :C].reshape(B, H, W, C)
    return jnp.transpose(out, (0, 3, 1, 2))


def init_params(key, C):
    Cr = C // 4
    ks = jax.random.split(key, 16)

    def n(k, shape, scale=1.0):
        return scale * jax.random.normal(k, shape, jnp.float32)

    eps = 1e-5
    gamma = 1.0 + 0.1 * n(ks[0], (C,))
    beta = 0.1 * n(ks[1], (C,))
    run_mean = 0.1 * n(ks[2], (C,))
    run_var = jnp.abs(n(ks[3], (C,))) * 0.5 + 0.5
    bn_scale = gamma / jnp.sqrt(run_var + eps)
    bn_bias = beta - run_mean * bn_scale
    p = {
        'bn_scale': bn_scale.reshape(1, C),
        'bn_bias': bn_bias.reshape(1, C),
        'w1': n(ks[4], (C, C), 1.0 / (C ** 0.5)),        # (C_in, C_out)
        'b1': n(ks[5], (1, C), 0.1),
        'wdw3': n(ks[6], (3, 3, C), 0.3),                # depthwise weights, (kh, kw, C)
        'bdw': n(ks[7], (1, C), 0.1),
        'ws1': n(ks[8], (C, Cr), 1.0 / (C ** 0.5)),
        'bs1': n(ks[9], (1, Cr), 0.1),
        'ws2': n(ks[10], (Cr, C), 1.0 / (Cr ** 0.5)),
        'bs2': n(ks[11], (1, C), 0.1),
        'w2': n(ks[12], (C, C), 1.0 / (C ** 0.5)),
        'b2': n(ks[13], (1, C), 0.1),
        'ls': jnp.full((1, C), 1e-6, jnp.float32),       # LayerScaler init_scale = 1e-6
    }
    p['wdw'] = p['wdw3'].reshape(9, C)                   # row k = kh*3 + kw
    return p


def reference(x_nchw, p):
    # pure-JAX reference of the same (eval-mode) forward pass, exact erf GELU, f32
    B, C, H, W = x_nchw.shape
    hp = jax.lax.Precision.HIGHEST

    def gelu_exact(v):
        return 0.5 * v * (1.0 + jax.lax.erf(v * 0.7071067811865476))

    x = jnp.transpose(x_nchw, (0, 2, 3, 1))              # NHWC
    x = x * p['bn_scale'][0] + p['bn_bias'][0]
    y = jnp.einsum('bhwi,io->bhwo', x, p['w1'], precision=hp) + p['b1'][0]
    y = gelu_exact(y)
    yp = jnp.pad(y, ((0, 0), (1, 1), (1, 1), (0, 0)))
    acc = jnp.zeros_like(y)
    for kh in range(3):
        for kw in range(3):
            acc = acc + yp[:, kh:kh + H, kw:kw + W, :] * p['wdw3'][kh, kw]
    z = gelu_exact(acc + p['bdw'][0])
    pooled = jnp.mean(z, axis=(1, 2))                    # (B, C)
    s = jnp.maximum(jnp.dot(pooled, p['ws1'], precision=hp) + p['bs1'][0], 0.0)
    s = jax.nn.sigmoid(jnp.dot(s, p['ws2'], precision=hp) + p['bs2'][0])
    z = z * s[:, None, None, :]
    out = jnp.einsum('bhwi,io->bhwo', z, p['w2'], precision=hp) + p['b2'][0]
    out = out * p['ls'][0]
    return jnp.transpose(out, (0, 3, 1, 2))


if __name__ == "__main__":
    key = jax.random.PRNGKey(0)
    kx, kp = jax.random.split(key)
    B, C, H, W = 2, 32, 16, 16          # hidden_dim = 32
    x = jax.random.normal(kx, (B, C, H, W), jnp.float32)
    params = init_params(kp, C)

    out = patch_conv_block(x, params)
    out = jax.block_until_ready(out)

    ref = reference(x, params)
    assert out.shape == (B, C, H, W)
    assert bool(jnp.all(jnp.isfinite(out)))
    rel = float(jnp.max(jnp.abs(out - ref)) / (jnp.max(jnp.abs(ref)) + 1e-30))
    assert rel < 5e-2, f"relative error too large: {rel}"
    print("KERNEL_OK")
</pallas_src>

<mosaic_0001>
module attributes {stable_mosaic.version = 11 : i64} {
  func.func @_patchconv_kernel(%arg0: i32, %arg1: memref<1x256x128xf32, #tpu.memory_space<vmem>>, %arg2: memref<1x128xf32, #tpu.memory_space<vmem>>, %arg3: memref<1x128xf32, #tpu.memory_space<vmem>>, %arg4: memref<128x128xbf16, #tpu.memory_space<vmem>>, %arg5: memref<1x128xf32, #tpu.memory_space<vmem>>, %arg6: memref<9x128xf32, #tpu.memory_space<vmem>>, %arg7: memref<1x128xf32, #tpu.memory_space<vmem>>, %arg8: memref<128x128xf32, #tpu.memory_space<vmem>>, %arg9: memref<1x128xf32, #tpu.memory_space<vmem>>, %arg10: memref<128x128xf32, #tpu.memory_space<vmem>>, %arg11: memref<1x128xf32, #tpu.memory_space<vmem>>, %arg12: memref<128x128xbf16, #tpu.memory_space<vmem>>, %arg13: memref<1x128xf32, #tpu.memory_space<vmem>>, %arg14: memref<1x128xf32, #tpu.memory_space<vmem>>, %arg15: memref<1x256x128xf32, #tpu.memory_space<vmem>>, %arg16: memref<18x32x128xf32, #tpu.memory_space<vmem>>) attributes {dimension_semantics = [#tpu.dimension_semantics<parallel>], iteration_bounds = array<i64: 2>, scalar_prefetch = 0 : i64, scratch_operands = 1 : i64, tpu.core_type = #tpu.core_type<tc>, window_params = [{transform_indices = @transform_0, window_bounds = array<i64: 1, 256, 128>}, {pipeline_mode = #tpu.pipeline_mode<synchronous>, transform_indices = @transform_1, window_bounds = array<i64: 1, 128>}, {pipeline_mode = #tpu.pipeline_mode<synchronous>, transform_indices = @transform_2, window_bounds = array<i64: 1, 128>}, {pipeline_mode = #tpu.pipeline_mode<synchronous>, transform_indices = @transform_3, window_bounds = array<i64: 128, 128>}, {pipeline_mode = #tpu.pipeline_mode<synchronous>, transform_indices = @transform_4, window_bounds = array<i64: 1, 128>}, {pipeline_mode = #tpu.pipeline_mode<synchronous>, transform_indices = @transform_5, window_bounds = array<i64: 9, 128>}, {pipeline_mode = #tpu.pipeline_mode<synchronous>, transform_indices = @transform_6, window_bounds = array<i64: 1, 128>}, {pipeline_mode = #tpu.pipeline_mode<synchronous>, transform_indices = @transform_7, window_bounds = array<i64: 128, 128>}, {pipeline_mode = #tpu.pipeline_mode<synchronous>, transform_indices = @transform_8, window_bounds = array<i64: 1, 128>}, {pipeline_mode = #tpu.pipeline_mode<synchronous>, transform_indices = @transform_9, window_bounds = array<i64: 128, 128>}, {pipeline_mode = #tpu.pipeline_mode<synchronous>, transform_indices = @transform_10, window_bounds = array<i64: 1, 128>}, {pipeline_mode = #tpu.pipeline_mode<synchronous>, transform_indices = @transform_11, window_bounds = array<i64: 128, 128>}, {pipeline_mode = #tpu.pipeline_mode<synchronous>, transform_indices = @transform_12, window_bounds = array<i64: 1, 128>}, {pipeline_mode = #tpu.pipeline_mode<synchronous>, transform_indices = @transform_13, window_bounds = array<i64: 1, 128>}, {transform_indices = @transform_14, window_bounds = array<i64: 1, 256, 128>}]} {
    %c0 = arith.constant 0 : index
    %c0_0 = arith.constant 0 : index
    %c0_1 = arith.constant 0 : index
    %0 = vector.load %arg1[%c0, %c0_0, %c0_1] : memref<1x256x128xf32, #tpu.memory_space<vmem>>, vector<1x256x128xf32>
    %1 = vector.shape_cast %0 : vector<1x256x128xf32> to vector<256x128xf32>
    %c0_2 = arith.constant 0 : index
    %c0_3 = arith.constant 0 : index
    %2 = vector.load %arg2[%c0_2, %c0_3] : memref<1x128xf32, #tpu.memory_space<vmem>>, vector<1x128xf32>
    %3 = vector.broadcast %2 : vector<1x128xf32> to vector<256x128xf32>
    %4 = arith.mulf %1, %3 : vector<256x128xf32>
    %c0_4 = arith.constant 0 : index
    %c0_5 = arith.constant 0 : index
    %5 = vector.load %arg3[%c0_4, %c0_5] : memref<1x128xf32, #tpu.memory_space<vmem>>, vector<1x128xf32>
    %6 = vector.broadcast %5 : vector<1x128xf32> to vector<256x128xf32>
    %7 = arith.addf %4, %6 : vector<256x128xf32>
    %8 = arith.truncf %7 : vector<256x128xf32> to vector<256x128xbf16>
    %c0_6 = arith.constant 0 : index
    %c0_7 = arith.constant 0 : index
    %9 = vector.load %arg4[%c0_6, %c0_7] : memref<128x128xbf16, #tpu.memory_space<vmem>>, vector<128x128xbf16>
    %cst = arith.constant dense<0.000000e+00> : vector<256x128xf32>
    %10 = tpu.matmul %8, %9, %cst {dimension_numbers = #tpu.dot_dimension_numbers<[1], [0], [0], [1], [0, 0, 1, 1], [], []>} : vector<256x128xbf16>, vector<128x128xbf16>, vector<256x128xf32> -> vector<256x128xf32>
    %c0_8 = arith.constant 0 : index
    %c0_9 = arith.constant 0 : index
    %11 = vector.load %arg5[%c0_8, %c0_9] : memref<1x128xf32, #tpu.memory_space<vmem>>, vector<1x128xf32>
    %12 = vector.broadcast %11 : vector<1x128xf32> to vector<256x128xf32>
    %13 = arith.addf %10, %12 : vector<256x128xf32>
    %14 = arith.mulf %13, %13 : vector<256x128xf32>
    %15 = arith.mulf %13, %14 : vector<256x128xf32>
    %cst_10 = arith.constant 4.471500e-02 : f32
    %16 = vector.broadcast %cst_10 : f32 to vector<256x128xf32>
    %17 = arith.mulf %16, %15 : vector<256x128xf32>
    %18 = arith.addf %13, %17 : vector<256x128xf32>
    %cst_11 = arith.constant 0.797884583 : f32
    %19 = vector.broadcast %cst_11 : f32 to vector<256x128xf32>
    %20 = arith.mulf %19, %18 : vector<256x128xf32>
    %21 = math.tanh %20 : vector<256x128xf32>
    %cst_12 = arith.constant 1.000000e+00 : f32
    %22 = vector.broadcast %cst_12 : f32 to vector<256x128xf32>
    %23 = arith.addf %22, %21 : vector<256x128xf32>
    %cst_13 = arith.constant 5.000000e-01 : f32
    %24 = vector.broadcast %cst_13 : f32 to vector<256x128xf32>
    %25 = arith.mulf %24, %23 : vector<256x128xf32>
    %26 = arith.mulf %13, %25 : vector<256x128xf32>
    %cst_14 = arith.constant 0.000000e+00 : f32
    %27 = vector.broadcast %cst_14 : f32 to vector<18x32x128xf32>
    %c0_15 = arith.constant 0 : index
    %c0_16 = arith.constant 0 : index
    %c0_17 = arith.constant 0 : index
    %28 = vector.load %arg16[%c0_15, %c0_16, %c0_17] : memref<18x32x128xf32, #tpu.memory_space<vmem>>, vector<18x32x128xf32>
    tpu.vector_store %arg16[%c0_15, %c0_16, %c0_17], %27 {strides = array<i32>} : memref<18x32x128xf32, #tpu.memory_space<vmem>>, vector<18x32x128xf32>,
    %29 = vector.shape_cast %26 : vector<256x128xf32> to vector<16x16x128xf32>
    %c1 = arith.constant 1 : index
    %c8 = arith.constant 8 : index
    %c0_18 = arith.constant 0 : index
    %30 = vector.load %arg16[%c1, %c8, %c0_18] : memref<18x32x128xf32, #tpu.memory_space<vmem>>, vector<16x16x128xf32>
    tpu.vector_store %arg16[%c1, %c8, %c0_18], %29 {strides = array<i32>} : memref<18x32x128xf32, #tpu.memory_space<vmem>>, vector<16x16x128xf32>,
    %c0_19 = arith.constant 0 : index
    %c0_20 = arith.constant 0 : index
    %31 = vector.load %arg6[%c0_19, %c0_20] : memref<9x128xf32, #tpu.memory_space<vmem>>, vector<9x128xf32>
    %cst_21 = arith.constant 0.000000e+00 : f32
    %32 = vector.broadcast %cst_21 : f32 to vector<256x128xf32>
    %c0_22 = arith.constant 0 : index
    %c7 = arith.constant 7 : index
    %c0_23 = arith.constant 0 : index
    %33 = vector.load %arg16[%c0_22, %c7, %c0_23] : memref<18x32x128xf32, #tpu.memory_space<vmem>>, vector<16x16x128xf32>
    %34 = vector.shape_cast %33 : vector<16x16x128xf32> to vector<256x128xf32>
    %35 = vector.extract_strided_slice %31 {offsets = [0, 0], sizes = [1, 128], strides = [1, 1]} : vector<9x128xf32> to vector<1x128xf32>
    %36 = vector.broadcast %35 : vector<1x128xf32> to vector<256x128xf32>
    %37 = arith.mulf %34, %36 : vector<256x128xf32>
    %38 = arith.addf %32, %37 : vector<256x128xf32>
    %c0_24 = arith.constant 0 : index
    %c8_25 = arith.constant 8 : index
    %c0_26 = arith.constant 0 : index
    %39 = vector.load %arg16[%c0_24, %c8_25, %c0_26] : memref<18x32x128xf32, #tpu.memory_space<vmem>>, vector<16x16x128xf32>
    %40 = vector.shape_cast %39 : vector<16x16x128xf32> to vector<256x128xf32>
    %41 = vector.extract_strided_slice %31 {offsets = [1, 0], sizes = [1, 128], strides = [1, 1]} : vector<9x128xf32> to vector<1x128xf32>
    %42 = vector.broadcast %41 : vector<1x128xf32> to vector<256x128xf32>
    %43 = arith.mulf %40, %42 : vector<256x128xf32>
    %44 = arith.addf %38, %43 : vector<256x128xf32>
    %c0_27 = arith.constant 0 : index
    %c9 = arith.constant 9 : index
    %c0_28 = arith.constant 0 : index
    %45 = vector.load %arg16[%c0_27, %c9, %c0_28] : memref<18x32x128xf32, #tpu.memory_space<vmem>>, vector<16x16x128xf32>
    %46 = vector.shape_cast %45 : vector<16x16x128xf32> to vector<256x128xf32>
    %47 = vector.extract_strided_slice %31 {offsets = [2, 0], sizes = [1, 128], strides = [1, 1]} : vector<9x128xf32> to vector<1x128xf32>
    %48 = vector.broadcast %47 : vector<1x128xf32> to vector<256x128xf32>
    %49 = arith.mulf %46, %48 : vector<256x128xf32>
    %50 = arith.addf %44, %49 : vector<256x128xf32>
    %c1_29 = arith.constant 1 : index
    %c7_30 = arith.constant 7 : index
    %c0_31 = arith.constant 0 : index
    %51 = vector.load %arg16[%c1_29, %c7_30, %c0_31] : memref<18x32x128xf32, #tpu.memory_space<vmem>>, vector<16x16x128xf32>
    %52 = vector.shape_cast %51 : vector<16x16x128xf32> to vector<256x128xf32>
    %53 = vector.extract_strided_slice %31 {offsets = [3, 0], sizes = [1, 128], strides = [1, 1]} : vector<9x128xf32> to vector<1x128xf32>
    %54 = vector.broadcast %53 : vector<1x128xf32> to vector<256x128xf32>
    %55 = arith.mulf %52, %54 : vector<256x128xf32>
    %56 = arith.addf %50, %55 : vector<256x128xf32>
    %c1_32 = arith.constant 1 : index
    %c8_33 = arith.constant 8 : index
    %c0_34 = arith.constant 0 : index
    %57 = vector.load %arg16[%c1_32, %c8_33, %c0_34] : memref<18x32x128xf32, #tpu.memory_space<vmem>>, vector<16x16x128xf32>
    %58 = vector.shape_cast %57 : vector<16x16x128xf32> to vector<256x128xf32>
    %59 = vector.extract_strided_slice %31 {offsets = [4, 0], sizes = [1, 128], strides = [1, 1]} : vector<9x128xf32> to vector<1x128xf32>
    %60 = vector.broadcast %59 : vector<1x128xf32> to vector<256x128xf32>
    %61 = arith.mulf %58, %60 : vector<256x128xf32>
    %62 = arith.addf %56, %61 : vector<256x128xf32>
    %c1_35 = arith.constant 1 : index
    %c9_36 = arith.constant 9 : index
    %c0_37 = arith.constant 0 : index
    %63 = vector.load %arg16[%c1_35, %c9_36, %c0_37] : memref<18x32x128xf32, #tpu.memory_space<vmem>>, vector<16x16x128xf32>
    %64 = vector.shape_cast %63 : vector<16x16x128xf32> to vector<256x128xf32>
    %65 = vector.extract_strided_slice %31 {offsets = [5, 0], sizes = [1, 128], strides = [1, 1]} : vector<9x128xf32> to vector<1x128xf32>
    %66 = vector.broadcast %65 : vector<1x128xf32> to vector<256x128xf32>
    %67 = arith.mulf %64, %66 : vector<256x128xf32>
    %68 = arith.addf %62, %67 : vector<256x128xf32>
    %c2 = arith.constant 2 : index
    %c7_38 = arith.constant 7 : index
    %c0_39 = arith.constant 0 : index
    %69 = vector.load %arg16[%c2, %c7_38, %c0_39] : memref<18x32x128xf32, #tpu.memory_space<vmem>>, vector<16x16x128xf32>
    %70 = vector.shape_cast %69 : vector<16x16x128xf32> to vector<256x128xf32>
    %71 = vector.extract_strided_slice %31 {offsets = [6, 0], sizes = [1, 128], strides = [1, 1]} : vector<9x128xf32> to vector<1x128xf32>
    %72 = vector.broadcast %71 : vector<1x128xf32> to vector<256x128xf32>
    %73 = arith.mulf %70, %72 : vector<256x128xf32>
    %74 = arith.addf %68, %73 : vector<256x128xf32>
    %c2_40 = arith.constant 2 : index
    %c8_41 = arith.constant 8 : index
    %c0_42 = arith.constant 0 : index
    %75 = vector.load %arg16[%c2_40, %c8_41, %c0_42] : memref<18x32x128xf32, #tpu.memory_space<vmem>>, vector<16x16x128xf32>
    %76 = vector.shape_cast %75 : vector<16x16x128xf32> to vector<256x128xf32>
    %77 = vector.extract_strided_slice %31 {offsets = [7, 0], sizes = [1, 128], strides = [1, 1]} : vector<9x128xf32> to vector<1x128xf32>
    %78 = vector.broadcast %77 : vector<1x128xf32> to vector<256x128xf32>
    %79 = arith.mulf %76, %78 : vector<256x128xf32>
    %80 = arith.addf %74, %79 : vector<256x128xf32>
    %c2_43 = arith.constant 2 : index
    %c9_44 = arith.constant 9 : index
    %c0_45 = arith.constant 0 : index
    %81 = vector.load %arg16[%c2_43, %c9_44, %c0_45] : memref<18x32x128xf32, #tpu.memory_space<vmem>>, vector<16x16x128xf32>
    %82 = vector.shape_cast %81 : vector<16x16x128xf32> to vector<256x128xf32>
    %83 = vector.extract_strided_slice %31 {offsets = [8, 0], sizes = [1, 128], strides = [1, 1]} : vector<9x128xf32> to vector<1x128xf32>
    %84 = vector.broadcast %83 : vector<1x128xf32> to vector<256x128xf32>
    %85 = arith.mulf %82, %84 : vector<256x128xf32>
    %86 = arith.addf %80, %85 : vector<256x128xf32>
    %c0_46 = arith.constant 0 : index
    %c0_47 = arith.constant 0 : index
    %87 = vector.load %arg7[%c0_46, %c0_47] : memref<1x128xf32, #tpu.memory_space<vmem>>, vector<1x128xf32>
    %88 = vector.broadcast %87 : vector<1x128xf32> to vector<256x128xf32>
    %89 = arith.addf %86, %88 : vector<256x128xf32>
    %90 = arith.mulf %89, %89 : vector<256x128xf32>
    %91 = arith.mulf %89, %90 : vector<256x128xf32>
    %cst_48 = arith.constant 4.471500e-02 : f32
    %92 = vector.broadcast %cst_48 : f32 to vector<256x128xf32>
    %93 = arith.mulf %92, %91 : vector<256x128xf32>
    %94 = arith.addf %89, %93 : vector<256x128xf32>
    %cst_49 = arith.constant 0.797884583 : f32
    %95 = vector.broadcast %cst_49 : f32 to vector<256x128xf32>
    %96 = arith.mulf %95, %94 : vector<256x128xf32>
    %97 = math.tanh %96 : vector<256x128xf32>
    %cst_50 = arith.constant 1.000000e+00 : f32
    %98 = vector.broadcast %cst_50 : f32 to vector<256x128xf32>
    %99 = arith.addf %98, %97 : vector<256x128xf32>
    %cst_51 = arith.constant 5.000000e-01 : f32
    %100 = vector.broadcast %cst_51 : f32 to vector<256x128xf32>
    %101 = arith.mulf %100, %99 : vector<256x128xf32>
    %102 = arith.mulf %89, %101 : vector<256x128xf32>
    %cst_52 = arith.constant dense<0.000000e+00> : vector<128xf32>
    %103 = vector.multi_reduction <add>, %102, %cst_52 [0] : vector<256x128xf32> to vector<128xf32>
    %104 = vector.shape_cast %103 : vector<128xf32> to vector<1x128xf32>
    %cst_53 = arith.constant 2.560000e+02 : f32
    %105 = vector.broadcast %cst_53 : f32 to vector<1x128xf32>
    %106 = arith.divf %104, %105 : vector<1x128xf32>
    %c0_54 = arith.constant 0 : index
    %c0_55 = arith.constant 0 : index
    %107 = vector.load %arg8[%c0_54, %c0_55] : memref<128x128xf32, #tpu.memory_space<vmem>>, vector<128x128xf32>
    %cst_56 = arith.constant dense<0.000000e+00> : vector<1x128xf32>
    %108 = tpu.matmul %106, %107, %cst_56 {dimension_numbers = #tpu.dot_dimension_numbers<[1], [0], [0], [1], [0, 0, 1, 1], [], []>} : vector<1x128xf32>, vector<128x128xf32>, vector<1x128xf32> -> vector<1x128xf32>
    %c0_57 = arith.constant 0 : index
    %c0_58 = arith.constant 0 : index
    %109 = vector.load %arg9[%c0_57, %c0_58] : memref<1x128xf32, #tpu.memory_space<vmem>>, vector<1x128xf32>
    %110 = arith.addf %108, %109 : vector<1x128xf32>
    %cst_59 = arith.constant 0.000000e+00 : f32
    %111 = vector.broadcast %cst_59 : f32 to vector<1x128xf32>
    %112 = arith.maximumf %110, %111 : vector<1x128xf32>
    %c0_60 = arith.constant 0 : index
    %c0_61 = arith.constant 0 : index
    %113 = vector.load %arg10[%c0_60, %c0_61] : memref<128x128xf32, #tpu.memory_space<vmem>>, vector<128x128xf32>
    %cst_62 = arith.constant dense<0.000000e+00> : vector<1x128xf32>
    %114 = tpu.matmul %112, %113, %cst_62 {dimension_numbers = #tpu.dot_dimension_numbers<[1], [0], [0], [1], [0, 0, 1, 1], [], []>} : vector<1x128xf32>, vector<128x128xf32>, vector<1x128xf32> -> vector<1x128xf32>
    %c0_63 = arith.constant 0 : index
    %c0_64 = arith.constant 0 : index
    %115 = vector.load %arg11[%c0_63, %c0_64] : memref<1x128xf32, #tpu.memory_space<vmem>>, vector<1x128xf32>
    %116 = arith.addf %114, %115 : vector<1x128xf32>
    %117 = arith.negf %116 : vector<1x128xf32>
    %118 = math.exp %117 : vector<1x128xf32>
    %cst_65 = arith.constant 1.000000e+00 : f32
    %119 = vector.broadcast %cst_65 : f32 to vector<1x128xf32>
    %120 = arith.addf %119, %118 : vector<1x128xf32>
    %121 = arith.divf %119, %120 : vector<1x128xf32>
    %122 = vector.broadcast %121 : vector<1x128xf32> to vector<256x128xf32>
    %123 = arith.mulf %102, %122 : vector<256x128xf32>
    %124 = arith.truncf %123 : vector<256x128xf32> to vector<256x128xbf16>
    %c0_66 = arith.constant 0 : index
    %c0_67 = arith.constant 0 : index
    %125 = vector.load %arg12[%c0_66, %c0_67] : memref<128x128xbf16, #tpu.memory_space<vmem>>, vector<128x128xbf16>
    %cst_68 = arith.constant dense<0.000000e+00> : vector<256x128xf32>
    %126 = tpu.matmul %124, %125, %cst_68 {dimension_numbers = #tpu.dot_dimension_numbers<[1], [0], [0], [1], [0, 0, 1, 1], [], []>} : vector<256x128xbf16>, vector<128x128xbf16>, vector<256x128xf32> -> vector<256x128xf32>
    %c0_69 = arith.constant 0 : index
    %c0_70 = arith.constant 0 : index
    %127 = vector.load %arg13[%c0_69, %c0_70] : memref<1x128xf32, #tpu.memory_space<vmem>>, vector<1x128xf32>
    %128 = vector.broadcast %127 : vector<1x128xf32> to vector<256x128xf32>
    %129 = arith.addf %126, %128 : vector<256x128xf32>
    %c0_71 = arith.constant 0 : index
    %c0_72 = arith.constant 0 : index
    %130 = vector.load %arg14[%c0_71, %c0_72] : memref<1x128xf32, #tpu.memory_space<vmem>>, vector<1x128xf32>
    %131 = vector.broadcast %130 : vector<1x128xf32> to vector<256x128xf32>
    %132 = arith.mulf %129, %131 : vector<256x128xf32>
    %c0_73 = arith.constant 0 : index
    %c0_74 = arith.constant 0 : index
    %c0_75 = arith.constant 0 : index
    %133 = vector.load %arg15[%c0_73, %c0_74, %c0_75] : memref<1x256x128xf32, #tpu.memory_space<vmem>>, vector<1x256x128xf32>
    %134 = vector.shape_cast %133 : vector<1x256x128xf32> to vector<256x128xf32>
    %135 = vector.shape_cast %132 : vector<256x128xf32> to vector<1x256x128xf32>
    tpu.vector_store %arg15[%c0_73, %c0_74, %c0_75], %135 {strides = array<i32>} : memref<1x256x128xf32, #tpu.memory_space<vmem>>, vector<1x256x128xf32>,
    return
  }
  func.func @transform_0(%arg0: i32) -> (i32, i32, i32) {
    %c0_i32 = arith.constant 0 : i32
    %c0_i32_0 = arith.constant 0 : i32
    %c0_i32_1 = arith.constant 0 : i32
    return %arg0, %c0_i32, %c0_i32_0 : i32, i32, i32
  }
  func.func @transform_1(%arg0: i32) -> (i32, i32) {
    %c0_i32 = arith.constant 0 : i32
    %c0_i32_0 = arith.constant 0 : i32
    %c0_i32_1 = arith.constant 0 : i32
    return %c0_i32, %c0_i32_0 : i32, i32
  }
  func.func @transform_2(%arg0: i32) -> (i32, i32) {
    %c0_i32 = arith.constant 0 : i32
    %c0_i32_0 = arith.constant 0 : i32
    %c0_i32_1 = arith.constant 0 : i32
    return %c0_i32, %c0_i32_0 : i32, i32
  }
  func.func @transform_3(%arg0: i32) -> (i32, i32) {
    %c0_i32 = arith.constant 0 : i32
    %c0_i32_0 = arith.constant 0 : i32
    %c0_i32_1 = arith.constant 0 : i32
    return %c0_i32, %c0_i32_0 : i32, i32
  }
  func.func @transform_4(%arg0: i32) -> (i32, i32) {
    %c0_i32 = arith.constant 0 : i32
    %c0_i32_0 = arith.constant 0 : i32
    %c0_i32_1 = arith.constant 0 : i32
    return %c0_i32, %c0_i32_0 : i32, i32
  }
  func.func @transform_5(%arg0: i32) -> (i32, i32) {
    %c0_i32 = arith.constant 0 : i32
    %c0_i32_0 = arith.constant 0 : i32
    %c0_i32_1 = arith.constant 0 : i32
    return %c0_i32, %c0_i32_0 : i32, i32
  }
  func.func @transform_6(%arg0: i32) -> (i32, i32) {
    %c0_i32 = arith.constant 0 : i32
    %c0_i32_0 = arith.constant 0 : i32
    %c0_i32_1 = arith.constant 0 : i32
    return %c0_i32, %c0_i32_0 : i32, i32
  }
  func.func @transform_7(%arg0: i32) -> (i32, i32) {
    %c0_i32 = arith.constant 0 : i32
    %c0_i32_0 = arith.constant 0 : i32
    %c0_i32_1 = arith.constant 0 : i32
    return %c0_i32, %c0_i32_0 : i32, i32
  }
  func.func @transform_8(%arg0: i32) -> (i32, i32) {
    %c0_i32 = arith.constant 0 : i32
    %c0_i32_0 = arith.constant 0 : i32
    %c0_i32_1 = arith.constant 0 : i32
    return %c0_i32, %c0_i32_0 : i32, i32
  }
  func.func @transform_9(%arg0: i32) -> (i32, i32) {
    %c0_i32 = arith.constant 0 : i32
    %c0_i32_0 = arith.constant 0 : i32
    %c0_i32_1 = arith.constant 0 : i32
    return %c0_i32, %c0_i32_0 : i32, i32
  }
  func.func @transform_10(%arg0: i32) -> (i32, i32) {
    %c0_i32 = arith.constant 0 : i32
    %c0_i32_0 = arith.constant 0 : i32
    %c0_i32_1 = arith.constant 0 : i32
    return %c0_i32, %c0_i32_0 : i32, i32
  }
  func.func @transform_11(%arg0: i32) -> (i32, i32) {
    %c0_i32 = arith.constant 0 : i32
    %c0_i32_0 = arith.constant 0 : i32
    %c0_i32_1 = arith.constant 0 : i32
    return %c0_i32, %c0_i32_0 : i32, i32
  }
  func.func @transform_12(%arg0: i32) -> (i32, i32) {
    %c0_i32 = arith.constant 0 : i32
    %c0_i32_0 = arith.constant 0 : i32
    %c0_i32_1 = arith.constant 0 : i32
    return %c0_i32, %c0_i32_0 : i32, i32
  }
  func.func @transform_13(%arg0: i32) -> (i32, i32) {
    %c0_i32 = arith.constant 0 : i32
    %c0_i32_0 = arith.constant 0 : i32
    %c0_i32_1 = arith.constant 0 : i32
    return %c0_i32, %c0_i32_0 : i32, i32
  }
  func.func @transform_14(%arg0: i32) -> (i32, i32, i32) {
    %c0_i32 = arith.constant 0 : i32
    %c0_i32_0 = arith.constant 0 : i32
    %c0_i32_1 = arith.constant 0 : i32
    return %arg0, %c0_i32, %c0_i32_0 : i32, i32, i32
  }
}

</mosaic_0001>

<llo_original>
// kernel: tpu_custom_call.1
$region0: #{tpu_custom_call.1}
  #allocation0 [shape = 'u32[]', space=smem, size = 0x4, offset = 0x4, fixed_abs, tag = 'smem constant byte address 0x4 - core index']
  #allocation1 [shape = 'u32[72,128]{1,0:T(1,128)}', space=vmem, size = 0x9000, scoped, tag = 'internal scratch']
  #allocation2 [shape = 'f32[18,32,128]{2,1,0:T(8,128)}', space=vmem, size = 0x48000, scoped, tag = 'scratch operand']
  %s0 = inlined_call_operand.hbm [shape: f32[2,256,128], index: 0, kind: input, shape index: {}]
  %s1 = inlined_call_operand.hbm [shape: f32[1,128], index: 1, kind: input, shape index: {}]
  %s2 = inlined_call_operand.vmem [shape: f32[1,128], index: 2, kind: input, shape index: {}]
  %s3 = inlined_call_operand.hbm [shape: bf16[128,128], index: 3, kind: input, shape index: {}]
  %s4 = inlined_call_operand.vmem [shape: f32[1,128], index: 4, kind: input, shape index: {}]
  %s5 = inlined_call_operand.hbm [shape: f32[9,128], index: 5, kind: input, shape index: {}]
  %s6 = inlined_call_operand.vmem [shape: f32[1,128], index: 6, kind: input, shape index: {}]
  %s7 = inlined_call_operand.hbm [shape: f32[128,128], index: 7, kind: input, shape index: {}]
  %s8 = inlined_call_operand.vmem [shape: f32[1,128], index: 8, kind: input, shape index: {}]
  %s9 = inlined_call_operand.hbm [shape: f32[128,128], index: 9, kind: input, shape index: {}]
  %s10 = inlined_call_operand.vmem [shape: f32[1,128], index: 10, kind: input, shape index: {}]
  %s11 = inlined_call_operand.hbm [shape: bf16[128,128], index: 11, kind: input, shape index: {}]
  %s12 = inlined_call_operand.vmem [shape: f32[1,128], index: 12, kind: input, shape index: {}]
  %s13 = inlined_call_operand.vmem [shape: f32[1,128], index: 13, kind: input, shape index: {}]
  %s14 = inlined_call_operand.hbm [shape: f32[2,256,128], index: 14, kind: output, shape index: {}]
  %s15 = sld [smem:[#allocation0]]
  $region117: #{tpu_custom_call.1} parent=0
    _
  %s17 = ssub.s32 1, %s15
  %s18 = scalar_select 0, %s17, %s15
  $region1: #{tpu_custom_call.1} parent=0
    #allocation3 [shape = 'u8[262144]{0}', space=vmem, size = 0x40000, scoped, tag = 'input window, operand 0']
    #allocation4 [shape = 's32[2]{0}', space=sflag, size = 0x8, scoped, tag = 'scoped memory for tpu_custom_call.1']
    #allocation5 [shape = 's32[2]{0}', space=sflag, size = 0x8, scoped, tag = 'scoped memory for tpu_custom_call.1']
    #allocation6 [shape = 'u8[512]{0}', space=vmem, size = 0x400, scoped, tag = 'input window, operand 1, single buffered']
    #allocation7 [shape = 's32[1]{0}', space=sflag, size = 0x4, scoped, tag = 'scoped memory for tpu_custom_call.1']
    #allocation8 [shape = 'u8[32768]{0}', space=vmem, size = 0x8000, scoped, tag = 'input window, operand 3, single buffered']
    #allocation9 [shape = 'u8[8192]{0}', space=vmem, size = 0x2000, scoped, tag = 'input window, operand 5, single buffered']
    #allocation10 [shape = 's32[1]{0}', space=sflag, size = 0x4, scoped, tag = 'scoped memory for tpu_custom_call.1']
    #allocation11 [shape = 'u8[65536]{0}', space=vmem, size = 0x10000, scoped, tag = 'input window, operand 7, single buffered']
    #allocation12 [shape = 'u8[65536]{0}', space=vmem, size = 0x10000, scoped, tag = 'input window, operand 9, single buffered']
    #allocation13 [shape = 's32[1]{0}', space=sflag, size = 0x4, scoped, tag = 'scoped memory for tpu_custom_call.1']
    #allocation14 [shape = 'u8[32768]{0}', space=vmem, size = 0x8000, scoped, tag = 'input window, operand 11, single buffered']
    #allocation15 [shape = 'u8[262144]{0}', space=vmem, size = 0x40000, scoped, tag = 'output window, operand 0']
    %19 = vsyncpa [#allocation4], 0
    %s20 = scalar_lea.sflag [#allocation4], 1
    %21 = vsyncpa %s20, 0
    %22 = vsyncpa [#allocation7], 0
    %23 = vsyncpa [#allocation10], 0
    %24 = vsyncpa [#allocation13], 0
    %25 = vsyncpa [#allocation5], 0
    %s26 = scalar_lea.sflag [#allocation5], 1
    %27 = vsyncpa %s26, 0
    loop: start=0, step=1, limit=4
    $region2: #{tpu_custom_call.1} parent=1 // loop_pre_header
      _
    $region3: #{tpu_custom_call.1} parent=1 // loop_header
      %s29 = sphi 0, %s33
      %p30 = scmp.ge.s32.totalorder %s29, 4
      %s39 = sphi 0, %s41
      %s42 = sphi 0, %s39
      %s43 = sphi 0, %s42
      %s59 = sphi 0, %s43
      %s63 = sphi 0, %s63
      %s65 = sphi 0, %s63
      %s66 = sphi 0, %s65
      %s80 = sphi 0, %s66
      %s84 = sphi 0, %s84
      %s86 = sphi 0, %s84
      %s87 = sphi 0, %s86
      %s101 = sphi 0, %s87
      %s105 = sphi 0, %s105
      %s107 = sphi 0, %s105
      %s108 = sphi 0, %s107
      %s122 = sphi 0, %s108
      %s126 = sphi 0, %s126
      %s128 = sphi 0, %s126
      %s129 = sphi 0, %s128
      %s143 = sphi 0, %s129
      %s147 = sphi 0, %s147
      %s149 = sphi 0, %s147
      %s150 = sphi 0, %s149
      %s164 = sphi 0, %s150
      %s168 = sphi 0, %s168
      %s170 = sphi 0, %s168
      %s171 = sphi 0, %s170
      %s185 = sphi 0, %s171
      %s189 = sphi 0, %s189
      %s191 = sphi 0, %s189
      %s192 = sphi 0, %s191
      %s206 = sphi 0, %s192
      %s210 = sphi 0, %s210
      %s212 = sphi 0, %s210
      %s213 = sphi 0, %s212
      %s227 = sphi 0, %s213
      %s231 = sphi 0, %s231
      %s233 = sphi 0, %s231
      %s234 = sphi 0, %s233
      %s248 = sphi 0, %s234
      %s252 = sphi 0, %s252
      %s254 = sphi 0, %s252
      %s255 = sphi 0, %s254
      %s269 = sphi 0, %s255
      %s273 = sphi 0, %s273
      %s275 = sphi 0, %s273
      %s276 = sphi 0, %s275
      %s290 = sphi 0, %s276
      %s294 = sphi 0, %s294
      %s296 = sphi 0, %s294
      %s297 = sphi 0, %s296
      %s311 = sphi 0, %s297
      %s315 = sphi 0, %s315
      %s317 = sphi 0, %s315
      %s318 = sphi 0, %s317
      %s332 = sphi 0, %s318
      %s338 = sphi 0, %s340
      %s341 = sphi 0, %s338
      %s342 = sphi 0, %s341
      %s358 = sphi 0, %s342
    $region4: #{tpu_custom_call.1} parent=1 // loop_header_branch
      %32 = sbr.rel (%p30) target = $region8
    $region5: #{tpu_custom_call.1} parent=1 // loop_body
      %s34 = ssub.s32 %s29, 1
      %s35 = ssub.s32 %s29, 2
      %s36 = sadd.s32 %s29, 1
      %s37 = ssub.s32 %s29, %s36
      %p38 = scmp.eq.s32.totalorder %s37, 0
      %s40 = sadd.s32 %s39, 1
      %s41 = scalar_select %p38, %s39, %s40
      %p44 = pneg %p38
      %p45 = scmp.eq.s32.totalorder %s29, 1
      %p46 = por %p44, %p45
      %p47 = scmp.ne.s32.totalorder %s39, %s42
      %p48 = scmp.eq.s32.totalorder %s29, 0
      %p49 = por %p47, %p48
      %p50 = scmp.ne.s32.totalorder %s39, %s42
      %p51 = scmp.eq.s32.totalorder %s34, 1
      %p52 = por %p50, %p51
      %p53 = scmp.ne.s32.totalorder %s42, %s43
      %p54 = scmp.eq.s32.totalorder %s34, 0
      %p55 = por %p53, %p54
      %p56 = scmp.ne.s32.totalorder %s42, %s43
      %p57 = scmp.eq.s32.totalorder %s35, 1
      %p58 = por %p56, %p57
      %p60 = scmp.ne.s32.totalorder %s43, %s59
      %p61 = scmp.eq.s32.totalorder %s35, 0
      %p62 = por %p60, %p61
      %s64 = sadd.s32 %s63, 1
      %p67 = scmp.eq.s32.totalorder %s29, 1
      %p68 = scmp.ne.s32.totalorder %s63, %s65
      %p69 = scmp.eq.s32.totalorder %s29, 0
      %p70 = por %p68, %p69
      %p71 = scmp.ne.s32.totalorder %s63, %s65
      %p72 = scmp.eq.s32.totalorder %s34, 1
      %p73 = por %p71, %p72
      %p74 = scmp.ne.s32.totalorder %s65, %s66
      %p75 = scmp.eq.s32.totalorder %s34, 0
      %p76 = por %p74, %p75
      %p77 = scmp.ne.s32.totalorder %s65, %s66
      %p78 = scmp.eq.s32.totalorder %s35, 1
      %p79 = por %p77, %p78
      %p81 = scmp.ne.s32.totalorder %s66, %s80
      %p82 = scmp.eq.s32.totalorder %s35, 0
      %p83 = por %p81, %p82
      %s85 = sadd.s32 %s84, 1
      %p88 = scmp.eq.s32.totalorder %s29, 1
      %p89 = scmp.ne.s32.totalorder %s84, %s86
      %p90 = scmp.eq.s32.totalorder %s29, 0
      %p91 = por %p89, %p90
      %p92 = scmp.ne.s32.totalorder %s84, %s86
      %p93 = scmp.eq.s32.totalorder %s34, 1
      %p94 = por %p92, %p93
      %p95 = scmp.ne.s32.totalorder %s86, %s87
      %p96 = scmp.eq.s32.totalorder %s34, 0
      %p97 = por %p95, %p96
      %p98 = scmp.ne.s32.totalorder %s86, %s87
      %p99 = scmp.eq.s32.totalorder %s35, 1
      %p100 = por %p98, %p99
      %p102 = scmp.ne.s32.totalorder %s87, %s101
      %p103 = scmp.eq.s32.totalorder %s35, 0
      %p104 = por %p102, %p103
      %s106 = sadd.s32 %s105, 1
      %p109 = scmp.eq.s32.totalorder %s29, 1
      %p110 = scmp.ne.s32.totalorder %s105, %s107
      %p111 = scmp.eq.s32.totalorder %s29, 0
      %p112 = por %p110, %p111
      %p113 = scmp.ne.s32.totalorder %s105, %s107
      %p114 = scmp.eq.s32.totalorder %s34, 1
      %p115 = por %p113, %p114
      %p116 = scmp.ne.s32.totalorder %s107, %s108
      %p117 = scmp.eq.s32.totalorder %s34, 0
      %p118 = por %p116, %p117
      %p119 = scmp.ne.s32.totalorder %s107, %s108
      %p120 = scmp.eq.s32.totalorder %s35, 1
      %p121 = por %p119, %p120
      %p123 = scmp.ne.s32.totalorder %s108, %s122
      %p124 = scmp.eq.s32.totalorder %s35, 0
      %p125 = por %p123, %p124
      %s127 = sadd.s32 %s126, 1
      %p130 = scmp.eq.s32.totalorder %s29, 1
      %p131 = scmp.ne.s32.totalorder %s126, %s128
      %p132 = scmp.eq.s32.totalorder %s29, 0
      %p133 = por %p131, %p132
      %p134 = scmp.ne.s32.totalorder %s126, %s128
      %p135 = scmp.eq.s32.totalorder %s34, 1
      %p136 = por %p134, %p135
      %p137 = scmp.ne.s32.totalorder %s128, %s129
      %p138 = scmp.eq.s32.totalorder %s34, 0
      %p139 = por %p137, %p138
      %p140 = scmp.ne.s32.totalorder %s128, %s129
      %p141 = scmp.eq.s32.totalorder %s35, 1
      %p142 = por %p140, %p141
      %p144 = scmp.ne.s32.totalorder %s129, %s143
      %p145 = scmp.eq.s32.totalorder %s35, 0
      %p146 = por %p144, %p145
      %s148 = sadd.s32 %s147, 1
      %p151 = scmp.eq.s32.totalorder %s29, 1
      %p152 = scmp.ne.s32.totalorder %s147, %s149
      %p153 = scmp.eq.s32.totalorder %s29, 0
      %p154 = por %p152, %p153
      %p155 = scmp.ne.s32.totalorder %s147, %s149
      %p156 = scmp.eq.s32.totalorder %s34, 1
      %p157 = por %p155, %p156
      %p158 = scmp.ne.s32.totalorder %s149, %s150
      %p159 = scmp.eq.s32.totalorder %s34, 0
      %p160 = por %p158, %p159
      %p161 = scmp.ne.s32.totalorder %s149, %s150
      %p162 = scmp.eq.s32.totalorder %s35, 1
      %p163 = por %p161, %p162
      %p165 = scmp.ne.s32.totalorder %s150, %s164
      %p166 = scmp.eq.s32.totalorder %s35, 0
      %p167 = por %p165, %p166
      %s169 = sadd.s32 %s168, 1
      %p172 = scmp.eq.s32.totalorder %s29, 1
      %p173 = scmp.ne.s32.totalorder %s168, %s170
      %p174 = scmp.eq.s32.totalorder %s29, 0
      %p175 = por %p173, %p174
      %p176 = scmp.ne.s32.totalorder %s168, %s170
      %p177 = scmp.eq.s32.totalorder %s34, 1
      %p178 = por %p176, %p177
      %p179 = scmp.ne.s32.totalorder %s170, %s171
      %p180 = scmp.eq.s32.totalorder %s34, 0
      %p181 = por %p179, %p180
      %p182 = scmp.ne.s32.totalorder %s170, %s171
      %p183 = scmp.eq.s32.totalorder %s35, 1
      %p184 = por %p182, %p183
      %p186 = scmp.ne.s32.totalorder %s171, %s185
      %p187 = scmp.eq.s32.totalorder %s35, 0
      %p188 = por %p186, %p187
      %s190 = sadd.s32 %s189, 1
      %p193 = scmp.eq.s32.totalorder %s29, 1
      %p194 = scmp.ne.s32.totalorder %s189, %s191
      %p195 = scmp.eq.s32.totalorder %s29, 0
      %p196 = por %p194, %p195
      %p197 = scmp.ne.s32.totalorder %s189, %s191
      %p198 = scmp.eq.s32.totalorder %s34, 1
      %p199 = por %p197, %p198
      %p200 = scmp.ne.s32.totalorder %s191, %s192
      %p201 = scmp.eq.s32.totalorder %s34, 0
      %p202 = por %p200, %p201
      %p203 = scmp.ne.s32.totalorder %s191, %s192
      %p204 = scmp.eq.s32.totalorder %s35, 1
      %p205 = por %p203, %p204
      %p207 = scmp.ne.s32.totalorder %s192, %s206
      %p208 = scmp.eq.s32.totalorder %s35, 0
      %p209 = por %p207, %p208
      %s211 = sadd.s32 %s210, 1
      %p214 = scmp.eq.s32.totalorder %s29, 1
      %p215 = scmp.ne.s32.totalorder %s210, %s212
      %p216 = scmp.eq.s32.totalorder %s29, 0
      %p217 = por %p215, %p216
      %p218 = scmp.ne.s32.totalorder %s210, %s212
      %p219 = scmp.eq.s32.totalorder %s34, 1
      %p220 = por %p218, %p219
      %p221 = scmp.ne.s32.totalorder %s212, %s213
      %p222 = scmp.eq.s32.totalorder %s34, 0
      %p223 = por %p221, %p222
      %p224 = scmp.ne.s32.totalorder %s212, %s213
      %p225 = scmp.eq.s32.totalorder %s35, 1
      %p226 = por %p224, %p225
      %p228 = scmp.ne.s32.totalorder %s213, %s227
      %p229 = scmp.eq.s32.totalorder %s35, 0
      %p230 = por %p228, %p229
      %s232 = sadd.s32 %s231, 1
      %p235 = scmp.eq.s32.totalorder %s29, 1
      %p236 = scmp.ne.s32.totalorder %s231, %s233
      %p237 = scmp.eq.s32.totalorder %s29, 0
      %p238 = por %p236, %p237
      %p239 = scmp.ne.s32.totalorder %s231, %s233
      %p240 = scmp.eq.s32.totalorder %s34, 1
      %p241 = por %p239, %p240
      %p242 = scmp.ne.s32.totalorder %s233, %s234
      %p243 = scmp.eq.s32.totalorder %s34, 0
      %p244 = por %p242, %p243
      %p245 = scmp.ne.s32.totalorder %s233, %s234
      %p246 = scmp.eq.s32.totalorder %s35, 1
      %p247 = por %p245, %p246
      %p249 = scmp.ne.s32.totalorder %s234, %s248
      %p250 = scmp.eq.s32.totalorder %s35, 0
      %p251 = por %p249, %p250
      %s253 = sadd.s32 %s252, 1
      %p256 = scmp.eq.s32.totalorder %s29, 1
      %p257 = scmp.ne.s32.totalorder %s252, %s254
      %p258 = scmp.eq.s32.totalorder %s29, 0
      %p259 = por %p257, %p258
      %p260 = scmp.ne.s32.totalorder %s252, %s254
      %p261 = scmp.eq.s32.totalorder %s34, 1
      %p262 = por %p260, %p261
      %p263 = scmp.ne.s32.totalorder %s254, %s255
      %p264 = scmp.eq.s32.totalorder %s34, 0
      %p265 = por %p263, %p264
      %p266 = scmp.ne.s32.totalorder %s254, %s255
      %p267 = scmp.eq.s32.totalorder %s35, 1
      %p268 = por %p266, %p267
      %p270 = scmp.ne.s32.totalorder %s255, %s269
      %p271 = scmp.eq.s32.totalorder %s35, 0
      %p272 = por %p270, %p271
      %s274 = sadd.s32 %s273, 1
      %p277 = scmp.eq.s32.totalorder %s29, 1
      %p278 = scmp.ne.s32.totalorder %s273, %s275
      %p279 = scmp.eq.s32.totalorder %s29, 0
      %p280 = por %p278, %p279
      %p281 = scmp.ne.s32.totalorder %s273, %s275
      %p282 = scmp.eq.s32.totalorder %s34, 1
      %p283 = por %p281, %p282
      %p284 = scmp.ne.s32.totalorder %s275, %s276
      %p285 = scmp.eq.s32.totalorder %s34, 0
      %p286 = por %p284, %p285
      %p287 = scmp.ne.s32.totalorder %s275, %s276
      %p288 = scmp.eq.s32.totalorder %s35, 1
      %p289 = por %p287, %p288
      %p291 = scmp.ne.s32.totalorder %s276, %s290
      %p292 = scmp.eq.s32.totalorder %s35, 0
      %p293 = por %p291, %p292
      %s295 = sadd.s32 %s294, 1
      %p298 = scmp.eq.s32.totalorder %s29, 1
      %p299 = scmp.ne.s32.totalorder %s294, %s296
      %p300 = scmp.eq.s32.totalorder %s29, 0
      %p301 = por %p299, %p300
      %p302 = scmp.ne.s32.totalorder %s294, %s296
      %p303 = scmp.eq.s32.totalorder %s34, 1
      %p304 = por %p302, %p303
      %p305 = scmp.ne.s32.totalorder %s296, %s297
      %p306 = scmp.eq.s32.totalorder %s34, 0
      %p307 = por %p305, %p306
      %p308 = scmp.ne.s32.totalorder %s296, %s297
      %p309 = scmp.eq.s32.totalorder %s35, 1
      %p310 = por %p308, %p309
      %p312 = scmp.ne.s32.totalorder %s297, %s311
      %p313 = scmp.eq.s32.totalorder %s35, 0
      %p314 = por %p312, %p313
      %s316 = sadd.s32 %s315, 1
      %p319 = scmp.eq.s32.totalorder %s29, 1
      %p320 = scmp.ne.s32.totalorder %s315, %s317
      %p321 = scmp.eq.s32.totalorder %s29, 0
      %p322 = por %p320, %p321
      %p323 = scmp.ne.s32.totalorder %s315, %s317
      %p324 = scmp.eq.s32.totalorder %s34, 1
      %p325 = por %p323, %p324
      %p326 = scmp.ne.s32.totalorder %s317, %s318
      %p327 = scmp.eq.s32.totalorder %s34, 0
      %p328 = por %p326, %p327
      %p329 = scmp.ne.s32.totalorder %s317, %s318
      %p330 = scmp.eq.s32.totalorder %s35, 1
      %p331 = por %p329, %p330
      %p333 = scmp.ne.s32.totalorder %s318, %s332
      %p334 = scmp.eq.s32.totalorder %s35, 0
      %p335 = por %p333, %p334
      %s336 = ssub.s32 %s29, %s36
      %p337 = scmp.eq.s32.totalorder %s336, 0
      %s339 = sadd.s32 %s338, 1
      %s340 = scalar_select %p337, %s338, %s339
      %p343 = pneg %p337
      %p344 = scmp.eq.s32.totalorder %s29, 1
      %p345 = por %p343, %p344
      %p346 = scmp.ne.s32.totalorder %s338, %s341
      %p347 = scmp.eq.s32.totalorder %s29, 0
      %p348 = por %p346, %p347
      %p349 = scmp.ne.s32.totalorder %s338, %s341
      %p350 = scmp.eq.s32.totalorder %s34, 1
      %p351 = por %p349, %p350
      %p352 = scmp.ne.s32.totalorder %s341, %s342
      %p353 = scmp.eq.s32.totalorder %s34, 0
      %p354 = por %p352, %p353
      %p355 = scmp.ne.s32.totalorder %s341, %s342
      %p356 = scmp.eq.s32.totalorder %s35, 1
      %p357 = por %p355, %p356
      %p359 = scmp.ne.s32.totalorder %s342, %s358
      %p360 = scmp.eq.s32.totalorder %s35, 0
      %p361 = por %p359, %p360
      %p362 = scmp.le.s32.totalorder 1, %s29
      %p363 = scmp.lt.s32.totalorder %s29, 3
      %p364 = pnand %p362, %p363
      %p365 = pneg %p364
      // Predicated region
      $region9: #{tpu_custom_call.1} parent=5 // pred_check
        _
      $region10: #{tpu_custom_call.1} parent=5 // pred_check_branch
        %367 = sbr.rel (%p364) target = $region12
      $region11: #{tpu_custom_call.1} parent=5 // pred_region
        %s368 = ssub.s32 %s29, 1
        // Predicated region
        $region13: #{tpu_custom_call.1} parent=11 // pred_check
          %p369 = pneg %p76
        $region14: #{tpu_custom_call.1} parent=11 // pred_check_branch
          %371 = sbr.rel (%p369) target = $region16
        $region15: #{tpu_custom_call.1} parent=11 // pred_region
          %373 = vsyncadd [#allocation7], 0
          %s375 = sshll.u32 %s1, 4
          %s376 = int_to_ptr.hbm [resolvable:$true] %s375
          %s377 = sshll.u32 [#allocation6], 4
          %s378 = int_to_ptr.vmem [resolvable:$true] %s377
          %380 = dma.hbm_to_vmem [thread:$0]  %s376, 16, %s378, [#allocation7]
        $region16: #{tpu_custom_call.1} parent=11 // pred_fallthru
          _
        // Predicated region
        $region17: #{tpu_custom_call.1} parent=11 // pred_check
          %p381 = pneg %p97
        $region18: #{tpu_custom_call.1} parent=11 // pred_check_branch
          %383 = sbr.rel (%p381) target = $region20
        $region19: #{tpu_custom_call.1} parent=11 // pred_region
          _
        $region20: #{tpu_custom_call.1} parent=11 // pred_fallthru
          _
        // Predicated region
        $region21: #{tpu_custom_call.1} parent=11 // pred_check
          %p384 = pneg %p118
        $region22: #{tpu_custom_call.1} parent=11 // pred_check_branch
          %386 = sbr.rel (%p384) target = $region24
        $region23: #{tpu_custom_call.1} parent=11 // pred_region
          %388 = vsyncadd [#allocation7], 0
          %s389 = sshll.u32 %s3, 4
          %s390 = int_to_ptr.hbm [resolvable:$true] %s389
          %s391 = sshll.u32 [#allocation8], 4
          %s392 = int_to_ptr.vmem [resolvable:$true] %s391
          %397 = dma.hbm_to_vmem [thread:$0]  %s390, 1024, %s392, [#allocation7], 64, 64, 4
        $region24: #{tpu_custom_call.1} parent=11 // pred_fallthru
          _
        // Predicated region
        $region25: #{tpu_custom_call.1} parent=11 // pred_check
          %p398 = pneg %p139
        $region26: #{tpu_custom_call.1} parent=11 // pred_check_branch
          %400 = sbr.rel (%p398) target = $region28
        $region27: #{tpu_custom_call.1} parent=11 // pred_region
          _
        $region28: #{tpu_custom_call.1} parent=11 // pred_fallthru
          _
        // Predicated region
        $region29: #{tpu_custom_call.1} parent=11 // pred_check
          %p401 = pneg %p160
        $region30: #{tpu_custom_call.1} parent=11 // pred_check_branch
          %403 = sbr.rel (%p401) target = $region32
        $region31: #{tpu_custom_call.1} parent=11 // pred_region
          %405 = vsyncadd [#allocation10], 0
          %s406 = sshll.u32 %s5, 4
          %s407 = int_to_ptr.hbm [resolvable:$true] %s406
          %s408 = sshll.u32 [#allocation9], 4
          %s409 = int_to_ptr.vmem [resolvable:$true] %s408
          %414 = dma.hbm_to_vmem [thread:$0]  %s407, 256, %s409, [#allocation10], 128, 128, 8
        $region32: #{tpu_custom_call.1} parent=11 // pred_fallthru
          _
        // Predicated region
        $region33: #{tpu_custom_call.1} parent=11 // pred_check
          %p415 = pneg %p181
        $region34: #{tpu_custom_call.1} parent=11 // pred_check_branch
          %417 = sbr.rel (%p415) target = $region36
        $region35: #{tpu_custom_call.1} parent=11 // pred_region
          _
        $region36: #{tpu_custom_call.1} parent=11 // pred_fallthru
          _
        // Predicated region
        $region37: #{tpu_custom_call.1} parent=11 // pred_check
          %p418 = pneg %p202
        $region38: #{tpu_custom_call.1} parent=11 // pred_check_branch
          %420 = sbr.rel (%p418) target = $region40
        $region39: #{tpu_custom_call.1} parent=11 // pred_region
          %422 = vsyncadd [#allocation10], 0
          %s423 = sshll.u32 %s7, 4
          %s424 = int_to_ptr.hbm [resolvable:$true] %s423
          %s425 = sshll.u32 [#allocation11], 4
          %s426 = int_to_ptr.vmem [resolvable:$true] %s425
          %431 = dma.hbm_to_vmem [thread:$0]  %s424, 2048, %s426, [#allocation10], 128, 128, 8
        $region40: #{tpu_custom_call.1} parent=11 // pred_fallthru
          _
        // Predicated region
        $region41: #{tpu_custom_call.1} parent=11 // pred_check
          %p432 = pneg %p223
        $region42: #{tpu_custom_call.1} parent=11 // pred_check_branch
          %434 = sbr.rel (%p432) target = $region44
        $region43: #{tpu_custom_call.1} parent=11 // pred_region
          _
        $region44: #{tpu_custom_call.1} parent=11 // pred_fallthru
          _
        // Predicated region
        $region45: #{tpu_custom_call.1} parent=11 // pred_check
          %p435 = pneg %p244
        $region46: #{tpu_custom_call.1} parent=11 // pred_check_branch
          %437 = sbr.rel (%p435) target = $region48
        $region47: #{tpu_custom_call.1} parent=11 // pred_region
          %439 = vsyncadd [#allocation13], 0
          %s440 = sshll.u32 %s9, 4
          %s441 = int_to_ptr.hbm [resolvable:$true] %s440
          %s442 = sshll.u32 [#allocation12], 4
          %s443 = int_to_ptr.vmem [resolvable:$true] %s442
          %448 = dma.hbm_to_vmem [thread:$0]  %s441, 2048, %s443, [#allocation13], 128, 128, 8
        $region48: #{tpu_custom_call.1} parent=11 // pred_fallthru
          _
        // Predicated region
        $region49: #{tpu_custom_call.1} parent=11 // pred_check
          %p449 = pneg %p265
        $region50: #{tpu_custom_call.1} parent=11 // pred_check_branch
          %451 = sbr.rel (%p449) target = $region52
        $region51: #{tpu_custom_call.1} parent=11 // pred_region
          _
        $region52: #{tpu_custom_call.1} parent=11 // pred_fallthru
          _
        // Predicated region
        $region53: #{tpu_custom_call.1} parent=11 // pred_check
          %p452 = pneg %p286
        $region54: #{tpu_custom_call.1} parent=11 // pred_check_branch
          %454 = sbr.rel (%p452) target = $region56
        $region55: #{tpu_custom_call.1} parent=11 // pred_region
          %456 = vsyncadd [#allocation13], 0
          %s457 = sshll.u32 %s11, 4
          %s458 = int_to_ptr.hbm [resolvable:$true] %s457
          %s459 = sshll.u32 [#allocation14], 4
          %s460 = int_to_ptr.vmem [resolvable:$true] %s459
          %465 = dma.hbm_to_vmem [thread:$0]  %s458, 1024, %s460, [#allocation13], 64, 64, 4
        $region56: #{tpu_custom_call.1} parent=11 // pred_fallthru
          _
        // Predicated region
        $region57: #{tpu_custom_call.1} parent=11 // pred_check
          %p466 = pneg %p307
        $region58: #{tpu_custom_call.1} parent=11 // pred_check_branch
          %468 = sbr.rel (%p466) target = $region60
        $region59: #{tpu_custom_call.1} parent=11 // pred_region
          _
        $region60: #{tpu_custom_call.1} parent=11 // pred_fallthru
          _
        // Predicated region
        $region61: #{tpu_custom_call.1} parent=11 // pred_check
          %p469 = pneg %p328
        $region62: #{tpu_custom_call.1} parent=11 // pred_check_branch
          %471 = sbr.rel (%p469) target = $region64
        $region63: #{tpu_custom_call.1} parent=11 // pred_region
          _
        $region64: #{tpu_custom_call.1} parent=11 // pred_fallthru
          _
      $region12: #{tpu_custom_call.1} parent=5 // pred_fallthru
        _
      %p472 = scmp.lt.s32.totalorder %s29, 2
      // Predicated region
      $region65: #{tpu_custom_call.1} parent=5 // pred_check
        %p473 = pneg %p472
      $region66: #{tpu_custom_call.1} parent=5 // pred_check_branch
        %475 = sbr.rel (%p473) target = $region68
      $region67: #{tpu_custom_call.1} parent=5 // pred_region
        // Predicated region
        $region69: #{tpu_custom_call.1} parent=67 // pred_check
          %p476 = pneg %p49
        $region70: #{tpu_custom_call.1} parent=67 // pred_check_branch
          %478 = sbr.rel (%p476) target = $region72
        $region71: #{tpu_custom_call.1} parent=67 // pred_region
          %s479 = sand.u32 %s39, 1
          %s480 = scalar_lea.sflag [#allocation4], %s479
          %s481 = sand.u32 %s39, 1
          %s482 = smul.addr %s481, 256
          %s483 = scalar_lea.vmem [#allocation3], %s482
          %485 = vsyncadd %s480, 0
          %s486 = smul.addr %s29, 32
          %s487 = smul.addr %s486, 8
          %s488 = scalar_lea.hbm %s0, %s487
          %s489 = sshll.u32 %s488, 4
          %s490 = int_to_ptr.hbm [resolvable:$true] %s489
          %s491 = sshll.u32 %s483, 4
          %s492 = int_to_ptr.vmem [resolvable:$true] %s491
          %497 = dma.hbm_to_vmem [thread:$0]  %s490, 4096, %s492, %s480, 128, 128, 8
        $region72: #{tpu_custom_call.1} parent=67 // pred_fallthru
          _
      $region68: #{tpu_custom_call.1} parent=5 // pred_fallthru
        _
      %p498 = scmp.le.s32.totalorder 1, %s29
      %p499 = scmp.lt.s32.totalorder %s29, 3
      %p500 = pnand %p498, %p499
      %p501 = pneg %p500
      // Predicated region
      $region73: #{tpu_custom_call.1} parent=5 // pred_check
        _
      $region74: #{tpu_custom_call.1} parent=5 // pred_check_branch
        %503 = sbr.rel (%p500) target = $region76
      $region75: #{tpu_custom_call.1} parent=5 // pred_region
        %s504 = ssub.s32 %s29, 1
        %s505 = sand.u32 %s42, 1
        %s506 = scalar_lea.sflag [#allocation4], %s505
        %s507 = sand.u32 %s42, 1
        %s508 = smul.addr %s507, 256
        %s509 = scalar_lea.vmem [#allocation3], %s508
        // Predicated region
        $region77: #{tpu_custom_call.1} parent=75 // pred_check
          %p510 = pneg %p55
        $region78: #{tpu_custom_call.1} parent=75 // pred_check_branch
          %512 = sbr.rel (%p510) target = $region80
        $region79: #{tpu_custom_call.1} parent=75 // pred_region
          %514 = dma.done %s506, 4096
        $region80: #{tpu_custom_call.1} parent=75 // pred_fallthru
          _
        // Predicated region
        $region81: #{tpu_custom_call.1} parent=75 // pred_check
          %p515 = pneg %p76
        $region82: #{tpu_custom_call.1} parent=75 // pred_check_branch
          %517 = sbr.rel (%p515) target = $region84
        $region83: #{tpu_custom_call.1} parent=75 // pred_region
          %519 = dma.done [#allocation7], 16
        $region84: #{tpu_custom_call.1} parent=75 // pred_fallthru
          _
        // Predicated region
        $region85: #{tpu_custom_call.1} parent=75 // pred_check
          %p520 = pneg %p118
        $region86: #{tpu_custom_call.1} parent=75 // pred_check_branch
          %522 = sbr.rel (%p520) target = $region88
        $region87: #{tpu_custom_call.1} parent=75 // pred_region
          %524 = dma.done [#allocation7], 1024
        $region88: #{tpu_custom_call.1} parent=75 // pred_fallthru
          _
        // Predicated region
        $region89: #{tpu_custom_call.1} parent=75 // pred_check
          %p525 = pneg %p160
        $region90: #{tpu_custom_call.1} parent=75 // pred_check_branch
          %527 = sbr.rel (%p525) target = $region92
        $region91: #{tpu_custom_call.1} parent=75 // pred_region
          %529 = dma.done [#allocation10], 256
        $region92: #{tpu_custom_call.1} parent=75 // pred_fallthru
          _
        // Predicated region
        $region93: #{tpu_custom_call.1} parent=75 // pred_check
          %p530 = pneg %p202
        $region94: #{tpu_custom_call.1} parent=75 // pred_check_branch
          %532 = sbr.rel (%p530) target = $region96
        $region95: #{tpu_custom_call.1} parent=75 // pred_region
          %534 = dma.done [#allocation10], 2048
        $region96: #{tpu_custom_call.1} parent=75 // pred_fallthru
          _
        // Predicated region
        $region97: #{tpu_custom_call.1} parent=75 // pred_check
          %p535 = pneg %p244
        $region98: #{tpu_custom_call.1} parent=75 // pred_check_branch
          %537 = sbr.rel (%p535) target = $region100
        $region99: #{tpu_custom_call.1} parent=75 // pred_region
          %539 = dma.done [#allocation13], 2048
        $region100: #{tpu_custom_call.1} parent=75 // pred_fallthru
          _
        // Predicated region
        $region101: #{tpu_custom_call.1} parent=75 // pred_check
          %p540 = pneg %p286
        $region102: #{tpu_custom_call.1} parent=75 // pred_check_branch
          %542 = sbr.rel (%p540) target = $region104
        $region103: #{tpu_custom_call.1} parent=75 // pred_region
          %544 = dma.done [#allocation13], 1024
        $region104: #{tpu_custom_call.1} parent=75 // pred_fallthru
          _
        %s545 = sand.u32 %s42, 1
        %s546 = scalar_lea.sflag [#allocation4], %s545
        %s547 = sand.u32 %s42, 1
        %s548 = smul.addr %s547, 256
        %s549 = scalar_lea.vmem [#allocation3], %s548
        %p550 = pneg %p55
        %p551 = pneg %p52
        %p552 = pneg %p76
        %p553 = pneg %p73
        %p554 = pneg %p97
        %p555 = pneg %p94
        %p556 = pneg %p118
        %p557 = pneg %p115
        %p558 = pneg %p139
        %p559 = pneg %p136
        %p560 = pneg %p160
        %p561 = pneg %p157
        %p562 = pneg %p181
        %p563 = pneg %p178
        %p564 = pneg %p202
        %p565 = pneg %p199
        %p566 = pneg %p223
        %p567 = pneg %p220
        %p568 = pneg %p244
        %p569 = pneg %p241
        %p570 = pneg %p265
        %p571 = pneg %p262
        %p572 = pneg %p286
        %p573 = pneg %p283
        %p574 = pneg %p307
        %p575 = pneg %p304
        %p576 = pneg %p328
        %p577 = pneg %p325
        %p578 = pneg %p354
        %p579 = pneg %p351
        %s580 = sand.u32 %s341, 1
        %s581 = scalar_lea.sflag [#allocation5], %s580
        %s582 = sand.u32 %s341, 1
        %s583 = smul.addr %s582, 256
        %s584 = scalar_lea.vmem [#allocation15], %s583
        %v585 = vld [vmem:[%s509] sm:$0xff]
        %v586 = vld [vmem:[%s509 + $0x8] sm:$0xff]
        %v587 = vld [vmem:[%s509 + $0x10] sm:$0xff]
        %v588 = vld [vmem:[%s509 + $0x18] sm:$0xff]
        %v589 = vld [vmem:[%s509 + $0x20] sm:$0xff]
        %v590 = vld [vmem:[%s509 + $0x28] sm:$0xff]
        %v591 = vld [vmem:[%s509 + $0x30] sm:$0xff]
        %v592 = vld [vmem:[%s509 + $0x38] sm:$0xff]
        %v593 = vld [vmem:[%s509 + $0x40] sm:$0xff]
        %v594 = vld [vmem:[%s509 + $0x48] sm:$0xff]
        %v595 = vld [vmem:[%s509 + $0x50] sm:$0xff]
        %v596 = vld [vmem:[%s509 + $0x58] sm:$0xff]
        %v597 = vld [vmem:[%s509 + $0x60] sm:$0xff]
        %v598 = vld [vmem:[%s509 + $0x68] sm:$0xff]
        %v599 = vld [vmem:[%s509 + $0x70] sm:$0xff]
        %v600 = vld [vmem:[%s509 + $0x78] sm:$0xff]
        %v601 = vld [vmem:[%s509 + $0x80] sm:$0xff]
        %v602 = vld [vmem:[%s509 + $0x88] sm:$0xff]
        %v603 = vld [vmem:[%s509 + $0x90] sm:$0xff]
        %v604 = vld [vmem:[%s509 + $0x98] sm:$0xff]
        %v605 = vld [vmem:[%s509 + $0xa0] sm:$0xff]
        %v606 = vld [vmem:[%s509 + $0xa8] sm:$0xff]
        %v607 = vld [vmem:[%s509 + $0xb0] sm:$0xff]
        %v608 = vld [vmem:[%s509 + $0xb8] sm:$0xff]
        %v609 = vld [vmem:[%s509 + $0xc0] sm:$0xff]
        %v610 = vld [vmem:[%s509 + $0xc8] sm:$0xff]
        %v611 = vld [vmem:[%s509 + $0xd0] sm:$0xff]
        %v612 = vld [vmem:[%s509 + $0xd8] sm:$0xff]
        %v613 = vld [vmem:[%s509 + $0xe0] sm:$0xff]
        %v614 = vld [vmem:[%s509 + $0xe8] sm:$0xff]
        %v615 = vld [vmem:[%s509 + $0xf0] sm:$0xff]
        %v616 = vld [vmem:[%s509 + $0xf8] sm:$0xff]
        %v617 = vld [vmem:[#allocation6] sm:$0x1]
        %v619 = vperm.slane %v617, 0
        %v621 = vmul.f32 %v585, %v619
        %v622 = vmul.f32 %v586, %v619
        %v623 = vmul.f32 %v587, %v619
        %v624 = vmul.f32 %v588, %v619
        %v625 = vmul.f32 %v589, %v619
        %v626 = vmul.f32 %v590, %v619
        %v627 = vmul.f32 %v591, %v619
        %v628 = vmul.f32 %v592, %v619
        %v629 = vmul.f32 %v593, %v619
        %v630 = vmul.f32 %v594, %v619
        %v631 = vmul.f32 %v595, %v619
        %v632 = vmul.f32 %v596, %v619
        %v633 = vmul.f32 %v597, %v619
        %v634 = vmul.f32 %v598, %v619
        %v635 = vmul.f32 %v599, %v619
        %v636 = vmul.f32 %v600, %v619
        %v637 = vmul.f32 %v601, %v619
        %v638 = vmul.f32 %v602, %v619
        %v639 = vmul.f32 %v603, %v619
        %v640 = vmul.f32 %v604, %v619
        %v641 = vmul.f32 %v605, %v619
        %v642 = vmul.f32 %v606, %v619
        %v643 = vmul.f32 %v607, %v619
        %v644 = vmul.f32 %v608, %v619
        %v645 = vmul.f32 %v609, %v619
        %v646 = vmul.f32 %v610, %v619
        %v647 = vmul.f32 %v611, %v619
        %v648 = vmul.f32 %v612, %v619
        %v649 = vmul.f32 %v613, %v619
        %v650 = vmul.f32 %v614, %v619
        %v651 = vmul.f32 %v615, %v619
        %v652 = vmul.f32 %v616, %v619
        %v653 = vld [vmem:[%s2] sm:$0x1]
        %v655 = vperm.slane %v653, 0
        %v657 = vadd.f32 %v621, %v655
        %v658 = vadd.f32 %v622, %v655
        %v659 = vadd.f32 %v623, %v655
        %v660 = vadd.f32 %v624, %v655
        %v661 = vadd.f32 %v625, %v655
        %v662 = vadd.f32 %v626, %v655
        %v663 = vadd.f32 %v627, %v655
        %v664 = vadd.f32 %v628, %v655
        %v665 = vadd.f32 %v629, %v655
        %v666 = vadd.f32 %v630, %v655
        %v667 = vadd.f32 %v631, %v655
        %v668 = vadd.f32 %v632, %v655
        %v669 = vadd.f32 %v633, %v655
        %v670 = vadd.f32 %v634, %v655
        %v671 = vadd.f32 %v635, %v655
        %v672 = vadd.f32 %v636, %v655
        %v673 = vadd.f32 %v637, %v655
        %v674 = vadd.f32 %v638, %v655
        %v675 = vadd.f32 %v639, %v655
        %v676 = vadd.f32 %v640, %v655
        %v677 = vadd.f32 %v641, %v655
        %v678 = vadd.f32 %v642, %v655
        %v679 = vadd.f32 %v643, %v655
        %v680 = vadd.f32 %v644, %v655
        %v681 = vadd.f32 %v645, %v655
        %v682 = vadd.f32 %v646, %v655
        %v683 = vadd.f32 %v647, %v655
        %v684 = vadd.f32 %v648, %v655
        %v685 = vadd.f32 %v649, %v655
        %v686 = vadd.f32 %v650, %v655
        %v687 = vadd.f32 %v651, %v655
        %v688 = vadd.f32 %v652, %v655
        %v689 = vpack.c.bf16 %v658, %v657
        %v690 = vpack.c.bf16 %v660, %v659
        %v691 = vpack.c.bf16 %v662, %v661
        %v692 = vpack.c.bf16 %v664, %v663
        %v693 = vpack.c.bf16 %v666, %v665
        %v694 = vpack.c.bf16 %v668, %v667
        %v695 = vpack.c.bf16 %v670, %v669
        %v696 = vpack.c.bf16 %v672, %v671
        %v697 = vpack.c.bf16 %v674, %v673
        %v698 = vpack.c.bf16 %v676, %v675
        %v699 = vpack.c.bf16 %v678, %v677
        %v700 = vpack.c.bf16 %v680, %v679
        %v701 = vpack.c.bf16 %v682, %v681
        %v702 = vpack.c.bf16 %v684, %v683
        %v703 = vpack.c.bf16 %v686, %v685
        %v704 = vpack.c.bf16 %v688, %v687
        %v705 = vld [vmem:[#allocation8] sm:$0xf]
        %v706 = vld [vmem:[#allocation8 + $0x4] sm:$0xf]
        %v707 = vld [vmem:[#allocation8 + $0x8] sm:$0xf]
        %v708 = vld [vmem:[#allocation8 + $0xc] sm:$0xf]
        %v709 = vld [vmem:[#allocation8 + $0x10] sm:$0xf]
        %v710 = vld [vmem:[#allocation8 + $0x14] sm:$0xf]
        %v711 = vld [vmem:[#allocation8 + $0x18] sm:$0xf]
        %v712 = vld [vmem:[#allocation8 + $0x1c] sm:$0xf]
        %v713 = vld [vmem:[#allocation8 + $0x20] sm:$0xf]
        %v714 = vld [vmem:[#allocation8 + $0x24] sm:$0xf]
        %v715 = vld [vmem:[#allocation8 + $0x28] sm:$0xf]
        %v716 = vld [vmem:[#allocation8 + $0x2c] sm:$0xf]
        %v717 = vld [vmem:[#allocation8 + $0x30] sm:$0xf]
        %v718 = vld [vmem:[#allocation8 + $0x34] sm:$0xf]
        %v719 = vld [vmem:[#allocation8 + $0x38] sm:$0xf]
        %v720 = vld [vmem:[#allocation8 + $0x3c] sm:$0xf]
        %v721 = vld [vmem:[%s4] sm:$0x1]
        %v723 = vperm.slane %v721, 0
        %v741 = vunpack.c.l.b16 %v705
        %v742 = vunpack.c.l.b16 %v706
        %v743 = vunpack.c.l.b16 %v707
        %v744 = vunpack.c.l.b16 %v708
        %v745 = vunpack.c.l.b16 %v709
        %v746 = vunpack.c.l.b16 %v710
        %v747 = vunpack.c.l.b16 %v711
        %v748 = vunpack.c.l.b16 %v712
        %v749 = vunpack.c.l.b16 %v713
        %v750 = vunpack.c.l.b16 %v714
        %v751 = vunpack.c.l.b16 %v715
        %v752 = vunpack.c.l.b16 %v716
        %v753 = vunpack.c.l.b16 %v717
        %v754 = vunpack.c.l.b16 %v718
        %v755 = vunpack.c.l.b16 %v719
        %v756 = vunpack.c.l.b16 %v720
        %v757 = vpack.c.b16 %v742, %v741
        %v758 = vpack.c.b16 %v744, %v743
        %v759 = vpack.c.b16 %v746, %v745
        %v760 = vpack.c.b16 %v748, %v747
        %v761 = vpack.c.b16 %v750, %v749
        %v762 = vpack.c.b16 %v752, %v751
        %v763 = vpack.c.b16 %v754, %v753
        %v764 = vpack.c.b16 %v756, %v755
        %773 = vmatpush.bf16.msra.mxu0 %v764
        %774 = vmatpush.bf16.msra.mxu0 %v763
        %775 = vmatpush.bf16.msra.mxu0 %v762
        %776 = vmatpush.bf16.msra.mxu0 %v761
        %777 = vmatpush.bf16.msra.mxu0 %v760
        %778 = vmatpush.bf16.msra.mxu0 %v759
        %779 = vmatpush.bf16.msra.mxu0 %v758
        %780 = vmatpush.bf16.msra.mxu0 %v757
        %781 = vmatmul.bf16.gmra.mxu0 %v689
        %v782 = vpop.f32.mrf.mxu0
        %v783 = vadd.f32 %v723, %v782
        %v784 = vpop.f32.mrf.mxu0
        %v785 = vadd.f32 %v723, %v784
        %786 = vmatmul.bf16.gmra.mxu0 %v690
        %v787 = vpop.f32.mrf.mxu0
        %v788 = vadd.f32 %v723, %v787
        %v789 = vpop.f32.mrf.mxu0
        %v790 = vadd.f32 %v723, %v789
        %791 = vmatmul.bf16.gmra.mxu0 %v691
        %v792 = vpop.f32.mrf.mxu0
        %v793 = vadd.f32 %v723, %v792
        %v794 = vpop.f32.mrf.mxu0
        %v795 = vadd.f32 %v723, %v794
        %796 = vmatmul.bf16.gmra.mxu0 %v692
        %v797 = vpop.f32.mrf.mxu0
        %v798 = vadd.f32 %v723, %v797
        %v799 = vpop.f32.mrf.mxu0
        %v800 = vadd.f32 %v723, %v799
        %801 = vmatmul.bf16.gmra.mxu0 %v693
        %v802 = vpop.f32.mrf.mxu0
        %v803 = vadd.f32 %v723, %v802
        %v804 = vpop.f32.mrf.mxu0
        %v805 = vadd.f32 %v723, %v804
        %806 = vmatmul.bf16.gmra.mxu0 %v694
        %v807 = vpop.f32.mrf.mxu0
        %v808 = vadd.f32 %v723, %v807
        %v809 = vpop.f32.mrf.mxu0
        %v810 = vadd.f32 %v723, %v809
        %811 = vmatmul.bf16.gmra.mxu0 %v695
        %v812 = vpop.f32.mrf.mxu0
        %v813 = vadd.f32 %v723, %v812
        %v814 = vpop.f32.mrf.mxu0
        %v815 = vadd.f32 %v723, %v814
        %816 = vmatmul.bf16.gmra.mxu0 %v696
        %v817 = vpop.f32.mrf.mxu0
        %v818 = vadd.f32 %v723, %v817
        %v819 = vpop.f32.mrf.mxu0
        %v820 = vadd.f32 %v723, %v819
        %821 = vmatmul.bf16.gmra.mxu0 %v697
        %v822 = vpop.f32.mrf.mxu0
        %v823 = vadd.f32 %v723, %v822
        %v824 = vpop.f32.mrf.mxu0
        %v825 = vadd.f32 %v723, %v824
        %826 = vmatmul.bf16.gmra.mxu0 %v698
        %v827 = vpop.f32.mrf.mxu0
        %v828 = vadd.f32 %v723, %v827
        %v829 = vpop.f32.mrf.mxu0
        %v830 = vadd.f32 %v723, %v829
        %831 = vmatmul.bf16.gmra.mxu0 %v699
        %v832 = vpop.f32.mrf.mxu0
        %v833 = vadd.f32 %v723, %v832
        %v834 = vpop.f32.mrf.mxu0
        %v835 = vadd.f32 %v723, %v834
        %836 = vmatmul.bf16.gmra.mxu0 %v700
        %v837 = vpop.f32.mrf.mxu0
        %v838 = vadd.f32 %v723, %v837
        %v839 = vpop.f32.mrf.mxu0
        %v840 = vadd.f32 %v723, %v839
        %841 = vmatmul.bf16.gmra.mxu0 %v701
        %v842 = vpop.f32.mrf.mxu0
        %v843 = vadd.f32 %v723, %v842
        %v844 = vpop.f32.mrf.mxu0
        %v845 = vadd.f32 %v723, %v844
        %846 = vmatmul.bf16.gmra.mxu0 %v702
        %v847 = vpop.f32.mrf.mxu0
        %v848 = vadd.f32 %v723, %v847
        %v849 = vpop.f32.mrf.mxu0
        %v850 = vadd.f32 %v723, %v849
        %851 = vmatmul.bf16.gmra.mxu0 %v703
        %v852 = vpop.f32.mrf.mxu0
        %v853 = vadd.f32 %v723, %v852
        %v854 = vpop.f32.mrf.mxu0
        %v855 = vadd.f32 %v723, %v854
        %856 = vmatmul.bf16.gmra.mxu0 %v704
        %v857 = vpop.f32.mrf.mxu0
        %v858 = vadd.f32 %v723, %v857
        %v859 = vpop.f32.mrf.mxu0
        %v860 = vadd.f32 %v723, %v859
        %861 = vdwg.mxu0
        %v862 = vmul.f32 %v783, %v783
        %v863 = vmul.f32 %v785, %v785
        %v864 = vmul.f32 %v788, %v788
        %v865 = vmul.f32 %v790, %v790
        %v866 = vmul.f32 %v793, %v793
        %v867 = vmul.f32 %v795, %v795
        %v868 = vmul.f32 %v798, %v798
        %v869 = vmul.f32 %v800, %v800
        %v870 = vmul.f32 %v803, %v803
        %v871 = vmul.f32 %v805, %v805
        %v872 = vmul.f32 %v808, %v808
        %v873 = vmul.f32 %v810, %v810
        %v874 = vmul.f32 %v813, %v813
        %v875 = vmul.f32 %v815, %v815
        %v876 = vmul.f32 %v818, %v818
        %v877 = vmul.f32 %v820, %v820
        %v878 = vmul.f32 %v823, %v823
        %v879 = vmul.f32 %v825, %v825
        %v880 = vmul.f32 %v828, %v828
        %v881 = vmul.f32 %v830, %v830
        %v882 = vmul.f32 %v833, %v833
        %v883 = vmul.f32 %v835, %v835
        %v884 = vmul.f32 %v838, %v838
        %v885 = vmul.f32 %v840, %v840
        %v886 = vmul.f32 %v843, %v843
        %v887 = vmul.f32 %v845, %v845
        %v888 = vmul.f32 %v848, %v848
        %v889 = vmul.f32 %v850, %v850
        %v890 = vmul.f32 %v853, %v853
        %v891 = vmul.f32 %v855, %v855
        %v892 = vmul.f32 %v858, %v858
        %v893 = vmul.f32 %v860, %v860
        %v894 = vmul.f32 %v783, %v862
        %v895 = vmul.f32 %v785, %v863
        %v896 = vmul.f32 %v788, %v864
        %v897 = vmul.f32 %v790, %v865
        %v898 = vmul.f32 %v793, %v866
        %v899 = vmul.f32 %v795, %v867
        %v900 = vmul.f32 %v798, %v868
        %v901 = vmul.f32 %v800, %v869
        %v902 = vmul.f32 %v803, %v870
        %v903 = vmul.f32 %v805, %v871
        %v904 = vmul.f32 %v808, %v872
        %v905 = vmul.f32 %v810, %v873
        %v906 = vmul.f32 %v813, %v874
        %v907 = vmul.f32 %v815, %v875
        %v908 = vmul.f32 %v818, %v876
        %v909 = vmul.f32 %v820, %v877
        %v910 = vmul.f32 %v823, %v878
        %v911 = vmul.f32 %v825, %v879
        %v912 = vmul.f32 %v828, %v880
        %v913 = vmul.f32 %v830, %v881
        %v914 = vmul.f32 %v833, %v882
        %v915 = vmul.f32 %v835, %v883
        %v916 = vmul.f32 %v838, %v884
        %v917 = vmul.f32 %v840, %v885
        %v918 = vmul.f32 %v843, %v886
        %v919 = vmul.f32 %v845, %v887
        %v920 = vmul.f32 %v848, %v888
        %v921 = vmul.f32 %v850, %v889
        %v922 = vmul.f32 %v853, %v890
        %v923 = vmul.f32 %v855, %v891
        %v924 = vmul.f32 %v858, %v892
        %v925 = vmul.f32 %v860, %v893
        %v926 = vmul.f32 %v894, 0.044715
        %v927 = vmul.f32 %v895, 0.044715
        %v928 = vmul.f32 %v896, 0.044715
        %v929 = vmul.f32 %v897, 0.044715
        %v930 = vmul.f32 %v898, 0.044715
        %v931 = vmul.f32 %v899, 0.044715
        %v932 = vmul.f32 %v900, 0.044715
        %v933 = vmul.f32 %v901, 0.044715
        %v934 = vmul.f32 %v902, 0.044715
        %v935 = vmul.f32 %v903, 0.044715
        %v936 = vmul.f32 %v904, 0.044715
        %v937 = vmul.f32 %v905, 0.044715
        %v938 = vmul.f32 %v906, 0.044715
        %v939 = vmul.f32 %v907, 0.044715
        %v940 = vmul.f32 %v908, 0.044715
        %v941 = vmul.f32 %v909, 0.044715
        %v942 = vmul.f32 %v910, 0.044715
        %v943 = vmul.f32 %v911, 0.044715
        %v944 = vmul.f32 %v912, 0.044715
        %v945 = vmul.f32 %v913, 0.044715
        %v946 = vmul.f32 %v914, 0.044715
        %v947 = vmul.f32 %v915, 0.044715
        %v948 = vmul.f32 %v916, 0.044715
        %v949 = vmul.f32 %v917, 0.044715
        %v950 = vmul.f32 %v918, 0.044715
        %v951 = vmul.f32 %v919, 0.044715
        %v952 = vmul.f32 %v920, 0.044715
        %v953 = vmul.f32 %v921, 0.044715
        %v954 = vmul.f32 %v922, 0.044715
        %v955 = vmul.f32 %v923, 0.044715
        %v956 = vmul.f32 %v924, 0.044715
        %v957 = vmul.f32 %v925, 0.044715
        %v958 = vadd.f32 %v783, %v926
        %v959 = vadd.f32 %v785, %v927
        %v960 = vadd.f32 %v788, %v928
        %v961 = vadd.f32 %v790, %v929
        %v962 = vadd.f32 %v793, %v930
        %v963 = vadd.f32 %v795, %v931
        %v964 = vadd.f32 %v798, %v932
        %v965 = vadd.f32 %v800, %v933
        %v966 = vadd.f32 %v803, %v934
        %v967 = vadd.f32 %v805, %v935
        %v968 = vadd.f32 %v808, %v936
        %v969 = vadd.f32 %v810, %v937
        %v970 = vadd.f32 %v813, %v938
        %v971 = vadd.f32 %v815, %v939
        %v972 = vadd.f32 %v818, %v940
        %v973 = vadd.f32 %v820, %v941
        %v974 = vadd.f32 %v823, %v942
        %v975 = vadd.f32 %v825, %v943
        %v976 = vadd.f32 %v828, %v944
        %v977 = vadd.f32 %v830, %v945
        %v978 = vadd.f32 %v833, %v946
        %v979 = vadd.f32 %v835, %v947
        %v980 = vadd.f32 %v838, %v948
        %v981 = vadd.f32 %v840, %v949
        %v982 = vadd.f32 %v843, %v950
        %v983 = vadd.f32 %v845, %v951
        %v984 = vadd.f32 %v848, %v952
        %v985 = vadd.f32 %v850, %v953
        %v986 = vadd.f32 %v853, %v954
        %v987 = vadd.f32 %v855, %v955
        %v988 = vadd.f32 %v858, %v956
        %v989 = vadd.f32 %v860, %v957
        %v990 = vmul.f32 %v958, 0.7978846
        %v991 = vmul.f32 %v959, 0.7978846
        %v992 = vmul.f32 %v960, 0.7978846
        %v993 = vmul.f32 %v961, 0.7978846
        %v994 = vmul.f32 %v962, 0.7978846
        %v995 = vmul.f32 %v963, 0.7978846
        %v996 = vmul.f32 %v964, 0.7978846
        %v997 = vmul.f32 %v965, 0.7978846
        %v998 = vmul.f32 %v966, 0.7978846
        %v999 = vmul.f32 %v967, 0.7978846
        %v1000 = vmul.f32 %v968, 0.7978846
        %v1001 = vmul.f32 %v969, 0.7978846
        %v1002 = vmul.f32 %v970, 0.7978846
        %v1003 = vmul.f32 %v971, 0.7978846
        %v1004 = vmul.f32 %v972, 0.7978846
        %v1005 = vmul.f32 %v973, 0.7978846
        %v1006 = vmul.f32 %v974, 0.7978846
        %v1007 = vmul.f32 %v975, 0.7978846
        %v1008 = vmul.f32 %v976, 0.7978846
        %v1009 = vmul.f32 %v977, 0.7978846
        %v1010 = vmul.f32 %v978, 0.7978846
        %v1011 = vmul.f32 %v979, 0.7978846
        %v1012 = vmul.f32 %v980, 0.7978846
        %v1013 = vmul.f32 %v981, 0.7978846
        %v1014 = vmul.f32 %v982, 0.7978846
        %v1015 = vmul.f32 %v983, 0.7978846
        %v1016 = vmul.f32 %v984, 0.7978846
        %v1017 = vmul.f32 %v985, 0.7978846
        %v1018 = vmul.f32 %v986, 0.7978846
        %v1019 = vmul.f32 %v987, 0.7978846
        %v1020 = vmul.f32 %v988, 0.7978846
        %v1021 = vmul.f32 %v989, 0.7978846
        %v1022 = vtanh.pop %v990
        %v1023 = vtanh.pop %v991
        %v1024 = vtanh.pop %v992
        %v1025 = vtanh.pop %v993
        %v1026 = vtanh.pop %v994
        %v1027 = vtanh.pop %v995
        %v1028 = vtanh.pop %v996
        %v1029 = vtanh.pop %v997
        %v1030 = vtanh.pop %v998
        %v1031 = vtanh.pop %v999
        %v1032 = vtanh.pop %v1000
        %v1033 = vtanh.pop %v1001
        %v1034 = vtanh.pop %v1002
        %v1035 = vtanh.pop %v1003
        %v1036 = vtanh.pop %v1004
        %v1037 = vtanh.pop %v1005
        %v1038 = vtanh.pop %v1006
        %v1039 = vtanh.pop %v1007
        %v1040 = vtanh.pop %v1008
        %v1041 = vtanh.pop %v1009
        %v1042 = vtanh.pop %v1010
        %v1043 = vtanh.pop %v1011
        %v1044 = vtanh.pop %v1012
        %v1045 = vtanh.pop %v1013
        %v1046 = vtanh.pop %v1014
        %v1047 = vtanh.pop %v1015
        %v1048 = vtanh.pop %v1016
        %v1049 = vtanh.pop %v1017
        %v1050 = vtanh.pop %v1018
        %v1051 = vtanh.pop %v1019
        %v1052 = vtanh.pop %v1020
        %v1053 = vtanh.pop %v1021
        %v1054 = vadd.f32 %v1022, 1.0
        %v1055 = vadd.f32 %v1023, 1.0
        %v1056 = vadd.f32 %v1024, 1.0
        %v1057 = vadd.f32 %v1025, 1.0
        %v1058 = vadd.f32 %v1026, 1.0
        %v1059 = vadd.f32 %v1027, 1.0
        %v1060 = vadd.f32 %v1028, 1.0
        %v1061 = vadd.f32 %v1029, 1.0
        %v1062 = vadd.f32 %v1030, 1.0
        %v1063 = vadd.f32 %v1031, 1.0
        %v1064 = vadd.f32 %v1032, 1.0
        %v1065 = vadd.f32 %v1033, 1.0
        %v1066 = vadd.f32 %v1034, 1.0
        %v1067 = vadd.f32 %v1035, 1.0
        %v1068 = vadd.f32 %v1036, 1.0
        %v1069 = vadd.f32 %v1037, 1.0
        %v1070 = vadd.f32 %v1038, 1.0
        %v1071 = vadd.f32 %v1039, 1.0
        %v1072 = vadd.f32 %v1040, 1.0
        %v1073 = vadd.f32 %v1041, 1.0
        %v1074 = vadd.f32 %v1042, 1.0
        %v1075 = vadd.f32 %v1043, 1.0
        %v1076 = vadd.f32 %v1044, 1.0
        %v1077 = vadd.f32 %v1045, 1.0
        %v1078 = vadd.f32 %v1046, 1.0
        %v1079 = vadd.f32 %v1047, 1.0
        %v1080 = vadd.f32 %v1048, 1.0
        %v1081 = vadd.f32 %v1049, 1.0
        %v1082 = vadd.f32 %v1050, 1.0
        %v1083 = vadd.f32 %v1051, 1.0
        %v1084 = vadd.f32 %v1052, 1.0
        %v1085 = vadd.f32 %v1053, 1.0
        %v1086 = vmul.f32 %v1054, 0.5
        %v1087 = vmul.f32 %v1055, 0.5
        %v1088 = vmul.f32 %v1056, 0.5
        %v1089 = vmul.f32 %v1057, 0.5
        %v1090 = vmul.f32 %v1058, 0.5
        %v1091 = vmul.f32 %v1059, 0.5
        %v1092 = vmul.f32 %v1060, 0.5
        %v1093 = vmul.f32 %v1061, 0.5
        %v1094 = vmul.f32 %v1062, 0.5
        %v1095 = vmul.f32 %v1063, 0.5
        %v1096 = vmul.f32 %v1064, 0.5
        %v1097 = vmul.f32 %v1065, 0.5
        %v1098 = vmul.f32 %v1066, 0.5
        %v1099 = vmul.f32 %v1067, 0.5
        %v1100 = vmul.f32 %v1068, 0.5
        %v1101 = vmul.f32 %v1069, 0.5
        %v1102 = vmul.f32 %v1070, 0.5
        %v1103 = vmul.f32 %v1071, 0.5
        %v1104 = vmul.f32 %v1072, 0.5
        %v1105 = vmul.f32 %v1073, 0.5
        %v1106 = vmul.f32 %v1074, 0.5
        %v1107 = vmul.f32 %v1075, 0.5
        %v1108 = vmul.f32 %v1076, 0.5
        %v1109 = vmul.f32 %v1077, 0.5
        %v1110 = vmul.f32 %v1078, 0.5
        %v1111 = vmul.f32 %v1079, 0.5
        %v1112 = vmul.f32 %v1080, 0.5
        %v1113 = vmul.f32 %v1081, 0.5
        %v1114 = vmul.f32 %v1082, 0.5
        %v1115 = vmul.f32 %v1083, 0.5
        %v1116 = vmul.f32 %v1084, 0.5
        %v1117 = vmul.f32 %v1085, 0.5
        %v1118 = vmul.f32 %v783, %v1086
        %v1119 = vmul.f32 %v785, %v1087
        %v1120 = vmul.f32 %v788, %v1088
        %v1121 = vmul.f32 %v790, %v1089
        %v1122 = vmul.f32 %v793, %v1090
        %v1123 = vmul.f32 %v795, %v1091
        %v1124 = vmul.f32 %v798, %v1092
        %v1125 = vmul.f32 %v800, %v1093
        %v1126 = vmul.f32 %v803, %v1094
        %v1127 = vmul.f32 %v805, %v1095
        %v1128 = vmul.f32 %v808, %v1096
        %v1129 = vmul.f32 %v810, %v1097
        %v1130 = vmul.f32 %v813, %v1098
        %v1131 = vmul.f32 %v815, %v1099
        %v1132 = vmul.f32 %v818, %v1100
        %v1133 = vmul.f32 %v820, %v1101
        %v1134 = vmul.f32 %v823, %v1102
        %v1135 = vmul.f32 %v825, %v1103
        %v1136 = vmul.f32 %v828, %v1104
        %v1137 = vmul.f32 %v830, %v1105
        %v1138 = vmul.f32 %v833, %v1106
        %v1139 = vmul.f32 %v835, %v1107
        %v1140 = vmul.f32 %v838, %v1108
        %v1141 = vmul.f32 %v840, %v1109
        %v1142 = vmul.f32 %v843, %v1110
        %v1143 = vmul.f32 %v845, %v1111
        %v1144 = vmul.f32 %v848, %v1112
        %v1145 = vmul.f32 %v850, %v1113
        %v1146 = vmul.f32 %v853, %v1114
        %v1147 = vmul.f32 %v855, %v1115
        %v1148 = vmul.f32 %v858, %v1116
        %v1149 = vmul.f32 %v860, %v1117
        %1150 = vst [vmem:[#allocation2] sm:$0xff] 0.0
        %1151 = vst [vmem:[#allocation2 + $0x8] sm:$0xff] 0.0
        %1152 = vst [vmem:[#allocation2 + $0x10] sm:$0xff] 0.0
        %1153 = vst [vmem:[#allocation2 + $0x18] sm:$0xff] 0.0
        %1154 = vst [vmem:[#allocation2 + $0x20] sm:$0xff] 0.0
        %1155 = vst [vmem:[#allocation2 + $0x28] sm:$0xff] 0.0
        %1156 = vst [vmem:[#allocation2 + $0x30] sm:$0xff] 0.0
        %1157 = vst [vmem:[#allocation2 + $0x38] sm:$0xff] 0.0
        %1158 = vst [vmem:[#allocation2 + $0x40] sm:$0xff] 0.0
        %1159 = vst [vmem:[#allocation2 + $0x48] sm:$0xff] 0.0
        %1160 = vst [vmem:[#allocation2 + $0x50] sm:$0xff] 0.0
        %1161 = vst [vmem:[#allocation2 + $0x58] sm:$0xff] 0.0
        %1162 = vst [vmem:[#allocation2 + $0x60] sm:$0xff] 0.0
        %1163 = vst [vmem:[#allocation2 + $0x68] sm:$0xff] 0.0
        %1164 = vst [vmem:[#allocation2 + $0x70] sm:$0xff] 0.0
        %1165 = vst [vmem:[#allocation2 + $0x78] sm:$0xff] 0.0
        %1166 = vst [vmem:[#allocation2 + $0x80] sm:$0xff] 0.0
        %1167 = vst [vmem:[#allocation2 + $0x88] sm:$0xff] 0.0
        %1168 = vst [vmem:[#allocation2 + $0x90] sm:$0xff] 0.0
        %1169 = vst [vmem:[#allocation2 + $0x98] sm:$0xff] 0.0
        %1170 = vst [vmem:[#allocation2 + $0xa0] sm:$0xff] 0.0
        %1171 = vst [vmem:[#allocation2 + $0xa8] sm:$0xff] 0.0
        %1172 = vst [vmem:[#allocation2 + $0xb0] sm:$0xff] 0.0
        %1173 = vst [vmem:[#allocation2 + $0xb8] sm:$0xff] 0.0
        %1174 = vst [vmem:[#allocation2 + $0xc0] sm:$0xff] 0.0
        %1175 = vst [vmem:[#allocation2 + $0xc8] sm:$0xff] 0.0
        %1176 = vst [vmem:[#allocation2 + $0xd0] sm:$0xff] 0.0
        %1177 = vst [vmem:[#allocation2 + $0xd8] sm:$0xff] 0.0
        %1178 = vst [vmem:[#allocation2 + $0xe0] sm:$0xff] 0.0
        %1179 = vst [vmem:[#allocation2 + $0xe8] sm:$0xff] 0.0
        %1180 = vst [vmem:[#allocation2 + $0xf0] sm:$0xff] 0.0
        %1181 = vst [vmem:[#allocation2 + $0xf8] sm:$0xff] 0.0
        %1182 = vst [vmem:[#allocation2 + $0x100] sm:$0xff] 0.0
        %1183 = vst [vmem:[#allocation2 + $0x108] sm:$0xff] 0.0
        %1184 = vst [vmem:[#allocation2 + $0x110] sm:$0xff] 0.0
        %1185 = vst [vmem:[#allocation2 + $0x118] sm:$0xff] 0.0
        %1186 = vst [vmem:[#allocation2 + $0x120] sm:$0xff] 0.0
        %1187 = vst [vmem:[#allocation2 + $0x128] sm:$0xff] 0.0
        %1188 = vst [vmem:[#allocation2 + $0x130] sm:$0xff] 0.0
        %1189 = vst [vmem:[#allocation2 + $0x138] sm:$0xff] 0.0
        %1190 = vst [vmem:[#allocation2 + $0x140] sm:$0xff] 0.0
        %1191 = vst [vmem:[#allocation2 + $0x148] sm:$0xff] 0.0
        %1192 = vst [vmem:[#allocation2 + $0x150] sm:$0xff] 0.0
        %1193 = vst [vmem:[#allocation2 + $0x158] sm:$0xff] 0.0
        %1194 = vst [vmem:[#allocation2 + $0x160] sm:$0xff] 0.0
        %1195 = vst [vmem:[#allocation2 + $0x168] sm:$0xff] 0.0
        %1196 = vst [vmem:[#allocation2 + $0x170] sm:$0xff] 0.0
        %1197 = vst [vmem:[#allocation2 + $0x178] sm:$0xff] 0.0
        %1198 = vst [vmem:[#allocation2 + $0x180] sm:$0xff] 0.0
        %1199 = vst [vmem:[#allocation2 + $0x188] sm:$0xff] 0.0
        %1200 = vst [vmem:[#allocation2 + $0x190] sm:$0xff] 0.0
        %1201 = vst [vmem:[#allocation2 + $0x198] sm:$0xff] 0.0
        %1202 = vst [vmem:[#allocation2 + $0x1a0] sm:$0xff] 0.0
        %1203 = vst [vmem:[#allocation2 + $0x1a8] sm:$0xff] 0.0
        %1204 = vst [vmem:[#allocation2 + $0x1b0] sm:$0xff] 0.0
        %1205 = vst [vmem:[#allocation2 + $0x1b8] sm:$0xff] 0.0
        %1206 = vst [vmem:[#allocation2 + $0x1c0] sm:$0xff] 0.0
        %1207 = vst [vmem:[#allocation2 + $0x1c8] sm:$0xff] 0.0
        %1208 = vst [vmem:[#allocation2 + $0x1d0] sm:$0xff] 0.0
        %1209 = vst [vmem:[#allocation2 + $0x1d8] sm:$0xff] 0.0
        %1210 = vst [vmem:[#allocation2 + $0x1e0] sm:$0xff] 0.0
        %1211 = vst [vmem:[#allocation2 + $0x1e8] sm:$0xff] 0.0
        %1212 = vst [vmem:[#allocation2 + $0x1f0] sm:$0xff] 0.0
        %1213 = vst [vmem:[#allocation2 + $0x1f8] sm:$0xff] 0.0
        %1214 = vst [vmem:[#allocation2 + $0x200] sm:$0xff] 0.0
        %1215 = vst [vmem:[#allocation2 + $0x208] sm:$0xff] 0.0
        %1216 = vst [vmem:[#allocation2 + $0x210] sm:$0xff] 0.0
        %1217 = vst [vmem:[#allocation2 + $0x218] sm:$0xff] 0.0
        %1218 = vst [vmem:[#allocation2 + $0x220] sm:$0xff] 0.0
        %1219 = vst [vmem:[#allocation2 + $0x228] sm:$0xff] 0.0
        %1220 = vst [vmem:[#allocation2 + $0x230] sm:$0xff] 0.0
        %1221 = vst [vmem:[#allocation2 + $0x238] sm:$0xff] 0.0
        %s1222 = scalar_lea.vmem [#allocation2], 32
        %1223 = vst [vmem:[%s1222 + $0x8] sm:$0xff] %v1118
        %1224 = vst [vmem:[%s1222 + $0x10] sm:$0xff] %v1119
        %1225 = vst [vmem:[%s1222 + $0x28] sm:$0xff] %v1120
        %1226 = vst [vmem:[%s1222 + $0x30] sm:$0xff] %v1121
        %1227 = vst [vmem:[%s1222 + $0x48] sm:$0xff] %v1122
        %1228 = vst [vmem:[%s1222 + $0x50] sm:$0xff] %v1123
        %1229 = vst [vmem:[%s1222 + $0x68] sm:$0xff] %v1124
        %1230 = vst [vmem:[%s1222 + $0x70] sm:$0xff] %v1125
        %1231 = vst [vmem:[%s1222 + $0x88] sm:$0xff] %v1126
        %1232 = vst [vmem:[%s1222 + $0x90] sm:$0xff] %v1127
        %1233 = vst [vmem:[%s1222 + $0xa8] sm:$0xff] %v1128
        %1234 = vst [vmem:[%s1222 + $0xb0] sm:$0xff] %v1129
        %1235 = vst [vmem:[%s1222 + $0xc8] sm:$0xff] %v1130
        %1236 = vst [vmem:[%s1222 + $0xd0] sm:$0xff] %v1131
        %1237 = vst [vmem:[%s1222 + $0xe8] sm:$0xff] %v1132
        %1238 = vst [vmem:[%s1222 + $0xf0] sm:$0xff] %v1133
        %1239 = vst [vmem:[%s1222 + $0x108] sm:$0xff] %v1134
        %1240 = vst [vmem:[%s1222 + $0x110] sm:$0xff] %v1135
        %1241 = vst [vmem:[%s1222 + $0x128] sm:$0xff] %v1136
        %1242 = vst [vmem:[%s1222 + $0x130] sm:$0xff] %v1137
        %1243 = vst [vmem:[%s1222 + $0x148] sm:$0xff] %v1138
        %1244 = vst [vmem:[%s1222 + $0x150] sm:$0xff] %v1139
        %1245 = vst [vmem:[%s1222 + $0x168] sm:$0xff] %v1140
        %1246 = vst [vmem:[%s1222 + $0x170] sm:$0xff] %v1141
        %1247 = vst [vmem:[%s1222 + $0x188] sm:$0xff] %v1142
        %1248 = vst [vmem:[%s1222 + $0x190] sm:$0xff] %v1143
        %1249 = vst [vmem:[%s1222 + $0x1a8] sm:$0xff] %v1144
        %1250 = vst [vmem:[%s1222 + $0x1b0] sm:$0xff] %v1145
        %1251 = vst [vmem:[%s1222 + $0x1c8] sm:$0xff] %v1146
        %1252 = vst [vmem:[%s1222 + $0x1d0] sm:$0xff] %v1147
        %1253 = vst [vmem:[%s1222 + $0x1e8] sm:$0xff] %v1148
        %1254 = vst [vmem:[%s1222 + $0x1f0] sm:$0xff] %v1149
        %v1255 = vld [vmem:[#allocation9] sm:$0xff]
        %v1256 = vld [vmem:[#allocation9 + $0x8] sm:$0x1]
        %v1257 = vld [vmem:[#allocation2 + $0x7] sm:$0xff]
        %v1258 = vld [vmem:[#allocation2 + $0xf] sm:$0xff]
        %v1259 = vld [vmem:[#allocation2 + $0x27] sm:$0xff]
        %v1260 = vld [vmem:[#allocation2 + $0x2f] sm:$0xff]
        %v1261 = vld [vmem:[#allocation2 + $0x47] sm:$0xff]
        %v1262 = vld [vmem:[#allocation2 + $0x4f] sm:$0xff]
        %v1263 = vld [vmem:[#allocation2 + $0x67] sm:$0xff]
        %v1264 = vld [vmem:[#allocation2 + $0x6f] sm:$0xff]
        %v1265 = vld [vmem:[#allocation2 + $0x87] sm:$0xff]
        %v1266 = vld [vmem:[#allocation2 + $0x8f] sm:$0xff]
        %v1267 = vld [vmem:[#allocation2 + $0xa7] sm:$0xff]
        %v1268 = vld [vmem:[#allocation2 + $0xaf] sm:$0xff]
        %v1269 = vld [vmem:[#allocation2 + $0xc7] sm:$0xff]
        %v1270 = vld [vmem:[#allocation2 + $0xcf] sm:$0xff]
        %v1271 = vld [vmem:[#allocation2 + $0xe7] sm:$0xff]
        %v1272 = vld [vmem:[#allocation2 + $0xef] sm:$0xff]
        %v1273 = vld [vmem:[#allocation2 + $0x107] sm:$0xff]
        %v1274 = vld [vmem:[#allocation2 + $0x10f] sm:$0xff]
        %v1275 = vld [vmem:[#allocation2 + $0x127] sm:$0xff]
        %v1276 = vld [vmem:[#allocation2 + $0x12f] sm:$0xff]
        %v1277 = vld [vmem:[#allocation2 + $0x147] sm:$0xff]
        %v1278 = vld [vmem:[#allocation2 + $0x14f] sm:$0xff]
        %v1279 = vld [vmem:[#allocation2 + $0x167] sm:$0xff]
        %v1280 = vld [vmem:[#allocation2 + $0x16f] sm:$0xff]
        %v1281 = vld [vmem:[#allocation2 + $0x187] sm:$0xff]
        %v1282 = vld [vmem:[#allocation2 + $0x18f] sm:$0xff]
        %v1283 = vld [vmem:[#allocation2 + $0x1a7] sm:$0xff]
        %v1284 = vld [vmem:[#allocation2 + $0x1af] sm:$0xff]
        %v1285 = vld [vmem:[#allocation2 + $0x1c7] sm:$0xff]
        %v1286 = vld [vmem:[#allocation2 + $0x1cf] sm:$0xff]
        %v1287 = vld [vmem:[#allocation2 + $0x1e7] sm:$0xff]
        %v1288 = vld [vmem:[#allocation2 + $0x1ef] sm:$0xff]
        %v1289 = vperm.slane %v1255, 0
        %v1290 = vmul.f32 %v1257, %v1289
        %v1291 = vmul.f32 %v1258, %v1289
        %v1292 = vmul.f32 %v1259, %v1289
        %v1293 = vmul.f32 %v1260, %v1289
        %v1294 = vmul.f32 %v1261, %v1289
        %v1295 = vmul.f32 %v1262, %v1289
        %v1296 = vmul.f32 %v1263, %v1289
        %v1297 = vmul.f32 %v1264, %v1289
        %v1298 = vmul.f32 %v1265, %v1289
        %v1299 = vmul.f32 %v1266, %v1289
        %v1300 = vmul.f32 %v1267, %v1289
        %v1301 = vmul.f32 %v1268, %v1289
        %v1302 = vmul.f32 %v1269, %v1289
        %v1303 = vmul.f32 %v1270, %v1289
        %v1304 = vmul.f32 %v1271, %v1289
        %v1305 = vmul.f32 %v1272, %v1289
        %v1306 = vmul.f32 %v1273, %v1289
        %v1307 = vmul.f32 %v1274, %v1289
        %v1308 = vmul.f32 %v1275, %v1289
        %v1309 = vmul.f32 %v1276, %v1289
        %v1310 = vmul.f32 %v1277, %v1289
        %v1311 = vmul.f32 %v1278, %v1289
        %v1312 = vmul.f32 %v1279, %v1289
        %v1313 = vmul.f32 %v1280, %v1289
        %v1314 = vmul.f32 %v1281, %v1289
        %v1315 = vmul.f32 %v1282, %v1289
        %v1316 = vmul.f32 %v1283, %v1289
        %v1317 = vmul.f32 %v1284, %v1289
        %v1318 = vmul.f32 %v1285, %v1289
        %v1319 = vmul.f32 %v1286, %v1289
        %v1320 = vmul.f32 %v1287, %v1289
        %v1321 = vmul.f32 %v1288, %v1289
        %v1322 = vadd.f32 %v1290, 0.0
        %v1323 = vadd.f32 %v1291, 0.0
        %v1324 = vadd.f32 %v1292, 0.0
        %v1325 = vadd.f32 %v1293, 0.0
        %v1326 = vadd.f32 %v1294, 0.0
        %v1327 = vadd.f32 %v1295, 0.0
        %v1328 = vadd.f32 %v1296, 0.0
        %v1329 = vadd.f32 %v1297, 0.0
        %v1330 = vadd.f32 %v1298, 0.0
        %v1331 = vadd.f32 %v1299, 0.0
        %v1332 = vadd.f32 %v1300, 0.0
        %v1333 = vadd.f32 %v1301, 0.0
        %v1334 = vadd.f32 %v1302, 0.0
        %v1335 = vadd.f32 %v1303, 0.0
        %v1336 = vadd.f32 %v1304, 0.0
        %v1337 = vadd.f32 %v1305, 0.0
        %v1338 = vadd.f32 %v1306, 0.0
        %v1339 = vadd.f32 %v1307, 0.0
        %v1340 = vadd.f32 %v1308, 0.0
        %v1341 = vadd.f32 %v1309, 0.0
        %v1342 = vadd.f32 %v1310, 0.0
        %v1343 = vadd.f32 %v1311, 0.0
        %v1344 = vadd.f32 %v1312, 0.0
        %v1345 = vadd.f32 %v1313, 0.0
        %v1346 = vadd.f32 %v1314, 0.0
        %v1347 = vadd.f32 %v1315, 0.0
        %v1348 = vadd.f32 %v1316, 0.0
        %v1349 = vadd.f32 %v1317, 0.0
        %v1350 = vadd.f32 %v1318, 0.0
        %v1351 = vadd.f32 %v1319, 0.0
        %v1352 = vadd.f32 %v1320, 0.0
        %v1353 = vadd.f32 %v1321, 0.0
        %v1354 = vld [vmem:[#allocation2 + $0x8] sm:$0xff]
        %v1355 = vld [vmem:[#allocation2 + $0x10] sm:$0xff]
        %v1356 = vld [vmem:[#allocation2 + $0x28] sm:$0xff]
        %v1357 = vld [vmem:[#allocation2 + $0x30] sm:$0xff]
        %v1358 = vld [vmem:[#allocation2 + $0x48] sm:$0xff]
        %v1359 = vld [vmem:[#allocation2 + $0x50] sm:$0xff]
        %v1360 = vld [vmem:[#allocation2 + $0x68] sm:$0xff]
        %v1361 = vld [vmem:[#allocation2 + $0x70] sm:$0xff]
        %v1362 = vld [vmem:[#allocation2 + $0x88] sm:$0xff]
        %v1363 = vld [vmem:[#allocation2 + $0x90] sm:$0xff]
        %v1364 = vld [vmem:[#allocation2 + $0xa8] sm:$0xff]
        %v1365 = vld [vmem:[#allocation2 + $0xb0] sm:$0xff]
        %v1366 = vld [vmem:[#allocation2 + $0xc8] sm:$0xff]
        %v1367 = vld [vmem:[#allocation2 + $0xd0] sm:$0xff]
        %v1368 = vld [vmem:[#allocation2 + $0xe8] sm:$0xff]
        %v1369 = vld [vmem:[#allocation2 + $0xf0] sm:$0xff]
        %v1370 = vld [vmem:[#allocation2 + $0x108] sm:$0xff]
        %v1371 = vld [vmem:[#allocation2 + $0x110] sm:$0xff]
        %v1372 = vld [vmem:[#allocation2 + $0x128] sm:$0xff]
        %v1373 = vld [vmem:[#allocation2 + $0x130] sm:$0xff]
        %v1374 = vld [vmem:[#allocation2 + $0x148] sm:$0xff]
        %v1375 = vld [vmem:[#allocation2 + $0x150] sm:$0xff]
        %v1376 = vld [vmem:[#allocation2 + $0x168] sm:$0xff]
        %v1377 = vld [vmem:[#allocation2 + $0x170] sm:$0xff]
        %v1378 = vld [vmem:[#allocation2 + $0x188] sm:$0xff]
        %v1379 = vld [vmem:[#allocation2 + $0x190] sm:$0xff]
        %v1380 = vld [vmem:[#allocation2 + $0x1a8] sm:$0xff]
        %v1381 = vld [vmem:[#allocation2 + $0x1b0] sm:$0xff]
        %v1382 = vld [vmem:[#allocation2 + $0x1c8] sm:$0xff]
        %v1383 = vld [vmem:[#allocation2 + $0x1d0] sm:$0xff]
        %v1384 = vld [vmem:[#allocation2 + $0x1e8] sm:$0xff]
        %v1385 = vld [vmem:[#allocation2 + $0x1f0] sm:$0xff]
        %v1386 = vperm.slane %v1255, 1
        %v1387 = vmul.f32 %v1354, %v1386
        %v1388 = vmul.f32 %v1355, %v1386
        %v1389 = vmul.f32 %v1356, %v1386
        %v1390 = vmul.f32 %v1357, %v1386
        %v1391 = vmul.f32 %v1358, %v1386
        %v1392 = vmul.f32 %v1359, %v1386
        %v1393 = vmul.f32 %v1360, %v1386
        %v1394 = vmul.f32 %v1361, %v1386
        %v1395 = vmul.f32 %v1362, %v1386
        %v1396 = vmul.f32 %v1363, %v1386
        %v1397 = vmul.f32 %v1364, %v1386
        %v1398 = vmul.f32 %v1365, %v1386
        %v1399 = vmul.f32 %v1366, %v1386
        %v1400 = vmul.f32 %v1367, %v1386
        %v1401 = vmul.f32 %v1368, %v1386
        %v1402 = vmul.f32 %v1369, %v1386
        %v1403 = vmul.f32 %v1370, %v1386
        %v1404 = vmul.f32 %v1371, %v1386
        %v1405 = vmul.f32 %v1372, %v1386
        %v1406 = vmul.f32 %v1373, %v1386
        %v1407 = vmul.f32 %v1374, %v1386
        %v1408 = vmul.f32 %v1375, %v1386
        %v1409 = vmul.f32 %v1376, %v1386
        %v1410 = vmul.f32 %v1377, %v1386
        %v1411 = vmul.f32 %v1378, %v1386
        %v1412 = vmul.f32 %v1379, %v1386
        %v1413 = vmul.f32 %v1380, %v1386
        %v1414 = vmul.f32 %v1381, %v1386
        %v1415 = vmul.f32 %v1382, %v1386
        %v1416 = vmul.f32 %v1383, %v1386
        %v1417 = vmul.f32 %v1384, %v1386
        %v1418 = vmul.f32 %v1385, %v1386
        %v1419 = vadd.f32 %v1322, %v1387
        %v1420 = vadd.f32 %v1323, %v1388
        %v1421 = vadd.f32 %v1324, %v1389
        %v1422 = vadd.f32 %v1325, %v1390
        %v1423 = vadd.f32 %v1326, %v1391
        %v1424 = vadd.f32 %v1327, %v1392
        %v1425 = vadd.f32 %v1328, %v1393
        %v1426 = vadd.f32 %v1329, %v1394
        %v1427 = vadd.f32 %v1330, %v1395
        %v1428 = vadd.f32 %v1331, %v1396
        %v1429 = vadd.f32 %v1332, %v1397
        %v1430 = vadd.f32 %v1333, %v1398
        %v1431 = vadd.f32 %v1334, %v1399
        %v1432 = vadd.f32 %v1335, %v1400
        %v1433 = vadd.f32 %v1336, %v1401
        %v1434 = vadd.f32 %v1337, %v1402
        %v1435 = vadd.f32 %v1338, %v1403
        %v1436 = vadd.f32 %v1339, %v1404
        %v1437 = vadd.f32 %v1340, %v1405
        %v1438 = vadd.f32 %v1341, %v1406
        %v1439 = vadd.f32 %v1342, %v1407
        %v1440 = vadd.f32 %v1343, %v1408
        %v1441 = vadd.f32 %v1344, %v1409
        %v1442 = vadd.f32 %v1345, %v1410
        %v1443 = vadd.f32 %v1346, %v1411
        %v1444 = vadd.f32 %v1347, %v1412
        %v1445 = vadd.f32 %v1348, %v1413
        %v1446 = vadd.f32 %v1349, %v1414
        %v1447 = vadd.f32 %v1350, %v1415
        %v1448 = vadd.f32 %v1351, %v1416
        %v1449 = vadd.f32 %v1352, %v1417
        %v1450 = vadd.f32 %v1353, %v1418
        %v1451 = vld [vmem:[#allocation2 + $0x9] sm:$0xff]
        %v1452 = vld [vmem:[#allocation2 + $0x11] sm:$0xff]
        %v1453 = vld [vmem:[#allocation2 + $0x29] sm:$0xff]
        %v1454 = vld [vmem:[#allocation2 + $0x31] sm:$0xff]
        %v1455 = vld [vmem:[#allocation2 + $0x49] sm:$0xff]
        %v1456 = vld [vmem:[#allocation2 + $0x51] sm:$0xff]
        %v1457 = vld [vmem:[#allocation2 + $0x69] sm:$0xff]
        %v1458 = vld [vmem:[#allocation2 + $0x71] sm:$0xff]
        %v1459 = vld [vmem:[#allocation2 + $0x89] sm:$0xff]
        %v1460 = vld [vmem:[#allocation2 + $0x91] sm:$0xff]
        %v1461 = vld [vmem:[#allocation2 + $0xa9] sm:$0xff]
        %v1462 = vld [vmem:[#allocation2 + $0xb1] sm:$0xff]
        %v1463 = vld [vmem:[#allocation2 + $0xc9] sm:$0xff]
        %v1464 = vld [vmem:[#allocation2 + $0xd1] sm:$0xff]
        %v1465 = vld [vmem:[#allocation2 + $0xe9] sm:$0xff]
        %v1466 = vld [vmem:[#allocation2 + $0xf1] sm:$0xff]
        %v1467 = vld [vmem:[#allocation2 + $0x109] sm:$0xff]
        %v1468 = vld [vmem:[#allocation2 + $0x111] sm:$0xff]
        %v1469 = vld [vmem:[#allocation2 + $0x129] sm:$0xff]
        %v1470 = vld [vmem:[#allocation2 + $0x131] sm:$0xff]
        %v1471 = vld [vmem:[#allocation2 + $0x149] sm:$0xff]
        %v1472 = vld [vmem:[#allocation2 + $0x151] sm:$0xff]
        %v1473 = vld [vmem:[#allocation2 + $0x169] sm:$0xff]
        %v1474 = vld [vmem:[#allocation2 + $0x171] sm:$0xff]
        %v1475 = vld [vmem:[#allocation2 + $0x189] sm:$0xff]
        %v1476 = vld [vmem:[#allocation2 + $0x191] sm:$0xff]
        %v1477 = vld [vmem:[#allocation2 + $0x1a9] sm:$0xff]
        %v1478 = vld [vmem:[#allocation2 + $0x1b1] sm:$0xff]
        %v1479 = vld [vmem:[#allocation2 + $0x1c9] sm:$0xff]
        %v1480 = vld [vmem:[#allocation2 + $0x1d1] sm:$0xff]
        %v1481 = vld [vmem:[#allocation2 + $0x1e9] sm:$0xff]
        %v1482 = vld [vmem:[#allocation2 + $0x1f1] sm:$0xff]
        %v1483 = vperm.slane %v1255, 2
        %v1484 = vmul.f32 %v1451, %v1483
        %v1485 = vmul.f32 %v1452, %v1483
        %v1486 = vmul.f32 %v1453, %v1483
        %v1487 = vmul.f32 %v1454, %v1483
        %v1488 = vmul.f32 %v1455, %v1483
        %v1489 = vmul.f32 %v1456, %v1483
        %v1490 = vmul.f32 %v1457, %v1483
        %v1491 = vmul.f32 %v1458, %v1483
        %v1492 = vmul.f32 %v1459, %v1483
        %v1493 = vmul.f32 %v1460, %v1483
        %v1494 = vmul.f32 %v1461, %v1483
        %v1495 = vmul.f32 %v1462, %v1483
        %v1496 = vmul.f32 %v1463, %v1483
        %v1497 = vmul.f32 %v1464, %v1483
        %v1498 = vmul.f32 %v1465, %v1483
        %v1499 = vmul.f32 %v1466, %v1483
        %v1500 = vmul.f32 %v1467, %v1483
        %v1501 = vmul.f32 %v1468, %v1483
        %v1502 = vmul.f32 %v1469, %v1483
        %v1503 = vmul.f32 %v1470, %v1483
        %v1504 = vmul.f32 %v1471, %v1483
        %v1505 = vmul.f32 %v1472, %v1483
        %v1506 = vmul.f32 %v1473, %v1483
        %v1507 = vmul.f32 %v1474, %v1483
        %v1508 = vmul.f32 %v1475, %v1483
        %v1509 = vmul.f32 %v1476, %v1483
        %v1510 = vmul.f32 %v1477, %v1483
        %v1511 = vmul.f32 %v1478, %v1483
        %v1512 = vmul.f32 %v1479, %v1483
        %v1513 = vmul.f32 %v1480, %v1483
        %v1514 = vmul.f32 %v1481, %v1483
        %v1515 = vmul.f32 %v1482, %v1483
        %v1516 = vadd.f32 %v1419, %v1484
        %v1517 = vadd.f32 %v1420, %v1485
        %v1518 = vadd.f32 %v1421, %v1486
        %v1519 = vadd.f32 %v1422, %v1487
        %v1520 = vadd.f32 %v1423, %v1488
        %v1521 = vadd.f32 %v1424, %v1489
        %v1522 = vadd.f32 %v1425, %v1490
        %v1523 = vadd.f32 %v1426, %v1491
        %v1524 = vadd.f32 %v1427, %v1492
        %v1525 = vadd.f32 %v1428, %v1493
        %v1526 = vadd.f32 %v1429, %v1494
        %v1527 = vadd.f32 %v1430, %v1495
        %v1528 = vadd.f32 %v1431, %v1496
        %v1529 = vadd.f32 %v1432, %v1497
        %v1530 = vadd.f32 %v1433, %v1498
        %v1531 = vadd.f32 %v1434, %v1499
        %v1532 = vadd.f32 %v1435, %v1500
        %v1533 = vadd.f32 %v1436, %v1501
        %v1534 = vadd.f32 %v1437, %v1502
        %v1535 = vadd.f32 %v1438, %v1503
        %v1536 = vadd.f32 %v1439, %v1504
        %v1537 = vadd.f32 %v1440, %v1505
        %v1538 = vadd.f32 %v1441, %v1506
        %v1539 = vadd.f32 %v1442, %v1507
        %v1540 = vadd.f32 %v1443, %v1508
        %v1541 = vadd.f32 %v1444, %v1509
        %v1542 = vadd.f32 %v1445, %v1510
        %v1543 = vadd.f32 %v1446, %v1511
        %v1544 = vadd.f32 %v1447, %v1512
        %v1545 = vadd.f32 %v1448, %v1513
        %v1546 = vadd.f32 %v1449, %v1514
        %v1547 = vadd.f32 %v1450, %v1515
        %v1548 = vld [vmem:[%s1222 + $0x7] sm:$0xff]
        %v1549 = vld [vmem:[%s1222 + $0xf] sm:$0xff]
        %v1550 = vld [vmem:[%s1222 + $0x27] sm:$0xff]
        %v1551 = vld [vmem:[%s1222 + $0x2f] sm:$0xff]
        %v1552 = vld [vmem:[%s1222 + $0x47] sm:$0xff]
        %v1553 = vld [vmem:[%s1222 + $0x4f] sm:$0xff]
        %v1554 = vld [vmem:[%s1222 + $0x67] sm:$0xff]
        %v1555 = vld [vmem:[%s1222 + $0x6f] sm:$0xff]
        %v1556 = vld [vmem:[%s1222 + $0x87] sm:$0xff]
        %v1557 = vld [vmem:[%s1222 + $0x8f] sm:$0xff]
        %v1558 = vld [vmem:[%s1222 + $0xa7] sm:$0xff]
        %v1559 = vld [vmem:[%s1222 + $0xaf] sm:$0xff]
        %v1560 = vld [vmem:[%s1222 + $0xc7] sm:$0xff]
        %v1561 = vld [vmem:[%s1222 + $0xcf] sm:$0xff]
        %v1562 = vld [vmem:[%s1222 + $0xe7] sm:$0xff]
        %v1563 = vld [vmem:[%s1222 + $0xef] sm:$0xff]
        %v1564 = vld [vmem:[%s1222 + $0x107] sm:$0xff]
        %v1565 = vld [vmem:[%s1222 + $0x10f] sm:$0xff]
        %v1566 = vld [vmem:[%s1222 + $0x127] sm:$0xff]
        %v1567 = vld [vmem:[%s1222 + $0x12f] sm:$0xff]
        %v1568 = vld [vmem:[%s1222 + $0x147] sm:$0xff]
        %v1569 = vld [vmem:[%s1222 + $0x14f] sm:$0xff]
        %v1570 = vld [vmem:[%s1222 + $0x167] sm:$0xff]
        %v1571 = vld [vmem:[%s1222 + $0x16f] sm:$0xff]
        %v1572 = vld [vmem:[%s1222 + $0x187] sm:$0xff]
        %v1573 = vld [vmem:[%s1222 + $0x18f] sm:$0xff]
        %v1574 = vld [vmem:[%s1222 + $0x1a7] sm:$0xff]
        %v1575 = vld [vmem:[%s1222 + $0x1af] sm:$0xff]
        %v1576 = vld [vmem:[%s1222 + $0x1c7] sm:$0xff]
        %v1577 = vld [vmem:[%s1222 + $0x1cf] sm:$0xff]
        %v1578 = vld [vmem:[%s1222 + $0x1e7] sm:$0xff]
        %v1579 = vld [vmem:[%s1222 + $0x1ef] sm:$0xff]
        %v1580 = vperm.slane %v1255, 3
        %v1581 = vmul.f32 %v1548, %v1580
        %v1582 = vmul.f32 %v1549, %v1580
        %v1583 = vmul.f32 %v1550, %v1580
        %v1584 = vmul.f32 %v1551, %v1580
        %v1585 = vmul.f32 %v1552, %v1580
        %v1586 = vmul.f32 %v1553, %v1580
        %v1587 = vmul.f32 %v1554, %v1580
        %v1588 = vmul.f32 %v1555, %v1580
        %v1589 = vmul.f32 %v1556, %v1580
        %v1590 = vmul.f32 %v1557, %v1580
        %v1591 = vmul.f32 %v1558, %v1580
        %v1592 = vmul.f32 %v1559, %v1580
        %v1593 = vmul.f32 %v1560, %v1580
        %v1594 = vmul.f32 %v1561, %v1580
        %v1595 = vmul.f32 %v1562, %v1580
        %v1596 = vmul.f32 %v1563, %v1580
        %v1597 = vmul.f32 %v1564, %v1580
        %v1598 = vmul.f32 %v1565, %v1580
        %v1599 = vmul.f32 %v1566, %v1580
        %v1600 = vmul.f32 %v1567, %v1580
        %v1601 = vmul.f32 %v1568, %v1580
        %v1602 = vmul.f32 %v1569, %v1580
        %v1603 = vmul.f32 %v1570, %v1580
        %v1604 = vmul.f32 %v1571, %v1580
        %v1605 = vmul.f32 %v1572, %v1580
        %v1606 = vmul.f32 %v1573, %v1580
        %v1607 = vmul.f32 %v1574, %v1580
        %v1608 = vmul.f32 %v1575, %v1580
        %v1609 = vmul.f32 %v1576, %v1580
        %v1610 = vmul.f32 %v1577, %v1580
        %v1611 = vmul.f32 %v1578, %v1580
        %v1612 = vmul.f32 %v1579, %v1580
        %v1613 = vadd.f32 %v1516, %v1581
        %v1614 = vadd.f32 %v1517, %v1582
        %v1615 = vadd.f32 %v1518, %v1583
        %v1616 = vadd.f32 %v1519, %v1584
        %v1617 = vadd.f32 %v1520, %v1585
        %v1618 = vadd.f32 %v1521, %v1586
        %v1619 = vadd.f32 %v1522, %v1587
        %v1620 = vadd.f32 %v1523, %v1588
        %v1621 = vadd.f32 %v1524, %v1589
        %v1622 = vadd.f32 %v1525, %v1590
        %v1623 = vadd.f32 %v1526, %v1591
        %v1624 = vadd.f32 %v1527, %v1592
        %v1625 = vadd.f32 %v1528, %v1593
        %v1626 = vadd.f32 %v1529, %v1594
        %v1627 = vadd.f32 %v1530, %v1595
        %v1628 = vadd.f32 %v1531, %v1596
        %v1629 = vadd.f32 %v1532, %v1597
        %v1630 = vadd.f32 %v1533, %v1598
        %v1631 = vadd.f32 %v1534, %v1599
        %v1632 = vadd.f32 %v1535, %v1600
        %v1633 = vadd.f32 %v1536, %v1601
        %v1634 = vadd.f32 %v1537, %v1602
        %v1635 = vadd.f32 %v1538, %v1603
        %v1636 = vadd.f32 %v1539, %v1604
        %v1637 = vadd.f32 %v1540, %v1605
        %v1638 = vadd.f32 %v1541, %v1606
        %v1639 = vadd.f32 %v1542, %v1607
        %v1640 = vadd.f32 %v1543, %v1608
        %v1641 = vadd.f32 %v1544, %v1609
        %v1642 = vadd.f32 %v1545, %v1610
        %v1643 = vadd.f32 %v1546, %v1611
        %v1644 = vadd.f32 %v1547, %v1612
        %v1645 = vld [vmem:[%s1222 + $0x8] sm:$0xff]
        %v1646 = vld [vmem:[%s1222 + $0x10] sm:$0xff]
        %v1647 = vld [vmem:[%s1222 + $0x28] sm:$0xff]
        %v1648 = vld [vmem:[%s1222 + $0x30] sm:$0xff]
        %v1649 = vld [vmem:[%s1222 + $0x48] sm:$0xff]
        %v1650 = vld [vmem:[%s1222 + $0x50] sm:$0xff]
        %v1651 = vld [vmem:[%s1222 + $0x68] sm:$0xff]
        %v1652 = vld [vmem:[%s1222 + $0x70] sm:$0xff]
        %v1653 = vld [vmem:[%s1222 + $0x88] sm:$0xff]
        %v1654 = vld [vmem:[%s1222 + $0x90] sm:$0xff]
        %v1655 = vld [vmem:[%s1222 + $0xa8] sm:$0xff]
        %v1656 = vld [vmem:[%s1222 + $0xb0] sm:$0xff]
        %v1657 = vld [vmem:[%s1222 + $0xc8] sm:$0xff]
        %v1658 = vld [vmem:[%s1222 + $0xd0] sm:$0xff]
        %v1659 = vld [vmem:[%s1222 + $0xe8] sm:$0xff]
        %v1660 = vld [vmem:[%s1222 + $0xf0] sm:$0xff]
        %v1661 = vld [vmem:[%s1222 + $0x108] sm:$0xff]
        %v1662 = vld [vmem:[%s1222 + $0x110] sm:$0xff]
        %v1663 = vld [vmem:[%s1222 + $0x128] sm:$0xff]
        %v1664 = vld [vmem:[%s1222 + $0x130] sm:$0xff]
        %v1665 = vld [vmem:[%s1222 + $0x148] sm:$0xff]
        %v1666 = vld [vmem:[%s1222 + $0x150] sm:$0xff]
        %v1667 = vld [vmem:[%s1222 + $0x168] sm:$0xff]
        %v1668 = vld [vmem:[%s1222 + $0x170] sm:$0xff]
        %v1669 = vld [vmem:[%s1222 + $0x188] sm:$0xff]
        %v1670 = vld [vmem:[%s1222 + $0x190] sm:$0xff]
        %v1671 = vld [vmem:[%s1222 + $0x1a8] sm:$0xff]
        %v1672 = vld [vmem:[%s1222 + $0x1b0] sm:$0xff]
        %v1673 = vld [vmem:[%s1222 + $0x1c8] sm:$0xff]
        %v1674 = vld [vmem:[%s1222 + $0x1d0] sm:$0xff]
        %v1675 = vld [vmem:[%s1222 + $0x1e8] sm:$0xff]
        %v1676 = vld [vmem:[%s1222 + $0x1f0] sm:$0xff]
        %v1677 = vperm.slane %v1255, 4
        %v1678 = vmul.f32 %v1645, %v1677
        %v1679 = vmul.f32 %v1646, %v1677
        %v1680 = vmul.f32 %v1647, %v1677
        %v1681 = vmul.f32 %v1648, %v1677
        %v1682 = vmul.f32 %v1649, %v1677
        %v1683 = vmul.f32 %v1650, %v1677
        %v1684 = vmul.f32 %v1651, %v1677
        %v1685 = vmul.f32 %v1652, %v1677
        %v1686 = vmul.f32 %v1653, %v1677
        %v1687 = vmul.f32 %v1654, %v1677
        %v1688 = vmul.f32 %v1655, %v1677
        %v1689 = vmul.f32 %v1656, %v1677
        %v1690 = vmul.f32 %v1657, %v1677
        %v1691 = vmul.f32 %v1658, %v1677
        %v1692 = vmul.f32 %v1659, %v1677
        %v1693 = vmul.f32 %v1660, %v1677
        %v1694 = vmul.f32 %v1661, %v1677
        %v1695 = vmul.f32 %v1662, %v1677
        %v1696 = vmul.f32 %v1663, %v1677
        %v1697 = vmul.f32 %v1664, %v1677
        %v1698 = vmul.f32 %v1665, %v1677
        %v1699 = vmul.f32 %v1666, %v1677
        %v1700 = vmul.f32 %v1667, %v1677
        %v1701 = vmul.f32 %v1668, %v1677
        %v1702 = vmul.f32 %v1669, %v1677
        %v1703 = vmul.f32 %v1670, %v1677
        %v1704 = vmul.f32 %v1671, %v1677
        %v1705 = vmul.f32 %v1672, %v1677
        %v1706 = vmul.f32 %v1673, %v1677
        %v1707 = vmul.f32 %v1674, %v1677
        %v1708 = vmul.f32 %v1675, %v1677
        %v1709 = vmul.f32 %v1676, %v1677
        %v1710 = vadd.f32 %v1613, %v1678
        %v1711 = vadd.f32 %v1614, %v1679
        %v1712 = vadd.f32 %v1615, %v1680
        %v1713 = vadd.f32 %v1616, %v1681
        %v1714 = vadd.f32 %v1617, %v1682
        %v1715 = vadd.f32 %v1618, %v1683
        %v1716 = vadd.f32 %v1619, %v1684
        %v1717 = vadd.f32 %v1620, %v1685
        %v1718 = vadd.f32 %v1621, %v1686
        %v1719 = vadd.f32 %v1622, %v1687
        %v1720 = vadd.f32 %v1623, %v1688
        %v1721 = vadd.f32 %v1624, %v1689
        %v1722 = vadd.f32 %v1625, %v1690
        %v1723 = vadd.f32 %v1626, %v1691
        %v1724 = vadd.f32 %v1627, %v1692
        %v1725 = vadd.f32 %v1628, %v1693
        %v1726 = vadd.f32 %v1629, %v1694
        %v1727 = vadd.f32 %v1630, %v1695
        %v1728 = vadd.f32 %v1631, %v1696
        %v1729 = vadd.f32 %v1632, %v1697
        %v1730 = vadd.f32 %v1633, %v1698
        %v1731 = vadd.f32 %v1634, %v1699
        %v1732 = vadd.f32 %v1635, %v1700
        %v1733 = vadd.f32 %v1636, %v1701
        %v1734 = vadd.f32 %v1637, %v1702
        %v1735 = vadd.f32 %v1638, %v1703
        %v1736 = vadd.f32 %v1639, %v1704
        %v1737 = vadd.f32 %v1640, %v1705
        %v1738 = vadd.f32 %v1641, %v1706
        %v1739 = vadd.f32 %v1642, %v1707
        %v1740 = vadd.f32 %v1643, %v1708
        %v1741 = vadd.f32 %v1644, %v1709
        %v1742 = vld [vmem:[%s1222 + $0x9] sm:$0xff]
        %v1743 = vld [vmem:[%s1222 + $0x11] sm:$0xff]
        %v1744 = vld [vmem:[%s1222 + $0x29] sm:$0xff]
        %v1745 = vld [vmem:[%s1222 + $0x31] sm:$0xff]
        %v1746 = vld [vmem:[%s1222 + $0x49] sm:$0xff]
        %v1747 = vld [vmem:[%s1222 + $0x51] sm:$0xff]
        %v1748 = vld [vmem:[%s1222 + $0x69] sm:$0xff]
        %v1749 = vld [vmem:[%s1222 + $0x71] sm:$0xff]
        %v1750 = vld [vmem:[%s1222 + $0x89] sm:$0xff]
        %v1751 = vld [vmem:[%s1222 + $0x91] sm:$0xff]
        %v1752 = vld [vmem:[%s1222 + $0xa9] sm:$0xff]
        %v1753 = vld [vmem:[%s1222 + $0xb1] sm:$0xff]
        %v1754 = vld [vmem:[%s1222 + $0xc9] sm:$0xff]
        %v1755 = vld [vmem:[%s1222 + $0xd1] sm:$0xff]
        %v1756 = vld [vmem:[%s1222 + $0xe9] sm:$0xff]
        %v1757 = vld [vmem:[%s1222 + $0xf1] sm:$0xff]
        %v1758 = vld [vmem:[%s1222 + $0x109] sm:$0xff]
        %v1759 = vld [vmem:[%s1222 + $0x111] sm:$0xff]
        %v1760 = vld [vmem:[%s1222 + $0x129] sm:$0xff]
        %v1761 = vld [vmem:[%s1222 + $0x131] sm:$0xff]
        %v1762 = vld [vmem:[%s1222 + $0x149] sm:$0xff]
        %v1763 = vld [vmem:[%s1222 + $0x151] sm:$0xff]
        %v1764 = vld [vmem:[%s1222 + $0x169] sm:$0xff]
        %v1765 = vld [vmem:[%s1222 + $0x171] sm:$0xff]
        %v1766 = vld [vmem:[%s1222 + $0x189] sm:$0xff]
        %v1767 = vld [vmem:[%s1222 + $0x191] sm:$0xff]
        %v1768 = vld [vmem:[%s1222 + $0x1a9] sm:$0xff]
        %v1769 = vld [vmem:[%s1222 + $0x1b1] sm:$0xff]
        %v1770 = vld [vmem:[%s1222 + $0x1c9] sm:$0xff]
        %v1771 = vld [vmem:[%s1222 + $0x1d1] sm:$0xff]
        %v1772 = vld [vmem:[%s1222 + $0x1e9] sm:$0xff]
        %v1773 = vld [vmem:[%s1222 + $0x1f1] sm:$0xff]
        %v1774 = vperm.slane %v1255, 5
        %v1775 = vmul.f32 %v1742, %v1774
        %v1776 = vmul.f32 %v1743, %v1774
        %v1777 = vmul.f32 %v1744, %v1774
        %v1778 = vmul.f32 %v1745, %v1774
        %v1779 = vmul.f32 %v1746, %v1774
        %v1780 = vmul.f32 %v1747, %v1774
        %v1781 = vmul.f32 %v1748, %v1774
        %v1782 = vmul.f32 %v1749, %v1774
        %v1783 = vmul.f32 %v1750, %v1774
        %v1784 = vmul.f32 %v1751, %v1774
        %v1785 = vmul.f32 %v1752, %v1774
        %v1786 = vmul.f32 %v1753, %v1774
        %v1787 = vmul.f32 %v1754, %v1774
        %v1788 = vmul.f32 %v1755, %v1774
        %v1789 = vmul.f32 %v1756, %v1774
        %v1790 = vmul.f32 %v1757, %v1774
        %v1791 = vmul.f32 %v1758, %v1774
        %v1792 = vmul.f32 %v1759, %v1774
        %v1793 = vmul.f32 %v1760, %v1774
        %v1794 = vmul.f32 %v1761, %v1774
        %v1795 = vmul.f32 %v1762, %v1774
        %v1796 = vmul.f32 %v1763, %v1774
        %v1797 = vmul.f32 %v1764, %v1774
        %v1798 = vmul.f32 %v1765, %v1774
        %v1799 = vmul.f32 %v1766, %v1774
        %v1800 = vmul.f32 %v1767, %v1774
        %v1801 = vmul.f32 %v1768, %v1774
        %v1802 = vmul.f32 %v1769, %v1774
        %v1803 = vmul.f32 %v1770, %v1774
        %v1804 = vmul.f32 %v1771, %v1774
        %v1805 = vmul.f32 %v1772, %v1774
        %v1806 = vmul.f32 %v1773, %v1774
        %v1807 = vadd.f32 %v1710, %v1775
        %v1808 = vadd.f32 %v1711, %v1776
        %v1809 = vadd.f32 %v1712, %v1777
        %v1810 = vadd.f32 %v1713, %v1778
        %v1811 = vadd.f32 %v1714, %v1779
        %v1812 = vadd.f32 %v1715, %v1780
        %v1813 = vadd.f32 %v1716, %v1781
        %v1814 = vadd.f32 %v1717, %v1782
        %v1815 = vadd.f32 %v1718, %v1783
        %v1816 = vadd.f32 %v1719, %v1784
        %v1817 = vadd.f32 %v1720, %v1785
        %v1818 = vadd.f32 %v1721, %v1786
        %v1819 = vadd.f32 %v1722, %v1787
        %v1820 = vadd.f32 %v1723, %v1788
        %v1821 = vadd.f32 %v1724, %v1789
        %v1822 = vadd.f32 %v1725, %v1790
        %v1823 = vadd.f32 %v1726, %v1791
        %v1824 = vadd.f32 %v1727, %v1792
        %v1825 = vadd.f32 %v1728, %v1793
        %v1826 = vadd.f32 %v1729, %v1794
        %v1827 = vadd.f32 %v1730, %v1795
        %v1828 = vadd.f32 %v1731, %v1796
        %v1829 = vadd.f32 %v1732, %v1797
        %v1830 = vadd.f32 %v1733, %v1798
        %v1831 = vadd.f32 %v1734, %v1799
        %v1832 = vadd.f32 %v1735, %v1800
        %v1833 = vadd.f32 %v1736, %v1801
        %v1834 = vadd.f32 %v1737, %v1802
        %v1835 = vadd.f32 %v1738, %v1803
        %v1836 = vadd.f32 %v1739, %v1804
        %v1837 = vadd.f32 %v1740, %v1805
        %v1838 = vadd.f32 %v1741, %v1806
        %s1839 = scalar_lea.vmem [#allocation2], 64
        %v1840 = vld [vmem:[%s1839 + $0x7] sm:$0xff]
        %v1841 = vld [vmem:[%s1839 + $0xf] sm:$0xff]
        %v1842 = vld [vmem:[%s1839 + $0x27] sm:$0xff]
        %v1843 = vld [vmem:[%s1839 + $0x2f] sm:$0xff]
        %v1844 = vld [vmem:[%s1839 + $0x47] sm:$0xff]
        %v1845 = vld [vmem:[%s1839 + $0x4f] sm:$0xff]
        %v1846 = vld [vmem:[%s1839 + $0x67] sm:$0xff]
        %v1847 = vld [vmem:[%s1839 + $0x6f] sm:$0xff]
        %v1848 = vld [vmem:[%s1839 + $0x87] sm:$0xff]
        %v1849 = vld [vmem:[%s1839 + $0x8f] sm:$0xff]
        %v1850 = vld [vmem:[%s1839 + $0xa7] sm:$0xff]
        %v1851 = vld [vmem:[%s1839 + $0xaf] sm:$0xff]
        %v1852 = vld [vmem:[%s1839 + $0xc7] sm:$0xff]
        %v1853 = vld [vmem:[%s1839 + $0xcf] sm:$0xff]
        %v1854 = vld [vmem:[%s1839 + $0xe7] sm:$0xff]
        %v1855 = vld [vmem:[%s1839 + $0xef] sm:$0xff]
        %v1856 = vld [vmem:[%s1839 + $0x107] sm:$0xff]
        %v1857 = vld [vmem:[%s1839 + $0x10f] sm:$0xff]
        %v1858 = vld [vmem:[%s1839 + $0x127] sm:$0xff]
        %v1859 = vld [vmem:[%s1839 + $0x12f] sm:$0xff]
        %v1860 = vld [vmem:[%s1839 + $0x147] sm:$0xff]
        %v1861 = vld [vmem:[%s1839 + $0x14f] sm:$0xff]
        %v1862 = vld [vmem:[%s1839 + $0x167] sm:$0xff]
        %v1863 = vld [vmem:[%s1839 + $0x16f] sm:$0xff]
        %v1864 = vld [vmem:[%s1839 + $0x187] sm:$0xff]
        %v1865 = vld [vmem:[%s1839 + $0x18f] sm:$0xff]
        %v1866 = vld [vmem:[%s1839 + $0x1a7] sm:$0xff]
        %v1867 = vld [vmem:[%s1839 + $0x1af] sm:$0xff]
        %v1868 = vld [vmem:[%s1839 + $0x1c7] sm:$0xff]
        %v1869 = vld [vmem:[%s1839 + $0x1cf] sm:$0xff]
        %v1870 = vld [vmem:[%s1839 + $0x1e7] sm:$0xff]
        %v1871 = vld [vmem:[%s1839 + $0x1ef] sm:$0xff]
        %v1872 = vperm.slane %v1255, 6
        %v1873 = vmul.f32 %v1840, %v1872
        %v1874 = vmul.f32 %v1841, %v1872
        %v1875 = vmul.f32 %v1842, %v1872
        %v1876 = vmul.f32 %v1843, %v1872
        %v1877 = vmul.f32 %v1844, %v1872
        %v1878 = vmul.f32 %v1845, %v1872
        %v1879 = vmul.f32 %v1846, %v1872
        %v1880 = vmul.f32 %v1847, %v1872
        %v1881 = vmul.f32 %v1848, %v1872
        %v1882 = vmul.f32 %v1849, %v1872
        %v1883 = vmul.f32 %v1850, %v1872
        %v1884 = vmul.f32 %v1851, %v1872
        %v1885 = vmul.f32 %v1852, %v1872
        %v1886 = vmul.f32 %v1853, %v1872
        %v1887 = vmul.f32 %v1854, %v1872
        %v1888 = vmul.f32 %v1855, %v1872
        %v1889 = vmul.f32 %v1856, %v1872
        %v1890 = vmul.f32 %v1857, %v1872
        %v1891 = vmul.f32 %v1858, %v1872
        %v1892 = vmul.f32 %v1859, %v1872
        %v1893 = vmul.f32 %v1860, %v1872
        %v1894 = vmul.f32 %v1861, %v1872
        %v1895 = vmul.f32 %v1862, %v1872
        %v1896 = vmul.f32 %v1863, %v1872
        %v1897 = vmul.f32 %v1864, %v1872
        %v1898 = vmul.f32 %v1865, %v1872
        %v1899 = vmul.f32 %v1866, %v1872
        %v1900 = vmul.f32 %v1867, %v1872
        %v1901 = vmul.f32 %v1868, %v1872
        %v1902 = vmul.f32 %v1869, %v1872
        %v1903 = vmul.f32 %v1870, %v1872
        %v1904 = vmul.f32 %v1871, %v1872
        %v1905 = vadd.f32 %v1807, %v1873
        %v1906 = vadd.f32 %v1808, %v1874
        %v1907 = vadd.f32 %v1809, %v1875
        %v1908 = vadd.f32 %v1810, %v1876
        %v1909 = vadd.f32 %v1811, %v1877
        %v1910 = vadd.f32 %v1812, %v1878
        %v1911 = vadd.f32 %v1813, %v1879
        %v1912 = vadd.f32 %v1814, %v1880
        %v1913 = vadd.f32 %v1815, %v1881
        %v1914 = vadd.f32 %v1816, %v1882
        %v1915 = vadd.f32 %v1817, %v1883
        %v1916 = vadd.f32 %v1818, %v1884
        %v1917 = vadd.f32 %v1819, %v1885
        %v1918 = vadd.f32 %v1820, %v1886
        %v1919 = vadd.f32 %v1821, %v1887
        %v1920 = vadd.f32 %v1822, %v1888
        %v1921 = vadd.f32 %v1823, %v1889
        %v1922 = vadd.f32 %v1824, %v1890
        %v1923 = vadd.f32 %v1825, %v1891
        %v1924 = vadd.f32 %v1826, %v1892
        %v1925 = vadd.f32 %v1827, %v1893
        %v1926 = vadd.f32 %v1828, %v1894
        %v1927 = vadd.f32 %v1829, %v1895
        %v1928 = vadd.f32 %v1830, %v1896
        %v1929 = vadd.f32 %v1831, %v1897
        %v1930 = vadd.f32 %v1832, %v1898
        %v1931 = vadd.f32 %v1833, %v1899
        %v1932 = vadd.f32 %v1834, %v1900
        %v1933 = vadd.f32 %v1835, %v1901
        %v1934 = vadd.f32 %v1836, %v1902
        %v1935 = vadd.f32 %v1837, %v1903
        %v1936 = vadd.f32 %v1838, %v1904
        %v1937 = vld [vmem:[%s1839 + $0x8] sm:$0xff]
        %v1938 = vld [vmem:[%s1839 + $0x10] sm:$0xff]
        %v1939 = vld [vmem:[%s1839 + $0x28] sm:$0xff]
        %v1940 = vld [vmem:[%s1839 + $0x30] sm:$0xff]
        %v1941 = vld [vmem:[%s1839 + $0x48] sm:$0xff]
        %v1942 = vld [vmem:[%s1839 + $0x50] sm:$0xff]
        %v1943 = vld [vmem:[%s1839 + $0x68] sm:$0xff]
        %v1944 = vld [vmem:[%s1839 + $0x70] sm:$0xff]
        %v1945 = vld [vmem:[%s1839 + $0x88] sm:$0xff]
        %v1946 = vld [vmem:[%s1839 + $0x90] sm:$0xff]
        %v1947 = vld [vmem:[%s1839 + $0xa8] sm:$0xff]
        %v1948 = vld [vmem:[%s1839 + $0xb0] sm:$0xff]
        %v1949 = vld [vmem:[%s1839 + $0xc8] sm:$0xff]
        %v1950 = vld [vmem:[%s1839 + $0xd0] sm:$0xff]
        %v1951 = vld [vmem:[%s1839 + $0xe8] sm:$0xff]
        %v1952 = vld [vmem:[%s1839 + $0xf0] sm:$0xff]
        %v1953 = vld [vmem:[%s1839 + $0x108] sm:$0xff]
        %v1954 = vld [vmem:[%s1839 + $0x110] sm:$0xff]
        %v1955 = vld [vmem:[%s1839 + $0x128] sm:$0xff]
        %v1956 = vld [vmem:[%s1839 + $0x130] sm:$0xff]
        %v1957 = vld [vmem:[%s1839 + $0x148] sm:$0xff]
        %v1958 = vld [vmem:[%s1839 + $0x150] sm:$0xff]
        %v1959 = vld [vmem:[%s1839 + $0x168] sm:$0xff]
        %v1960 = vld [vmem:[%s1839 + $0x170] sm:$0xff]
        %v1961 = vld [vmem:[%s1839 + $0x188] sm:$0xff]
        %v1962 = vld [vmem:[%s1839 + $0x190] sm:$0xff]
        %v1963 = vld [vmem:[%s1839 + $0x1a8] sm:$0xff]
        %v1964 = vld [vmem:[%s1839 + $0x1b0] sm:$0xff]
        %v1965 = vld [vmem:[%s1839 + $0x1c8] sm:$0xff]
        %v1966 = vld [vmem:[%s1839 + $0x1d0] sm:$0xff]
        %v1967 = vld [vmem:[%s1839 + $0x1e8] sm:$0xff]
        %v1968 = vld [vmem:[%s1839 + $0x1f0] sm:$0xff]
        %v1969 = vperm.slane %v1255, 7
        %v1970 = vmul.f32 %v1937, %v1969
        %v1971 = vmul.f32 %v1938, %v1969
        %v1972 = vmul.f32 %v1939, %v1969
        %v1973 = vmul.f32 %v1940, %v1969
        %v1974 = vmul.f32 %v1941, %v1969
        %v1975 = vmul.f32 %v1942, %v1969
        %v1976 = vmul.f32 %v1943, %v1969
        %v1977 = vmul.f32 %v1944, %v1969
        %v1978 = vmul.f32 %v1945, %v1969
        %v1979 = vmul.f32 %v1946, %v1969
        %v1980 = vmul.f32 %v1947, %v1969
        %v1981 = vmul.f32 %v1948, %v1969
        %v1982 = vmul.f32 %v1949, %v1969
        %v1983 = vmul.f32 %v1950, %v1969
        %v1984 = vmul.f32 %v1951, %v1969
        %v1985 = vmul.f32 %v1952, %v1969
        %v1986 = vmul.f32 %v1953, %v1969
        %v1987 = vmul.f32 %v1954, %v1969
        %v1988 = vmul.f32 %v1955, %v1969
        %v1989 = vmul.f32 %v1956, %v1969
        %v1990 = vmul.f32 %v1957, %v1969
        %v1991 = vmul.f32 %v1958, %v1969
        %v1992 = vmul.f32 %v1959, %v1969
        %v1993 = vmul.f32 %v1960, %v1969
        %v1994 = vmul.f32 %v1961, %v1969
        %v1995 = vmul.f32 %v1962, %v1969
        %v1996 = vmul.f32 %v1963, %v1969
        %v1997 = vmul.f32 %v1964, %v1969
        %v1998 = vmul.f32 %v1965, %v1969
        %v1999 = vmul.f32 %v1966, %v1969
        %v2000 = vmul.f32 %v1967, %v1969
        %v2001 = vmul.f32 %v1968, %v1969
        %v2002 = vadd.f32 %v1905, %v1970
        %v2003 = vadd.f32 %v1906, %v1971
        %v2004 = vadd.f32 %v1907, %v1972
        %v2005 = vadd.f32 %v1908, %v1973
        %v2006 = vadd.f32 %v1909, %v1974
        %v2007 = vadd.f32 %v1910, %v1975
        %v2008 = vadd.f32 %v1911, %v1976
        %v2009 = vadd.f32 %v1912, %v1977
        %v2010 = vadd.f32 %v1913, %v1978
        %v2011 = vadd.f32 %v1914, %v1979
        %v2012 = vadd.f32 %v1915, %v1980
        %v2013 = vadd.f32 %v1916, %v1981
        %v2014 = vadd.f32 %v1917, %v1982
        %v2015 = vadd.f32 %v1918, %v1983
        %v2016 = vadd.f32 %v1919, %v1984
        %v2017 = vadd.f32 %v1920, %v1985
        %v2018 = vadd.f32 %v1921, %v1986
        %v2019 = vadd.f32 %v1922, %v1987
        %v2020 = vadd.f32 %v1923, %v1988
        %v2021 = vadd.f32 %v1924, %v1989
        %v2022 = vadd.f32 %v1925, %v1990
        %v2023 = vadd.f32 %v1926, %v1991
        %v2024 = vadd.f32 %v1927, %v1992
        %v2025 = vadd.f32 %v1928, %v1993
        %v2026 = vadd.f32 %v1929, %v1994
        %v2027 = vadd.f32 %v1930, %v1995
        %v2028 = vadd.f32 %v1931, %v1996
        %v2029 = vadd.f32 %v1932, %v1997
        %v2030 = vadd.f32 %v1933, %v1998
        %v2031 = vadd.f32 %v1934, %v1999
        %v2032 = vadd.f32 %v1935, %v2000
        %v2033 = vadd.f32 %v1936, %v2001
        %v2034 = vld [vmem:[%s1839 + $0x9] sm:$0xff]
        %v2035 = vld [vmem:[%s1839 + $0x11] sm:$0xff]
        %v2036 = vld [vmem:[%s1839 + $0x29] sm:$0xff]
        %v2037 = vld [vmem:[%s1839 + $0x31] sm:$0xff]
        %v2038 = vld [vmem:[%s1839 + $0x49] sm:$0xff]
        %v2039 = vld [vmem:[%s1839 + $0x51] sm:$0xff]
        %v2040 = vld [vmem:[%s1839 + $0x69] sm:$0xff]
        %v2041 = vld [vmem:[%s1839 + $0x71] sm:$0xff]
        %v2042 = vld [vmem:[%s1839 + $0x89] sm:$0xff]
        %v2043 = vld [vmem:[%s1839 + $0x91] sm:$0xff]
        %v2044 = vld [vmem:[%s1839 + $0xa9] sm:$0xff]
        %v2045 = vld [vmem:[%s1839 + $0xb1] sm:$0xff]
        %v2046 = vld [vmem:[%s1839 + $0xc9] sm:$0xff]
        %v2047 = vld [vmem:[%s1839 + $0xd1] sm:$0xff]
        %v2048 = vld [vmem:[%s1839 + $0xe9] sm:$0xff]
        %v2049 = vld [vmem:[%s1839 + $0xf1] sm:$0xff]
        %v2050 = vld [vmem:[%s1839 + $0x109] sm:$0xff]
        %v2051 = vld [vmem:[%s1839 + $0x111] sm:$0xff]
        %v2052 = vld [vmem:[%s1839 + $0x129] sm:$0xff]
        %v2053 = vld [vmem:[%s1839 + $0x131] sm:$0xff]
        %v2054 = vld [vmem:[%s1839 + $0x149] sm:$0xff]
        %v2055 = vld [vmem:[%s1839 + $0x151] sm:$0xff]
        %v2056 = vld [vmem:[%s1839 + $0x169] sm:$0xff]
        %v2057 = vld [vmem:[%s1839 + $0x171] sm:$0xff]
        %v2058 = vld [vmem:[%s1839 + $0x189] sm:$0xff]
        %v2059 = vld [vmem:[%s1839 + $0x191] sm:$0xff]
        %v2060 = vld [vmem:[%s1839 + $0x1a9] sm:$0xff]
        %v2061 = vld [vmem:[%s1839 + $0x1b1] sm:$0xff]
        %v2062 = vld [vmem:[%s1839 + $0x1c9] sm:$0xff]
        %v2063 = vld [vmem:[%s1839 + $0x1d1] sm:$0xff]
        %v2064 = vld [vmem:[%s1839 + $0x1e9] sm:$0xff]
        %v2065 = vld [vmem:[%s1839 + $0x1f1] sm:$0xff]
        %v2066 = vperm.slane %v1256, 0
        %v2067 = vmul.f32 %v2034, %v2066
        %v2068 = vmul.f32 %v2035, %v2066
        %v2069 = vmul.f32 %v2036, %v2066
        %v2070 = vmul.f32 %v2037, %v2066
        %v2071 = vmul.f32 %v2038, %v2066
        %v2072 = vmul.f32 %v2039, %v2066
        %v2073 = vmul.f32 %v2040, %v2066
        %v2074 = vmul.f32 %v2041, %v2066
        %v2075 = vmul.f32 %v2042, %v2066
        %v2076 = vmul.f32 %v2043, %v2066
        %v2077 = vmul.f32 %v2044, %v2066
        %v2078 = vmul.f32 %v2045, %v2066
        %v2079 = vmul.f32 %v2046, %v2066
        %v2080 = vmul.f32 %v2047, %v2066
        %v2081 = vmul.f32 %v2048, %v2066
        %v2082 = vmul.f32 %v2049, %v2066
        %v2083 = vmul.f32 %v2050, %v2066
        %v2084 = vmul.f32 %v2051, %v2066
        %v2085 = vmul.f32 %v2052, %v2066
        %v2086 = vmul.f32 %v2053, %v2066
        %v2087 = vmul.f32 %v2054, %v2066
        %v2088 = vmul.f32 %v2055, %v2066
        %v2089 = vmul.f32 %v2056, %v2066
        %v2090 = vmul.f32 %v2057, %v2066
        %v2091 = vmul.f32 %v2058, %v2066
        %v2092 = vmul.f32 %v2059, %v2066
        %v2093 = vmul.f32 %v2060, %v2066
        %v2094 = vmul.f32 %v2061, %v2066
        %v2095 = vmul.f32 %v2062, %v2066
        %v2096 = vmul.f32 %v2063, %v2066
        %v2097 = vmul.f32 %v2064, %v2066
        %v2098 = vmul.f32 %v2065, %v2066
        %v2099 = vadd.f32 %v2002, %v2067
        %v2100 = vadd.f32 %v2003, %v2068
        %v2101 = vadd.f32 %v2004, %v2069
        %v2102 = vadd.f32 %v2005, %v2070
        %v2103 = vadd.f32 %v2006, %v2071
        %v2104 = vadd.f32 %v2007, %v2072
        %v2105 = vadd.f32 %v2008, %v2073
        %v2106 = vadd.f32 %v2009, %v2074
        %v2107 = vadd.f32 %v2010, %v2075
        %v2108 = vadd.f32 %v2011, %v2076
        %v2109 = vadd.f32 %v2012, %v2077
        %v2110 = vadd.f32 %v2013, %v2078
        %v2111 = vadd.f32 %v2014, %v2079
        %v2112 = vadd.f32 %v2015, %v2080
        %v2113 = vadd.f32 %v2016, %v2081
        %v2114 = vadd.f32 %v2017, %v2082
        %v2115 = vadd.f32 %v2018, %v2083
        %v2116 = vadd.f32 %v2019, %v2084
        %v2117 = vadd.f32 %v2020, %v2085
        %v2118 = vadd.f32 %v2021, %v2086
        %v2119 = vadd.f32 %v2022, %v2087
        %v2120 = vadd.f32 %v2023, %v2088
        %v2121 = vadd.f32 %v2024, %v2089
        %v2122 = vadd.f32 %v2025, %v2090
        %v2123 = vadd.f32 %v2026, %v2091
        %v2124 = vadd.f32 %v2027, %v2092
        %v2125 = vadd.f32 %v2028, %v2093
        %v2126 = vadd.f32 %v2029, %v2094
        %v2127 = vadd.f32 %v2030, %v2095
        %v2128 = vadd.f32 %v2031, %v2096
        %v2129 = vadd.f32 %v2032, %v2097
        %v2130 = vadd.f32 %v2033, %v2098
        %v2131 = vld [vmem:[%s6] sm:$0x1]
        %v2133 = vperm.slane %v2131, 0
        %v2135 = vadd.f32 %v2099, %v2133
        %v2136 = vadd.f32 %v2100, %v2133
        %v2137 = vadd.f32 %v2101, %v2133
        %v2138 = vadd.f32 %v2102, %v2133
        %v2139 = vadd.f32 %v2103, %v2133
        %v2140 = vadd.f32 %v2104, %v2133
        %v2141 = vadd.f32 %v2105, %v2133
        %v2142 = vadd.f32 %v2106, %v2133
        %v2143 = vadd.f32 %v2107, %v2133
        %v2144 = vadd.f32 %v2108, %v2133
        %v2145 = vadd.f32 %v2109, %v2133
        %v2146 = vadd.f32 %v2110, %v2133
        %v2147 = vadd.f32 %v2111, %v2133
        %v2148 = vadd.f32 %v2112, %v2133
        %v2149 = vadd.f32 %v2113, %v2133
        %v2150 = vadd.f32 %v2114, %v2133
        %v2151 = vadd.f32 %v2115, %v2133
        %v2152 = vadd.f32 %v2116, %v2133
        %v2153 = vadd.f32 %v2117, %v2133
        %v2154 = vadd.f32 %v2118, %v2133
        %v2155 = vadd.f32 %v2119, %v2133
        %v2156 = vadd.f32 %v2120, %v2133
        %v2157 = vadd.f32 %v2121, %v2133
        %v2158 = vadd.f32 %v2122, %v2133
        %v2159 = vadd.f32 %v2123, %v2133
        %v2160 = vadd.f32 %v2124, %v2133
        %v2161 = vadd.f32 %v2125, %v2133
        %v2162 = vadd.f32 %v2126, %v2133
        %v2163 = vadd.f32 %v2127, %v2133
        %v2164 = vadd.f32 %v2128, %v2133
        %v2165 = vadd.f32 %v2129, %v2133
        %v2166 = vadd.f32 %v2130, %v2133
        %v2167 = vmul.f32 %v2135, %v2135
        %v2168 = vmul.f32 %v2136, %v2136
        %v2169 = vmul.f32 %v2137, %v2137
        %v2170 = vmul.f32 %v2138, %v2138
        %v2171 = vmul.f32 %v2139, %v2139
        %v2172 = vmul.f32 %v2140, %v2140
        %v2173 = vmul.f32 %v2141, %v2141
        %v2174 = vmul.f32 %v2142, %v2142
        %v2175 = vmul.f32 %v2143, %v2143
        %v2176 = vmul.f32 %v2144, %v2144
        %v2177 = vmul.f32 %v2145, %v2145
        %v2178 = vmul.f32 %v2146, %v2146
        %v2179 = vmul.f32 %v2147, %v2147
        %v2180 = vmul.f32 %v2148, %v2148
        %v2181 = vmul.f32 %v2149, %v2149
        %v2182 = vmul.f32 %v2150, %v2150
        %v2183 = vmul.f32 %v2151, %v2151
        %v2184 = vmul.f32 %v2152, %v2152
        %v2185 = vmul.f32 %v2153, %v2153
        %v2186 = vmul.f32 %v2154, %v2154
        %v2187 = vmul.f32 %v2155, %v2155
        %v2188 = vmul.f32 %v2156, %v2156
        %v2189 = vmul.f32 %v2157, %v2157
        %v2190 = vmul.f32 %v2158, %v2158
        %v2191 = vmul.f32 %v2159, %v2159
        %v2192 = vmul.f32 %v2160, %v2160
        %v2193 = vmul.f32 %v2161, %v2161
        %v2194 = vmul.f32 %v2162, %v2162
        %v2195 = vmul.f32 %v2163, %v2163
        %v2196 = vmul.f32 %v2164, %v2164
        %v2197 = vmul.f32 %v2165, %v2165
        %v2198 = vmul.f32 %v2166, %v2166
        %v2199 = vmul.f32 %v2135, %v2167
        %v2200 = vmul.f32 %v2136, %v2168
        %v2201 = vmul.f32 %v2137, %v2169
        %v2202 = vmul.f32 %v2138, %v2170
        %v2203 = vmul.f32 %v2139, %v2171
        %v2204 = vmul.f32 %v2140, %v2172
        %v2205 = vmul.f32 %v2141, %v2173
        %v2206 = vmul.f32 %v2142, %v2174
        %v2207 = vmul.f32 %v2143, %v2175
        %v2208 = vmul.f32 %v2144, %v2176
        %v2209 = vmul.f32 %v2145, %v2177
        %v2210 = vmul.f32 %v2146, %v2178
        %v2211 = vmul.f32 %v2147, %v2179
        %v2212 = vmul.f32 %v2148, %v2180
        %v2213 = vmul.f32 %v2149, %v2181
        %v2214 = vmul.f32 %v2150, %v2182
        %v2215 = vmul.f32 %v2151, %v2183
        %v2216 = vmul.f32 %v2152, %v2184
        %v2217 = vmul.f32 %v2153, %v2185
        %v2218 = vmul.f32 %v2154, %v2186
        %v2219 = vmul.f32 %v2155, %v2187
        %v2220 = vmul.f32 %v2156, %v2188
        %v2221 = vmul.f32 %v2157, %v2189
        %v2222 = vmul.f32 %v2158, %v2190
        %v2223 = vmul.f32 %v2159, %v2191
        %v2224 = vmul.f32 %v2160, %v2192
        %v2225 = vmul.f32 %v2161, %v2193
        %v2226 = vmul.f32 %v2162, %v2194
        %v2227 = vmul.f32 %v2163, %v2195
        %v2228 = vmul.f32 %v2164, %v2196
        %v2229 = vmul.f32 %v2165, %v2197
        %v2230 = vmul.f32 %v2166, %v2198
        %v2231 = vmul.f32 %v2199, 0.044715
        %v2232 = vmul.f32 %v2200, 0.044715
        %v2233 = vmul.f32 %v2201, 0.044715
        %v2234 = vmul.f32 %v2202, 0.044715
        %v2235 = vmul.f32 %v2203, 0.044715
        %v2236 = vmul.f32 %v2204, 0.044715
        %v2237 = vmul.f32 %v2205, 0.044715
        %v2238 = vmul.f32 %v2206, 0.044715
        %v2239 = vmul.f32 %v2207, 0.044715
        %v2240 = vmul.f32 %v2208, 0.044715
        %v2241 = vmul.f32 %v2209, 0.044715
        %v2242 = vmul.f32 %v2210, 0.044715
        %v2243 = vmul.f32 %v2211, 0.044715
        %v2244 = vmul.f32 %v2212, 0.044715
        %v2245 = vmul.f32 %v2213, 0.044715
        %v2246 = vmul.f32 %v2214, 0.044715
        %v2247 = vmul.f32 %v2215, 0.044715
        %v2248 = vmul.f32 %v2216, 0.044715
        %v2249 = vmul.f32 %v2217, 0.044715
        %v2250 = vmul.f32 %v2218, 0.044715
        %v2251 = vmul.f32 %v2219, 0.044715
        %v2252 = vmul.f32 %v2220, 0.044715
        %v2253 = vmul.f32 %v2221, 0.044715
        %v2254 = vmul.f32 %v2222, 0.044715
        %v2255 = vmul.f32 %v2223, 0.044715
        %v2256 = vmul.f32 %v2224, 0.044715
        %v2257 = vmul.f32 %v2225, 0.044715
        %v2258 = vmul.f32 %v2226, 0.044715
        %v2259 = vmul.f32 %v2227, 0.044715
        %v2260 = vmul.f32 %v2228, 0.044715
        %v2261 = vmul.f32 %v2229, 0.044715
        %v2262 = vmul.f32 %v2230, 0.044715
        %v2263 = vadd.f32 %v2135, %v2231
        %v2264 = vadd.f32 %v2136, %v2232
        %v2265 = vadd.f32 %v2137, %v2233
        %v2266 = vadd.f32 %v2138, %v2234
        %v2267 = vadd.f32 %v2139, %v2235
        %v2268 = vadd.f32 %v2140, %v2236
        %v2269 = vadd.f32 %v2141, %v2237
        %v2270 = vadd.f32 %v2142, %v2238
        %v2271 = vadd.f32 %v2143, %v2239
        %v2272 = vadd.f32 %v2144, %v2240
        %v2273 = vadd.f32 %v2145, %v2241
        %v2274 = vadd.f32 %v2146, %v2242
        %v2275 = vadd.f32 %v2147, %v2243
        %v2276 = vadd.f32 %v2148, %v2244
        %v2277 = vadd.f32 %v2149, %v2245
        %v2278 = vadd.f32 %v2150, %v2246
        %v2279 = vadd.f32 %v2151, %v2247
        %v2280 = vadd.f32 %v2152, %v2248
        %v2281 = vadd.f32 %v2153, %v2249
        %v2282 = vadd.f32 %v2154, %v2250
        %v2283 = vadd.f32 %v2155, %v2251
        %v2284 = vadd.f32 %v2156, %v2252
        %v2285 = vadd.f32 %v2157, %v2253
        %v2286 = vadd.f32 %v2158, %v2254
        %v2287 = vadd.f32 %v2159, %v2255
        %v2288 = vadd.f32 %v2160, %v2256
        %v2289 = vadd.f32 %v2161, %v2257
        %v2290 = vadd.f32 %v2162, %v2258
        %v2291 = vadd.f32 %v2163, %v2259
        %v2292 = vadd.f32 %v2164, %v2260
        %v2293 = vadd.f32 %v2165, %v2261
        %v2294 = vadd.f32 %v2166, %v2262
        %v2295 = vmul.f32 %v2263, 0.7978846
        %v2296 = vmul.f32 %v2264, 0.7978846
        %v2297 = vmul.f32 %v2265, 0.7978846
        %v2298 = vmul.f32 %v2266, 0.7978846
        %v2299 = vmul.f32 %v2267, 0.7978846
        %v2300 = vmul.f32 %v2268, 0.7978846
        %v2301 = vmul.f32 %v2269, 0.7978846
        %v2302 = vmul.f32 %v2270, 0.7978846
        %v2303 = vmul.f32 %v2271, 0.7978846
        %v2304 = vmul.f32 %v2272, 0.7978846
        %v2305 = vmul.f32 %v2273, 0.7978846
        %v2306 = vmul.f32 %v2274, 0.7978846
        %v2307 = vmul.f32 %v2275, 0.7978846
        %v2308 = vmul.f32 %v2276, 0.7978846
        %v2309 = vmul.f32 %v2277, 0.7978846
        %v2310 = vmul.f32 %v2278, 0.7978846
        %v2311 = vmul.f32 %v2279, 0.7978846
        %v2312 = vmul.f32 %v2280, 0.7978846
        %v2313 = vmul.f32 %v2281, 0.7978846
        %v2314 = vmul.f32 %v2282, 0.7978846
        %v2315 = vmul.f32 %v2283, 0.7978846
        %v2316 = vmul.f32 %v2284, 0.7978846
        %v2317 = vmul.f32 %v2285, 0.7978846
        %v2318 = vmul.f32 %v2286, 0.7978846
        %v2319 = vmul.f32 %v2287, 0.7978846
        %v2320 = vmul.f32 %v2288, 0.7978846
        %v2321 = vmul.f32 %v2289, 0.7978846
        %v2322 = vmul.f32 %v2290, 0.7978846
        %v2323 = vmul.f32 %v2291, 0.7978846
        %v2324 = vmul.f32 %v2292, 0.7978846
        %v2325 = vmul.f32 %v2293, 0.7978846
        %v2326 = vmul.f32 %v2294, 0.7978846
        %v2327 = vtanh.pop %v2295
        %v2328 = vtanh.pop %v2296
        %v2329 = vtanh.pop %v2297
        %v2330 = vtanh.pop %v2298
        %v2331 = vtanh.pop %v2299
        %v2332 = vtanh.pop %v2300
        %v2333 = vtanh.pop %v2301
        %v2334 = vtanh.pop %v2302
        %v2335 = vtanh.pop %v2303
        %v2336 = vtanh.pop %v2304
        %v2337 = vtanh.pop %v2305
        %v2338 = vtanh.pop %v2306
        %v2339 = vtanh.pop %v2307
        %v2340 = vtanh.pop %v2308
        %v2341 = vtanh.pop %v2309
        %v2342 = vtanh.pop %v2310
        %v2343 = vtanh.pop %v2311
        %v2344 = vtanh.pop %v2312
        %v2345 = vtanh.pop %v2313
        %v2346 = vtanh.pop %v2314
        %v2347 = vtanh.pop %v2315
        %v2348 = vtanh.pop %v2316
        %v2349 = vtanh.pop %v2317
        %v2350 = vtanh.pop %v2318
        %v2351 = vtanh.pop %v2319
        %v2352 = vtanh.pop %v2320
        %v2353 = vtanh.pop %v2321
        %v2354 = vtanh.pop %v2322
        %v2355 = vtanh.pop %v2323
        %v2356 = vtanh.pop %v2324
        %v2357 = vtanh.pop %v2325
        %v2358 = vtanh.pop %v2326
        %v2359 = vadd.f32 %v2327, 1.0
        %v2360 = vadd.f32 %v2328, 1.0
        %v2361 = vadd.f32 %v2329, 1.0
        %v2362 = vadd.f32 %v2330, 1.0
        %v2363 = vadd.f32 %v2331, 1.0
        %v2364 = vadd.f32 %v2332, 1.0
        %v2365 = vadd.f32 %v2333, 1.0
        %v2366 = vadd.f32 %v2334, 1.0
        %v2367 = vadd.f32 %v2335, 1.0
        %v2368 = vadd.f32 %v2336, 1.0
        %v2369 = vadd.f32 %v2337, 1.0
        %v2370 = vadd.f32 %v2338, 1.0
        %v2371 = vadd.f32 %v2339, 1.0
        %v2372 = vadd.f32 %v2340, 1.0
        %v2373 = vadd.f32 %v2341, 1.0
        %v2374 = vadd.f32 %v2342, 1.0
        %v2375 = vadd.f32 %v2343, 1.0
        %v2376 = vadd.f32 %v2344, 1.0
        %v2377 = vadd.f32 %v2345, 1.0
        %v2378 = vadd.f32 %v2346, 1.0
        %v2379 = vadd.f32 %v2347, 1.0
        %v2380 = vadd.f32 %v2348, 1.0
        %v2381 = vadd.f32 %v2349, 1.0
        %v2382 = vadd.f32 %v2350, 1.0
        %v2383 = vadd.f32 %v2351, 1.0
        %v2384 = vadd.f32 %v2352, 1.0
        %v2385 = vadd.f32 %v2353, 1.0
        %v2386 = vadd.f32 %v2354, 1.0
        %v2387 = vadd.f32 %v2355, 1.0
        %v2388 = vadd.f32 %v2356, 1.0
        %v2389 = vadd.f32 %v2357, 1.0
        %v2390 = vadd.f32 %v2358, 1.0
        %v2391 = vmul.f32 %v2359, 0.5
        %v2392 = vmul.f32 %v2360, 0.5
        %v2393 = vmul.f32 %v2361, 0.5
        %v2394 = vmul.f32 %v2362, 0.5
        %v2395 = vmul.f32 %v2363, 0.5
        %v2396 = vmul.f32 %v2364, 0.5
        %v2397 = vmul.f32 %v2365, 0.5
        %v2398 = vmul.f32 %v2366, 0.5
        %v2399 = vmul.f32 %v2367, 0.5
        %v2400 = vmul.f32 %v2368, 0.5
        %v2401 = vmul.f32 %v2369, 0.5
        %v2402 = vmul.f32 %v2370, 0.5
        %v2403 = vmul.f32 %v2371, 0.5
        %v2404 = vmul.f32 %v2372, 0.5
        %v2405 = vmul.f32 %v2373, 0.5
        %v2406 = vmul.f32 %v2374, 0.5
        %v2407 = vmul.f32 %v2375, 0.5
        %v2408 = vmul.f32 %v2376, 0.5
        %v2409 = vmul.f32 %v2377, 0.5
        %v2410 = vmul.f32 %v2378, 0.5
        %v2411 = vmul.f32 %v2379, 0.5
        %v2412 = vmul.f32 %v2380, 0.5
        %v2413 = vmul.f32 %v2381, 0.5
        %v2414 = vmul.f32 %v2382, 0.5
        %v2415 = vmul.f32 %v2383, 0.5
        %v2416 = vmul.f32 %v2384, 0.5
        %v2417 = vmul.f32 %v2385, 0.5
        %v2418 = vmul.f32 %v2386, 0.5
        %v2419 = vmul.f32 %v2387, 0.5
        %v2420 = vmul.f32 %v2388, 0.5
        %v2421 = vmul.f32 %v2389, 0.5
        %v2422 = vmul.f32 %v2390, 0.5
        %v2423 = vmul.f32 %v2135, %v2391
        %v2424 = vmul.f32 %v2136, %v2392
        %v2425 = vmul.f32 %v2137, %v2393
        %v2426 = vmul.f32 %v2138, %v2394
        %v2427 = vmul.f32 %v2139, %v2395
        %v2428 = vmul.f32 %v2140, %v2396
        %v2429 = vmul.f32 %v2141, %v2397
        %v2430 = vmul.f32 %v2142, %v2398
        %v2431 = vmul.f32 %v2143, %v2399
        %v2432 = vmul.f32 %v2144, %v2400
        %v2433 = vmul.f32 %v2145, %v2401
        %v2434 = vmul.f32 %v2146, %v2402
        %v2435 = vmul.f32 %v2147, %v2403
        %v2436 = vmul.f32 %v2148, %v2404
        %v2437 = vmul.f32 %v2149, %v2405
        %v2438 = vmul.f32 %v2150, %v2406
        %v2439 = vmul.f32 %v2151, %v2407
        %v2440 = vmul.f32 %v2152, %v2408
        %v2441 = vmul.f32 %v2153, %v2409
        %v2442 = vmul.f32 %v2154, %v2410
        %v2443 = vmul.f32 %v2155, %v2411
        %v2444 = vmul.f32 %v2156, %v2412
        %v2445 = vmul.f32 %v2157, %v2413
        %v2446 = vmul.f32 %v2158, %v2414
        %v2447 = vmul.f32 %v2159, %v2415
        %v2448 = vmul.f32 %v2160, %v2416
        %v2449 = vmul.f32 %v2161, %v2417
        %v2450 = vmul.f32 %v2162, %v2418
        %v2451 = vmul.f32 %v2163, %v2419
        %v2452 = vmul.f32 %v2164, %v2420
        %v2453 = vmul.f32 %v2165, %v2421
        %v2454 = vmul.f32 %v2166, %v2422
        %v2455 = vadd.f32 %v2423, %v2424
        %v2456 = vadd.f32 %v2455, %v2425
        %v2457 = vadd.f32 %v2456, %v2426
        %v2458 = vadd.f32 %v2457, %v2427
        %v2459 = vadd.f32 %v2458, %v2428
        %v2460 = vadd.f32 %v2459, %v2429
        %v2461 = vadd.f32 %v2460, %v2430
        %v2462 = vadd.f32 %v2461, %v2431
        %v2463 = vadd.f32 %v2462, %v2432
        %v2464 = vadd.f32 %v2463, %v2433
        %v2465 = vadd.f32 %v2464, %v2434
        %v2466 = vadd.f32 %v2465, %v2435
        %v2467 = vadd.f32 %v2466, %v2436
        %v2468 = vadd.f32 %v2467, %v2437
        %v2469 = vadd.f32 %v2468, %v2438
        %v2470 = vadd.f32 %v2469, %v2439
        %v2471 = vadd.f32 %v2470, %v2440
        %v2472 = vadd.f32 %v2471, %v2441
        %v2473 = vadd.f32 %v2472, %v2442
        %v2474 = vadd.f32 %v2473, %v2443
        %v2475 = vadd.f32 %v2474, %v2444
        %v2476 = vadd.f32 %v2475, %v2445
        %v2477 = vadd.f32 %v2476, %v2446
        %v2478 = vadd.f32 %v2477, %v2447
        %v2479 = vadd.f32 %v2478, %v2448
        %v2480 = vadd.f32 %v2479, %v2449
        %v2481 = vadd.f32 %v2480, %v2450
        %v2482 = vadd.f32 %v2481, %v2451
        %v2483 = vadd.f32 %v2482, %v2452
        %v2484 = vadd.f32 %v2483, %v2453
        %v2485 = vadd.f32 %v2484, %v2454
        %v2486 = vrot.slane %v2485, 4
        %v2487 = vadd.f32 %v2485, %v2486
        %v2488 = vrot.slane %v2487, 2
        %v2489 = vadd.f32 %v2487, %v2488
        %v2490 = vrot.slane %v2489, 1
        %v2491 = vadd.f32 %v2489, %v2490
        %v2492 = vrcp.pop 256.0
        %v2493 = vmul.f32 256.0, %v2492
        %v2494 = vsub.f32 1.0, %v2493
        %v2495 = vmul.f32 %v2492, %v2494
        %v2496 = vadd.f32 %v2492, %v2495
        %vm2497 = vweird.f32 %v2492
        %v2498 = vsel %vm2497, %v2492, %v2496
        %v2499 = vmul.f32 %v2491, %v2498
        %v2500 = vld [vmem:[#allocation11] sm:$0xff]
        %v2501 = vld [vmem:[#allocation11 + $0x8] sm:$0xff]
        %v2502 = vld [vmem:[#allocation11 + $0x10] sm:$0xff]
        %v2503 = vld [vmem:[#allocation11 + $0x18] sm:$0xff]
        %v2504 = vld [vmem:[#allocation11 + $0x20] sm:$0xff]
        %v2505 = vld [vmem:[#allocation11 + $0x28] sm:$0xff]
        %v2506 = vld [vmem:[#allocation11 + $0x30] sm:$0xff]
        %v2507 = vld [vmem:[#allocation11 + $0x38] sm:$0xff]
        %v2508 = vld [vmem:[#allocation11 + $0x40] sm:$0xff]
        %v2509 = vld [vmem:[#allocation11 + $0x48] sm:$0xff]
        %v2510 = vld [vmem:[#allocation11 + $0x50] sm:$0xff]
        %v2511 = vld [vmem:[#allocation11 + $0x58] sm:$0xff]
        %v2512 = vld [vmem:[#allocation11 + $0x60] sm:$0xff]
        %v2513 = vld [vmem:[#allocation11 + $0x68] sm:$0xff]
        %v2514 = vld [vmem:[#allocation11 + $0x70] sm:$0xff]
        %v2515 = vld [vmem:[#allocation11 + $0x78] sm:$0xff]
        %v2516 = vld [vmem:[%s8] sm:$0x1]
        %2517 = vmatpush.msra.mxu0 %v2515
        %2518 = vmatpush.msra.mxu0 %v2514
        %2519 = vmatpush.msra.mxu0 %v2513
        %2520 = vmatpush.msra.mxu0 %v2512
        %2521 = vmatpush.msra.mxu0 %v2511
        %2522 = vmatpush.msra.mxu0 %v2510
        %2523 = vmatpush.msra.mxu0 %v2509
        %2524 = vmatpush.msra.mxu0 %v2508
        %2525 = vmatpush.msra.mxu0 %v2507
        %2526 = vmatpush.msra.mxu0 %v2506
        %2527 = vmatpush.msra.mxu0 %v2505
        %2528 = vmatpush.msra.mxu0 %v2504
        %2529 = vmatpush.msra.mxu0 %v2503
        %2530 = vmatpush.msra.mxu0 %v2502
        %2531 = vmatpush.msra.mxu0 %v2501
        %2532 = vmatpush.msra.mxu0 %v2500
        %2533 = vmatmul.f32.gmra.mxu0 %v2499
        %v2534 = vpop.f32.mrf.mxu0
        %v2535 = vadd.f32 %v2516, %v2534
        %2536 = vdwg.mxu0
        %v2537 = vmax.f32 %v2535, 0.0
        %v2538 = vld [vmem:[#allocation12] sm:$0xff]
        %v2539 = vld [vmem:[#allocation12 + $0x8] sm:$0xff]
        %v2540 = vld [vmem:[#allocation12 + $0x10] sm:$0xff]
        %v2541 = vld [vmem:[#allocation12 + $0x18] sm:$0xff]
        %v2542 = vld [vmem:[#allocation12 + $0x20] sm:$0xff]
        %v2543 = vld [vmem:[#allocation12 + $0x28] sm:$0xff]
        %v2544 = vld [vmem:[#allocation12 + $0x30] sm:$0xff]
        %v2545 = vld [vmem:[#allocation12 + $0x38] sm:$0xff]
        %v2546 = vld [vmem:[#allocation12 + $0x40] sm:$0xff]
        %v2547 = vld [vmem:[#allocation12 + $0x48] sm:$0xff]
        %v2548 = vld [vmem:[#allocation12 + $0x50] sm:$0xff]
        %v2549 = vld [vmem:[#allocation12 + $0x58] sm:$0xff]
        %v2550 = vld [vmem:[#allocation12 + $0x60] sm:$0xff]
        %v2551 = vld [vmem:[#allocation12 + $0x68] sm:$0xff]
        %v2552 = vld [vmem:[#allocation12 + $0x70] sm:$0xff]
        %v2553 = vld [vmem:[#allocation12 + $0x78] sm:$0xff]
        %v2554 = vld [vmem:[%s10] sm:$0x1]
        %2555 = vmatpush.msra.mxu0 %v2553
        %2556 = vmatpush.msra.mxu0 %v2552
        %2557 = vmatpush.msra.mxu0 %v2551
        %2558 = vmatpush.msra.mxu0 %v2550
        %2559 = vmatpush.msra.mxu0 %v2549
        %2560 = vmatpush.msra.mxu0 %v2548
        %2561 = vmatpush.msra.mxu0 %v2547
        %2562 = vmatpush.msra.mxu0 %v2546
        %2563 = vmatpush.msra.mxu0 %v2545
        %2564 = vmatpush.msra.mxu0 %v2544
        %2565 = vmatpush.msra.mxu0 %v2543
        %2566 = vmatpush.msra.mxu0 %v2542
        %2567 = vmatpush.msra.mxu0 %v2541
        %2568 = vmatpush.msra.mxu0 %v2540
        %2569 = vmatpush.msra.mxu0 %v2539
        %2570 = vmatpush.msra.mxu0 %v2538
        %2571 = vmatmul.f32.gmra.mxu0 %v2537
        %v2572 = vpop.f32.mrf.mxu0
        %v2573 = vadd.f32 %v2554, %v2572
        %2574 = vdwg.mxu0
        %v2575 = vxor.u32 %v2573, 2147483648
        %v2576 = vmul.f32 %v2575, 1.442695
        %v2577 = vpow.pop %v2576
        %v2578 = vadd.f32 %v2577, 1.0
        %v2579 = vrcp.pop %v2578
        %v2580 = vmul.f32 %v2578, %v2579
        %v2581 = vsub.f32 1.0, %v2580
        %v2582 = vmul.f32 %v2579, %v2581
        %v2583 = vadd.f32 %v2579, %v2582
        %vm2584 = vweird.f32 %v2578
        %vm2585 = vweird.f32 %v2579
        %vm2586 = vmor %vm2584, %vm2585
        %v2587 = vsel %vm2586, %v2579, %v2583
        %v2588 = vand.u32 2147483647, %v2578
        %vm2589 = vcmp.eq.f32.partialorder %v2588, 8.507059e+37
        %v2590 = vand.u32 %v2578, 2147483648
        %v2591 = vor.u32 1.1754944e-38, %v2590
        %v2592 = vsel %vm2589, %v2591, %v2587
        %v2593 = vmul.f32 1.0, %v2592
        %v2594 = vperm.slane %v2593, 0
        %v2595 = vmul.f32 %v2423, %v2594
        %v2596 = vmul.f32 %v2424, %v2594
        %v2597 = vmul.f32 %v2425, %v2594
        %v2598 = vmul.f32 %v2426, %v2594
        %v2599 = vmul.f32 %v2427, %v2594
        %v2600 = vmul.f32 %v2428, %v2594
        %v2601 = vmul.f32 %v2429, %v2594
        %v2602 = vmul.f32 %v2430, %v2594
        %v2603 = vmul.f32 %v2431, %v2594
        %v2604 = vmul.f32 %v2432, %v2594
        %v2605 = vmul.f32 %v2433, %v2594
        %v2606 = vmul.f32 %v2434, %v2594
        %v2607 = vmul.f32 %v2435, %v2594
        %v2608 = vmul.f32 %v2436, %v2594
        %v2609 = vmul.f32 %v2437, %v2594
        %v2610 = vmul.f32 %v2438, %v2594
        %v2611 = vmul.f32 %v2439, %v2594
        %v2612 = vmul.f32 %v2440, %v2594
        %v2613 = vmul.f32 %v2441, %v2594
        %v2614 = vmul.f32 %v2442, %v2594
        %v2615 = vmul.f32 %v2443, %v2594
        %v2616 = vmul.f32 %v2444, %v2594
        %v2617 = vmul.f32 %v2445, %v2594
        %v2618 = vmul.f32 %v2446, %v2594
        %v2619 = vmul.f32 %v2447, %v2594
        %v2620 = vmul.f32 %v2448, %v2594
        %v2621 = vmul.f32 %v2449, %v2594
        %v2622 = vmul.f32 %v2450, %v2594
        %v2623 = vmul.f32 %v2451, %v2594
        %v2624 = vmul.f32 %v2452, %v2594
        %v2625 = vmul.f32 %v2453, %v2594
        %v2626 = vmul.f32 %v2454, %v2594
        %v2627 = vpack.c.bf16 %v2596, %v2595
        %v2628 = vpack.c.bf16 %v2598, %v2597
        %v2629 = vpack.c.bf16 %v2600, %v2599
        %v2630 = vpack.c.bf16 %v2602, %v2601
        %v2631 = vpack.c.bf16 %v2604, %v2603
        %v2632 = vpack.c.bf16 %v2606, %v2605
        %v2633 = vpack.c.bf16 %v2608, %v2607
        %v2634 = vpack.c.bf16 %v2610, %v2609
        %v2635 = vpack.c.bf16 %v2612, %v2611
        %v2636 = vpack.c.bf16 %v2614, %v2613
        %v2637 = vpack.c.bf16 %v2616, %v2615
        %v2638 = vpack.c.bf16 %v2618, %v2617
        %v2639 = vpack.c.bf16 %v2620, %v2619
        %v2640 = vpack.c.bf16 %v2622, %v2621
        %v2641 = vpack.c.bf16 %v2624, %v2623
        %v2642 = vpack.c.bf16 %v2626, %v2625
        %v2643 = vld [vmem:[#allocation14] sm:$0xf]
        %v2644 = vld [vmem:[#allocation14 + $0x4] sm:$0xf]
        %v2645 = vld [vmem:[#allocation14 + $0x8] sm:$0xf]
        %v2646 = vld [vmem:[#allocation14 + $0xc] sm:$0xf]
        %v2647 = vld [vmem:[#allocation14 + $0x10] sm:$0xf]
        %v2648 = vld [vmem:[#allocation14 + $0x14] sm:$0xf]
        %v2649 = vld [vmem:[#allocation14 + $0x18] sm:$0xf]
        %v2650 = vld [vmem:[#allocation14 + $0x1c] sm:$0xf]
        %v2651 = vld [vmem:[#allocation14 + $0x20] sm:$0xf]
        %v2652 = vld [vmem:[#allocation14 + $0x24] sm:$0xf]
        %v2653 = vld [vmem:[#allocation14 + $0x28] sm:$0xf]
        %v2654 = vld [vmem:[#allocation14 + $0x2c] sm:$0xf]
        %v2655 = vld [vmem:[#allocation14 + $0x30] sm:$0xf]
        %v2656 = vld [vmem:[#allocation14 + $0x34] sm:$0xf]
        %v2657 = vld [vmem:[#allocation14 + $0x38] sm:$0xf]
        %v2658 = vld [vmem:[#allocation14 + $0x3c] sm:$0xf]
        %v2659 = vld [vmem:[%s12] sm:$0x1]
        %v2661 = vperm.slane %v2659, 0
        %v2679 = vunpack.c.l.b16 %v2643
        %v2680 = vunpack.c.l.b16 %v2644
        %v2681 = vunpack.c.l.b16 %v2645
        %v2682 = vunpack.c.l.b16 %v2646
        %v2683 = vunpack.c.l.b16 %v2647
        %v2684 = vunpack.c.l.b16 %v2648
        %v2685 = vunpack.c.l.b16 %v2649
        %v2686 = vunpack.c.l.b16 %v2650
        %v2687 = vunpack.c.l.b16 %v2651
        %v2688 = vunpack.c.l.b16 %v2652
        %v2689 = vunpack.c.l.b16 %v2653
        %v2690 = vunpack.c.l.b16 %v2654
        %v2691 = vunpack.c.l.b16 %v2655
        %v2692 = vunpack.c.l.b16 %v2656
        %v2693 = vunpack.c.l.b16 %v2657
        %v2694 = vunpack.c.l.b16 %v2658
        %v2695 = vpack.c.b16 %v2680, %v2679
        %v2696 = vpack.c.b16 %v2682, %v2681
        %v2697 = vpack.c.b16 %v2684, %v2683
        %v2698 = vpack.c.b16 %v2686, %v2685
        %v2699 = vpack.c.b16 %v2688, %v2687
        %v2700 = vpack.c.b16 %v2690, %v2689
        %v2701 = vpack.c.b16 %v2692, %v2691
        %v2702 = vpack.c.b16 %v2694, %v2693
        %2711 = vmatpush.bf16.msra.mxu0 %v2702
        %2712 = vmatpush.bf16.msra.mxu0 %v2701
        %2713 = vmatpush.bf16.msra.mxu0 %v2700
        %2714 = vmatpush.bf16.msra.mxu0 %v2699
        %2715 = vmatpush.bf16.msra.mxu0 %v2698
        %2716 = vmatpush.bf16.msra.mxu0 %v2697
        %2717 = vmatpush.bf16.msra.mxu0 %v2696
        %2718 = vmatpush.bf16.msra.mxu0 %v2695
        %2719 = vmatmul.bf16.gmra.mxu0 %v2627
        %v2720 = vpop.f32.mrf.mxu0
        %v2721 = vadd.f32 %v2661, %v2720
        %v2722 = vpop.f32.mrf.mxu0
        %v2723 = vadd.f32 %v2661, %v2722
        %2724 = vmatmul.bf16.gmra.mxu0 %v2628
        %v2725 = vpop.f32.mrf.mxu0
        %v2726 = vadd.f32 %v2661, %v2725
        %v2727 = vpop.f32.mrf.mxu0
        %v2728 = vadd.f32 %v2661, %v2727
        %2729 = vmatmul.bf16.gmra.mxu0 %v2629
        %v2730 = vpop.f32.mrf.mxu0
        %v2731 = vadd.f32 %v2661, %v2730
        %v2732 = vpop.f32.mrf.mxu0
        %v2733 = vadd.f32 %v2661, %v2732
        %2734 = vmatmul.bf16.gmra.mxu0 %v2630
        %v2735 = vpop.f32.mrf.mxu0
        %v2736 = vadd.f32 %v2661, %v2735
        %v2737 = vpop.f32.mrf.mxu0
        %v2738 = vadd.f32 %v2661, %v2737
        %2739 = vmatmul.bf16.gmra.mxu0 %v2631
        %v2740 = vpop.f32.mrf.mxu0
        %v2741 = vadd.f32 %v2661, %v2740
        %v2742 = vpop.f32.mrf.mxu0
        %v2743 = vadd.f32 %v2661, %v2742
        %2744 = vmatmul.bf16.gmra.mxu0 %v2632
        %v2745 = vpop.f32.mrf.mxu0
        %v2746 = vadd.f32 %v2661, %v2745
        %v2747 = vpop.f32.mrf.mxu0
        %v2748 = vadd.f32 %v2661, %v2747
        %2749 = vmatmul.bf16.gmra.mxu0 %v2633
        %v2750 = vpop.f32.mrf.mxu0
        %v2751 = vadd.f32 %v2661, %v2750
        %v2752 = vpop.f32.mrf.mxu0
        %v2753 = vadd.f32 %v2661, %v2752
        %2754 = vmatmul.bf16.gmra.mxu0 %v2634
        %v2755 = vpop.f32.mrf.mxu0
        %v2756 = vadd.f32 %v2661, %v2755
        %v2757 = vpop.f32.mrf.mxu0
        %v2758 = vadd.f32 %v2661, %v2757
        %2759 = vmatmul.bf16.gmra.mxu0 %v2635
        %v2760 = vpop.f32.mrf.mxu0
        %v2761 = vadd.f32 %v2661, %v2760
        %v2762 = vpop.f32.mrf.mxu0
        %v2763 = vadd.f32 %v2661, %v2762
        %2764 = vmatmul.bf16.gmra.mxu0 %v2636
        %v2765 = vpop.f32.mrf.mxu0
        %v2766 = vadd.f32 %v2661, %v2765
        %v2767 = vpop.f32.mrf.mxu0
        %v2768 = vadd.f32 %v2661, %v2767
        %2769 = vmatmul.bf16.gmra.mxu0 %v2637
        %v2770 = vpop.f32.mrf.mxu0
        %v2771 = vadd.f32 %v2661, %v2770
        %v2772 = vpop.f32.mrf.mxu0
        %v2773 = vadd.f32 %v2661, %v2772
        %2774 = vmatmul.bf16.gmra.mxu0 %v2638
        %v2775 = vpop.f32.mrf.mxu0
        %v2776 = vadd.f32 %v2661, %v2775
        %v2777 = vpop.f32.mrf.mxu0
        %v2778 = vadd.f32 %v2661, %v2777
        %2779 = vmatmul.bf16.gmra.mxu0 %v2639
        %v2780 = vpop.f32.mrf.mxu0
        %v2781 = vadd.f32 %v2661, %v2780
        %v2782 = vpop.f32.mrf.mxu0
        %v2783 = vadd.f32 %v2661, %v2782
        %2784 = vmatmul.bf16.gmra.mxu0 %v2640
        %v2785 = vpop.f32.mrf.mxu0
        %v2786 = vadd.f32 %v2661, %v2785
        %v2787 = vpop.f32.mrf.mxu0
        %v2788 = vadd.f32 %v2661, %v2787
        %2789 = vmatmul.bf16.gmra.mxu0 %v2641
        %v2790 = vpop.f32.mrf.mxu0
        %v2791 = vadd.f32 %v2661, %v2790
        %v2792 = vpop.f32.mrf.mxu0
        %v2793 = vadd.f32 %v2661, %v2792
        %2794 = vmatmul.bf16.gmra.mxu0 %v2642
        %v2795 = vpop.f32.mrf.mxu0
        %v2796 = vadd.f32 %v2661, %v2795
        %v2797 = vpop.f32.mrf.mxu0
        %v2798 = vadd.f32 %v2661, %v2797
        %2799 = vdwg.mxu0
        %v2800 = vld [vmem:[%s13] sm:$0x1]
        %v2802 = vperm.slane %v2800, 0
        %v2804 = vmul.f32 %v2721, %v2802
        %v2805 = vmul.f32 %v2723, %v2802
        %v2806 = vmul.f32 %v2726, %v2802
        %v2807 = vmul.f32 %v2728, %v2802
        %v2808 = vmul.f32 %v2731, %v2802
        %v2809 = vmul.f32 %v2733, %v2802
        %v2810 = vmul.f32 %v2736, %v2802
        %v2811 = vmul.f32 %v2738, %v2802
        %v2812 = vmul.f32 %v2741, %v2802
        %v2813 = vmul.f32 %v2743, %v2802
        %v2814 = vmul.f32 %v2746, %v2802
        %v2815 = vmul.f32 %v2748, %v2802
        %v2816 = vmul.f32 %v2751, %v2802
        %v2817 = vmul.f32 %v2753, %v2802
        %v2818 = vmul.f32 %v2756, %v2802
        %v2819 = vmul.f32 %v2758, %v2802
        %v2820 = vmul.f32 %v2761, %v2802
        %v2821 = vmul.f32 %v2763, %v2802
        %v2822 = vmul.f32 %v2766, %v2802
        %v2823 = vmul.f32 %v2768, %v2802
        %v2824 = vmul.f32 %v2771, %v2802
        %v2825 = vmul.f32 %v2773, %v2802
        %v2826 = vmul.f32 %v2776, %v2802
        %v2827 = vmul.f32 %v2778, %v2802
        %v2828 = vmul.f32 %v2781, %v2802
        %v2829 = vmul.f32 %v2783, %v2802
        %v2830 = vmul.f32 %v2786, %v2802
        %v2831 = vmul.f32 %v2788, %v2802
        %v2832 = vmul.f32 %v2791, %v2802
        %v2833 = vmul.f32 %v2793, %v2802
        %v2834 = vmul.f32 %v2796, %v2802
        %v2835 = vmul.f32 %v2798, %v2802
        %2836 = vst [vmem:[%s584] sm:$0xff] %v2804
        %2837 = vst [vmem:[%s584 + $0x8] sm:$0xff] %v2805
        %2838 = vst [vmem:[%s584 + $0x10] sm:$0xff] %v2806
        %2839 = vst [vmem:[%s584 + $0x18] sm:$0xff] %v2807
        %2840 = vst [vmem:[%s584 + $0x20] sm:$0xff] %v2808
        %2841 = vst [vmem:[%s584 + $0x28] sm:$0xff] %v2809
        %2842 = vst [vmem:[%s584 + $0x30] sm:$0xff] %v2810
        %2843 = vst [vmem:[%s584 + $0x38] sm:$0xff] %v2811
        %2844 = vst [vmem:[%s584 + $0x40] sm:$0xff] %v2812
        %2845 = vst [vmem:[%s584 + $0x48] sm:$0xff] %v2813
        %2846 = vst [vmem:[%s584 + $0x50] sm:$0xff] %v2814
        %2847 = vst [vmem:[%s584 + $0x58] sm:$0xff] %v2815
        %2848 = vst [vmem:[%s584 + $0x60] sm:$0xff] %v2816
        %2849 = vst [vmem:[%s584 + $0x68] sm:$0xff] %v2817
        %2850 = vst [vmem:[%s584 + $0x70] sm:$0xff] %v2818
        %2851 = vst [vmem:[%s584 + $0x78] sm:$0xff] %v2819
        %2852 = vst [vmem:[%s584 + $0x80] sm:$0xff] %v2820
        %2853 = vst [vmem:[%s584 + $0x88] sm:$0xff] %v2821
        %2854 = vst [vmem:[%s584 + $0x90] sm:$0xff] %v2822
        %2855 = vst [vmem:[%s584 + $0x98] sm:$0xff] %v2823
        %2856 = vst [vmem:[%s584 + $0xa0] sm:$0xff] %v2824
        %2857 = vst [vmem:[%s584 + $0xa8] sm:$0xff] %v2825
        %2858 = vst [vmem:[%s584 + $0xb0] sm:$0xff] %v2826
        %2859 = vst [vmem:[%s584 + $0xb8] sm:$0xff] %v2827
        %2860 = vst [vmem:[%s584 + $0xc0] sm:$0xff] %v2828
        %2861 = vst [vmem:[%s584 + $0xc8] sm:$0xff] %v2829
        %2862 = vst [vmem:[%s584 + $0xd0] sm:$0xff] %v2830
        %2863 = vst [vmem:[%s584 + $0xd8] sm:$0xff] %v2831
        %2864 = vst [vmem:[%s584 + $0xe0] sm:$0xff] %v2832
        %2865 = vst [vmem:[%s584 + $0xe8] sm:$0xff] %v2833
        %2866 = vst [vmem:[%s584 + $0xf0] sm:$0xff] %v2834
        %2867 = vst [vmem:[%s584 + $0xf8] sm:$0xff] %v2835
        %s2868 = sand.u32 %s341, 1
        %s2869 = scalar_lea.sflag [#allocation5], %s2868
        %s2870 = sand.u32 %s341, 1
        %s2871 = smul.addr %s2870, 256
        %s2872 = scalar_lea.vmem [#allocation15], %s2871
        // Predicated region
        $region105: #{tpu_custom_call.1} parent=75 // pred_check
          %p2873 = pneg %p351
        $region106: #{tpu_custom_call.1} parent=75 // pred_check_branch
          %2875 = sbr.rel (%p2873) target = $region108
        $region107: #{tpu_custom_call.1} parent=75 // pred_region
          %2877 = vsyncadd %s2869, 0
          %s2878 = smul.addr %s34, 32
          %s2879 = smul.addr %s2878, 8
          %s2880 = scalar_lea.hbm %s14, %s2879
          %s2881 = sshll.u32 %s2872, 4
          %s2882 = int_to_ptr.vmem [resolvable:$true] %s2881
          %s2883 = sshll.u32 %s2880, 4
          %s2884 = int_to_ptr.hbm [resolvable:$true] %s2883
          %2889 = dma.vmem_to_hbm [thread:$0]  %s2882, 4096, %s2884, %s2869, 128, 128, 8
        $region108: #{tpu_custom_call.1} parent=75 // pred_fallthru
          _
      $region76: #{tpu_custom_call.1} parent=5 // pred_fallthru
        _
      %p2890 = scmp.le.s32.totalorder 2, %s29
      // Predicated region
      $region109: #{tpu_custom_call.1} parent=5 // pred_check
        %p2891 = pneg %p2890
      $region110: #{tpu_custom_call.1} parent=5 // pred_check_branch
        %2893 = sbr.rel (%p2891) target = $region112
      $region111: #{tpu_custom_call.1} parent=5 // pred_region
        %s2894 = ssub.s32 %s29, 2
        // Predicated region
        $region113: #{tpu_custom_call.1} parent=111 // pred_check
          %p2895 = pneg %p357
        $region114: #{tpu_custom_call.1} parent=111 // pred_check_branch
          %2897 = sbr.rel (%p2895) target = $region116
        $region115: #{tpu_custom_call.1} parent=111 // pred_region
          %s2898 = sand.u32 %s342, 1
          %s2899 = scalar_lea.sflag [#allocation5], %s2898
          %s2900 = sand.u32 %s342, 1
          %s2901 = smul.addr %s2900, 256
          %s2902 = scalar_lea.vmem [#allocation15], %s2901
          %2904 = dma.done %s2899, 4096
        $region116: #{tpu_custom_call.1} parent=111 // pred_fallthru
          _
      $region112: #{tpu_custom_call.1} parent=5 // pred_fallthru
        _
    $region6: #{tpu_custom_call.1} parent=1 // loop_footer
      %s33 = sadd.s32 1, %s29
    $region7: #{tpu_custom_call.1} parent=1 // loop_footer_branch
      %28 = sbr.rel target = $region3
    $region8: #{tpu_custom_call.1} parent=1 // loop_exit
      _
    %2905 = vsyncpa [#allocation4], 1
    %s2906 = scalar_lea.sflag [#allocation4], 1
    %2907 = vsyncpa %s2906, 1
    %2908 = vsyncpa [#allocation7], 1
    %2909 = vsyncpa [#allocation10], 1
    %2910 = vsyncpa [#allocation13], 1
    %2911 = vsyncpa [#allocation5], 1
    %s2912 = scalar_lea.sflag [#allocation5], 1
    %2913 = vsyncpa %s2912, 1

</llo_original>
